<compile_context>
chip_gen: v7x
topology: tpu7x:2x2x1
jax: 0.10.0
libtpu: 0.0.40
codegen_flags: <defaults>
</compile_context>

<pallas_src>
import functools

import jax
import jax.numpy as jnp
from jax import lax
from jax.experimental import pallas as pl
from jax.experimental.pallas import tpu as pltpu


def _round_up(x, m):
    return (x + m - 1) // m * m


def _gate_dims(H):
    """Return (Hg, G): per-gate stride in the packed gate block and block width."""
    if H < 128:
        # No per-gate padding; pad only the concatenated 4*H block to a 128 multiple.
        return H, _round_up(4 * H, 128)
    Hg = _round_up(H, 128)
    return Hg, 4 * Hg


def bilstm_fc_kernel(emb_ref,       # (1, T*Bt, E+1) compute dtype (rows: t*Bt + b; last col = 1)
                     wih_all_ref,   # (E+1, 2*G)     compute dtype  [fwd G | bwd G], last row = bias
                     whh_f_ref,     # (Hg, G)        compute dtype
                     whh_b_ref,     # (Hg, G)        compute dtype
                     fcw_ref,       # (2*Hg, Cp)     compute dtype  [fwd Hg rows | bwd Hg rows]
                     fcb_ref,       # (1, Cp)        f32
                     out_ref,       # (Bt, Cp)       f32
                     xg_ref,        # scratch (T*Bt, 2*G) compute dtype
                     *, seq_len, batch_tile):
    T = seq_len
    Bt = batch_tile
    Hg = whh_f_ref.shape[0]
    G = whh_f_ref.shape[1]
    cdt = emb_ref.dtype

    # ---- hoisted input projection (biases folded via the ones column), one MXU matmul ----
    x2d = emb_ref[0]                                                   # (T*Bt, E+1)
    xg_ref[...] = jnp.dot(x2d, wih_all_ref[...],
                          preferred_element_type=jnp.float32).astype(xg_ref.dtype)

    # only the recurrent weights stay hot across the loop
    whh_f = whh_f_ref[...]
    whh_b = whh_b_ref[...]

    def cell(xg_t, h, c, whh):
        # gate/cell math in f32 (v5e-safe); only matmul operands use the compute dtype
        gates = xg_t + jnp.dot(h.astype(cdt), whh,
                               preferred_element_type=jnp.float32)     # (Bt, G) f32
        i_g = jax.nn.sigmoid(gates[:, 0 * Hg:1 * Hg])
        f_g = jax.nn.sigmoid(gates[:, 1 * Hg:2 * Hg])
        g_g = jnp.tanh(gates[:, 2 * Hg:3 * Hg])
        o_g = jax.nn.sigmoid(gates[:, 3 * Hg:4 * Hg])
        c_new = f_g * c + i_g * g_g
        h_new = o_g * jnp.tanh(c_new)
        return h_new, c_new

    zeros = jnp.zeros((Bt, Hg), jnp.float32)

    # ---- fused bidirectional recurrence: two independent carries per iteration ----------
    def step(t, carry):
        h_f, c_f, h_b, c_b = carry
        row_f = pl.multiple_of(t * Bt, Bt)
        row_b = pl.multiple_of((T - 1 - t) * Bt, Bt)
        xg_f = xg_ref[pl.ds(row_f, Bt), :G]          # forward-direction gates (128-aligned)
        xg_b = xg_ref[pl.ds(row_b, Bt), G:]          # backward-direction gates (128-aligned)
        h_f, c_f = cell(xg_f, h_f, c_f, whh_f)
        h_b, c_b = cell(xg_b, h_b, c_b, whh_b)
        return h_f, c_f, h_b, c_b

    unroll = True if T <= 16 else 4
    h_f, _, h_b, _ = lax.fori_loop(0, T, step, (zeros, zeros, zeros, zeros),
                                   unroll=unroll)

    # dropout is identity in eval mode (inference path).
    # fc on concat([h_f, h_b]) done as two matmuls (avoids an in-kernel lane concat).
    logits = (jnp.dot(h_f.astype(cdt), fcw_ref[:Hg, :],
                      preferred_element_type=jnp.float32)
              + jnp.dot(h_b.astype(cdt), fcw_ref[Hg:, :],
                        preferred_element_type=jnp.float32)
              + fcb_ref[...])
    out_ref[...] = logits.astype(out_ref.dtype)


def _pad_gate_cols(w, H, Hg, G):
    """(..., 4*H) with gate order [i,f,g,o] -> (..., G), zero padded per layout."""
    lead = w.shape[:-1]
    if Hg == H:
        return jnp.pad(w, [(0, 0)] * (w.ndim - 1) + [(0, G - 4 * H)])
    w4 = w.reshape(*lead, 4, H)
    w4 = jnp.pad(w4, [(0, 0)] * (w4.ndim - 1) + [(0, Hg - H)])
    return w4.reshape(*lead, 4 * Hg)


def _prepare_padded_weights(params, Hg, G, Cp, compute_dtype):
    H = params["whh_f"].shape[0]
    C = params["fc_b"].shape[-1]

    # W_ih for both directions, with the combined bias appended as an extra contraction row
    # (matches the ones column appended to the embedding slab).
    wih_f = _pad_gate_cols(params["wih_f"], H, Hg, G)                  # (E, G)
    wih_b = _pad_gate_cols(params["wih_b"], H, Hg, G)
    b_f = _pad_gate_cols(params["b_f"], H, Hg, G)                      # (1, G)
    b_b = _pad_gate_cols(params["b_b"], H, Hg, G)
    wih_all = jnp.concatenate(
        [jnp.concatenate([wih_f, wih_b], axis=1),
         jnp.concatenate([b_f, b_b], axis=1)], axis=0).astype(compute_dtype)   # (E+1, 2G)

    def pad_whh(w):                                                    # (H, 4H) -> (Hg, G)
        w = _pad_gate_cols(w, H, Hg, G)
        return jnp.pad(w, ((0, Hg - H), (0, 0)))

    whh_f = pad_whh(params["whh_f"]).astype(compute_dtype)
    whh_b = pad_whh(params["whh_b"]).astype(compute_dtype)

    fcw = params["fc_w"]                                               # (2H, C)
    fcw = jnp.concatenate([jnp.pad(fcw[:H], ((0, Hg - H), (0, 0))),
                           jnp.pad(fcw[H:], ((0, Hg - H), (0, 0)))], axis=0)   # (2Hg, C)
    fcw = jnp.pad(fcw, ((0, 0), (0, Cp - C))).astype(compute_dtype)            # (2Hg, Cp)
    fcb = jnp.pad(params["fc_b"], ((0, 0), (0, Cp - C))).astype(jnp.float32)   # (1, Cp)
    return wih_all, whh_f, whh_b, fcw, fcb


def lstm_model_forward(token_ids, params, *, compute_dtype=jnp.bfloat16,
                       batch_tile=None, interpret=False):
    """token_ids: (B, T) int32.  Returns logits (B, num_classes)."""
    emb_table = params["embedding"]                     # (V, E), row 0 = padding (zeros)
    V, E = emb_table.shape
    H = params["whh_f"].shape[0]
    C = params["fc_b"].shape[-1]
    B, T = token_ids.shape

    Hg, G = _gate_dims(H)                               # gate stride / 128-aligned gate block
    Cp = _round_up(C, 128)                              # lane-dense output store

    # batch tile: multiple of 8 sublanes, capped at 64 so the four (Bt, Hg) f32 recurrence
    # carries stay in vregs; 1-D "parallel" grid over batch tiles (megacore on v7x).
    if batch_tile is None:
        batch_tile = min(_round_up(B, 8), 64)
    Bt = _round_up(batch_tile, 8)
    Bp = _round_up(B, Bt)
    nb = Bp // Bt

    # glue: augment the embedding table with a ones column (folds the LSTM biases into the
    # hoisted projection) and cast once; gather with the (tiny) transposed token ids so the
    # gather itself emits the tiled, time-major slab -- no big-activation transpose in HBM.
    emb_aug = jnp.concatenate(
        [emb_table, jnp.ones((V, 1), emb_table.dtype)], axis=1).astype(compute_dtype)

    ids = jnp.pad(token_ids, ((0, Bp - B), (0, 0)))          # (Bp, T); pad rows use token 0
    ids = ids.reshape(nb, Bt, T).transpose(0, 2, 1)          # (nb, T, Bt)   tiny int32 transpose
    embedded = jnp.take(emb_aug, ids, axis=0)                # (nb, T, Bt, E+1)
    embedded = embedded.reshape(nb, T * Bt, E + 1)           # rows = t*Bt + b

    wih_all, whh_f, whh_b, fcw, fcb = _prepare_padded_weights(
        params, Hg, G, Cp, compute_dtype)

    # VMEM budget: double-buffered emb block + (conservatively double-buffered) weights +
    # x-gate scratch (compute dtype) + double-buffered output block; clamp to the chip.
    itemsize = jnp.dtype(compute_dtype).itemsize
    weight_bytes = ((E + 1) * 2 * G + 2 * Hg * G + 2 * Hg * Cp) * itemsize + Cp * 4
    est_bytes = (2 * T * Bt * (E + 1) * itemsize
                 + 2 * weight_bytes
                 + T * Bt * 2 * G * itemsize
                 + 2 * Bt * Cp * 4)
    try:
        vmem_cap = int(pltpu.get_tpu_info().vmem_capacity_bytes)
    except Exception:
        vmem_cap = 64 * 2 ** 20                          # conservative (v7x per-TC)
    vmem_limit = int(min(int(vmem_cap * 0.85), max(32 * 2 ** 20, 2 * est_bytes)))
    # TODO(synk): for very long T on v7x (64 MiB VMEM), stream (Tc*Bt, E+1) emb chunks from
    # an HBM-resident input (memory_space=pl.ANY + make_async_copy) instead of holding the
    # whole-sequence slab and x-gate scratch resident.

    kernel = functools.partial(bilstm_fc_kernel, seq_len=T, batch_tile=Bt)

    def build(single_buffer_weights):
        wkw = {"pipeline_mode": pl.Buffered(1)} if single_buffer_weights else {}
        grid_spec = pltpu.PrefetchScalarGridSpec(
            num_scalar_prefetch=0,
            grid=(nb,),
            in_specs=[
                pl.BlockSpec((1, T * Bt, E + 1), lambda b: (b, 0, 0)),      # per-tile slab
                pl.BlockSpec((E + 1, 2 * G), lambda b: (0, 0), **wkw),      # wih+bias (both dirs)
                pl.BlockSpec((Hg, G), lambda b: (0, 0), **wkw),             # whh fwd
                pl.BlockSpec((Hg, G), lambda b: (0, 0), **wkw),             # whh bwd
                pl.BlockSpec((2 * Hg, Cp), lambda b: (0, 0), **wkw),        # fc weight
                pl.BlockSpec((1, Cp), lambda b: (0, 0), **wkw),             # fc bias
            ],
            out_specs=pl.BlockSpec((Bt, Cp), lambda b: (b, 0)),
            scratch_shapes=[pltpu.VMEM((T * Bt, 2 * G), compute_dtype)],
        )
        return pl.pallas_call(
            kernel,
            out_shape=jax.ShapeDtypeStruct((Bp, Cp), jnp.float32),
            grid_spec=grid_spec,
            compiler_params=pltpu.CompilerParams(
                dimension_semantics=("parallel",),
                vmem_limit_bytes=vmem_limit),
            interpret=interpret,
        )

    args = (embedded, wih_all, whh_f, whh_b, fcw, fcb)
    try:
        out = build(True)(*args)          # grid-invariant weights single-buffered
    except Exception:
        out = build(False)(*args)         # fallback: default (double) buffering

    return out[:B, :C]


def init_params(key, vocab_size, embedding_dim, hidden_dim, num_classes):
    ks = jax.random.split(key, 10)
    E, H, C, V = embedding_dim, hidden_dim, num_classes, vocab_size
    scale = 1.0 / jnp.sqrt(H)

    emb = jax.random.normal(ks[0], (V, E), jnp.float32)
    emb = emb.at[0].set(0.0)                            # padding_idx=0

    def u(k, shape):
        return jax.random.uniform(k, shape, jnp.float32, -scale, scale)

    return {
        "embedding": emb,
        # forward direction (gate order [i, f, g, o], b_ih + b_hh combined)
        "wih_f": u(ks[1], (E, 4 * H)),
        "whh_f": u(ks[2], (H, 4 * H)),
        "b_f":   u(ks[3], (1, 4 * H)),
        # backward direction
        "wih_b": u(ks[4], (E, 4 * H)),
        "whh_b": u(ks[5], (H, 4 * H)),
        "b_b":   u(ks[6], (1, 4 * H)),
        # classifier
        "fc_w":  u(ks[7], (2 * H, C)),
        "fc_b":  u(ks[8], (1, C)),
    }


def reference_forward(token_ids, params):
    """Pure-JAX reference mirroring the PyTorch forward (eval-mode dropout)."""
    emb = jnp.take(params["embedding"], token_ids, axis=0)   # (B, T, E)
    B, T, _ = emb.shape
    H = params["whh_f"].shape[0]

    def run(direction):
        wih = params[f"wih_{direction}"]
        whh = params[f"whh_{direction}"]
        b = params[f"b_{direction}"]
        ts = range(T) if direction == "f" else range(T - 1, -1, -1)
        h = jnp.zeros((B, H), jnp.float32)
        c = jnp.zeros((B, H), jnp.float32)
        for t in ts:
            g = emb[:, t, :] @ wih + h @ whh + b
            i_g = jax.nn.sigmoid(g[:, :H])
            f_g = jax.nn.sigmoid(g[:, H:2 * H])
            g_g = jnp.tanh(g[:, 2 * H:3 * H])
            o_g = jax.nn.sigmoid(g[:, 3 * H:])
            c = f_g * c + i_g * g_g
            h = o_g * jnp.tanh(c)
        return h

    h_f, h_b = run("f"), run("b")
    hidden = jnp.concatenate([h_f, h_b], axis=1)
    return hidden @ params["fc_w"] + params["fc_b"]


if __name__ == "__main__":
    VOCAB, EMB_DIM, HIDDEN, NUM_CLASSES = 50, 16, 32, 4
    BATCH, SEQ = 2, 8

    key = jax.random.PRNGKey(0)
    k_params, k_tokens = jax.random.split(key)
    params = init_params(k_params, VOCAB, EMB_DIM, HIDDEN, NUM_CLASSES)
    token_ids = jax.random.randint(k_tokens, (BATCH, SEQ), 1, VOCAB, dtype=jnp.int32)

    ref = reference_forward(token_ids, params)

    # f32 MXU path (matches the PyTorch/eval semantics tightly)
    logits = jax.block_until_ready(
        lstm_model_forward(token_ids, params, compute_dtype=jnp.float32))
    assert logits.shape == (BATCH, NUM_CLASSES)
    assert jnp.allclose(logits, ref, rtol=1e-4, atol=1e-4), "f32 mismatch vs reference"

    # default path: bf16 matmul operands, f32 accumulation + f32 gate/cell math
    logits_bf16 = jax.block_until_ready(lstm_model_forward(token_ids, params))
    assert logits_bf16.shape == (BATCH, NUM_CLASSES)
    assert jnp.allclose(logits_bf16, ref, rtol=1e-1, atol=1e-1), "bf16 mismatch vs reference"

    # TODO(synk): dropout implemented as eval-mode identity (inference path);
    # training-mode dropout would need pltpu.prng_seed/prng_random_bits masking in-kernel.
    print("KERNEL_OK")
</pallas_src>

<mosaic_0001>
module attributes {stable_mosaic.version = 11 : i64} {
  func.func @bilstm_fc_kernel(%arg0: i32, %arg1: memref<1x64x17xf32, #tpu.memory_space<vmem>>, %arg2: memref<17x256xf32, #tpu.memory_space<vmem>>, %arg3: memref<32x128xf32, #tpu.memory_space<vmem>>, %arg4: memref<32x128xf32, #tpu.memory_space<vmem>>, %arg5: memref<64x128xf32, #tpu.memory_space<vmem>>, %arg6: memref<1x128xf32, #tpu.memory_space<vmem>>, %arg7: memref<8x128xf32, #tpu.memory_space<vmem>>, %arg8: memref<64x256xf32, #tpu.memory_space<vmem>>) attributes {dimension_semantics = [#tpu.dimension_semantics<parallel>], iteration_bounds = array<i64: 1>, scalar_prefetch = 0 : i64, scratch_operands = 1 : i64, tpu.core_type = #tpu.core_type<tc>, window_params = [{transform_indices = @transform_0, window_bounds = array<i64: 1, 64, 17>}, {pipeline_mode = #tpu.pipeline_mode<synchronous>, transform_indices = @transform_1, window_bounds = array<i64: 17, 256>}, {pipeline_mode = #tpu.pipeline_mode<synchronous>, transform_indices = @transform_2, window_bounds = array<i64: 32, 128>}, {pipeline_mode = #tpu.pipeline_mode<synchronous>, transform_indices = @transform_3, window_bounds = array<i64: 32, 128>}, {pipeline_mode = #tpu.pipeline_mode<synchronous>, transform_indices = @transform_4, window_bounds = array<i64: 64, 128>}, {pipeline_mode = #tpu.pipeline_mode<synchronous>, transform_indices = @transform_5, window_bounds = array<i64: 1, 128>}, {transform_indices = @transform_6, window_bounds = array<i64: 8, 128>}]} {
    %c0 = arith.constant 0 : index
    %c0_0 = arith.constant 0 : index
    %c0_1 = arith.constant 0 : index
    %0 = vector.load %arg1[%c0, %c0_0, %c0_1] : memref<1x64x17xf32, #tpu.memory_space<vmem>>, vector<1x64x17xf32>
    %1 = vector.shape_cast %0 : vector<1x64x17xf32> to vector<64x17xf32>
    %c0_2 = arith.constant 0 : index
    %c0_3 = arith.constant 0 : index
    %2 = vector.load %arg2[%c0_2, %c0_3] : memref<17x256xf32, #tpu.memory_space<vmem>>, vector<17x256xf32>
    %cst = arith.constant dense<0.000000e+00> : vector<64x256xf32>
    %3 = tpu.matmul %1, %2, %cst {dimension_numbers = #tpu.dot_dimension_numbers<[1], [0], [0], [1], [0, 0, 1, 1], [], []>} : vector<64x17xf32>, vector<17x256xf32>, vector<64x256xf32> -> vector<64x256xf32>
    %c0_4 = arith.constant 0 : index
    %c0_5 = arith.constant 0 : index
    %4 = vector.load %arg8[%c0_4, %c0_5] : memref<64x256xf32, #tpu.memory_space<vmem>>, vector<64x256xf32>
    tpu.vector_store %arg8[%c0_4, %c0_5], %3 {strides = array<i32>} : memref<64x256xf32, #tpu.memory_space<vmem>>, vector<64x256xf32>,
    %c0_6 = arith.constant 0 : index
    %c0_7 = arith.constant 0 : index
    %5 = vector.load %arg3[%c0_6, %c0_7] : memref<32x128xf32, #tpu.memory_space<vmem>>, vector<32x128xf32>
    %c0_8 = arith.constant 0 : index
    %c0_9 = arith.constant 0 : index
    %6 = vector.load %arg4[%c0_8, %c0_9] : memref<32x128xf32, #tpu.memory_space<vmem>>, vector<32x128xf32>
    %cst_10 = arith.constant 0.000000e+00 : f32
    %7 = vector.broadcast %cst_10 : f32 to vector<8x32xf32>
    %c0_i32 = arith.constant 0 : i32
    %c8_i32 = arith.constant 8 : i32
    %8 = arith.muli %c0_i32, %c8_i32 : i32
    %9 = tpu.assume_multiple %8, 8 : i32
    %c7_i32 = arith.constant 7 : i32
    %10 = arith.subi %c7_i32, %c0_i32 : i32
    %c8_i32_11 = arith.constant 8 : i32
    %11 = arith.muli %10, %c8_i32_11 : i32
    %12 = tpu.assume_multiple %11, 8 : i32
    %13 = arith.index_cast %9 : i32 to index
    %c0_12 = arith.constant 0 : index
    %14 = vector.load %arg8[%13, %c0_12] : memref<64x256xf32, #tpu.memory_space<vmem>>, vector<8x128xf32>
    %15 = arith.index_cast %12 : i32 to index
    %c128 = arith.constant 128 : index
    %16 = vector.load %arg8[%15, %c128] : memref<64x256xf32, #tpu.memory_space<vmem>>, vector<8x128xf32>
    %cst_13 = arith.constant dense<0.000000e+00> : vector<8x128xf32>
    %17 = tpu.matmul %7, %5, %cst_13 {dimension_numbers = #tpu.dot_dimension_numbers<[1], [0], [0], [1], [0, 0, 1, 1], [], []>} : vector<8x32xf32>, vector<32x128xf32>, vector<8x128xf32> -> vector<8x128xf32>
    %18 = arith.addf %14, %17 : vector<8x128xf32>
    %19 = vector.extract_strided_slice %18 {offsets = [0, 0], sizes = [8, 32], strides = [1, 1]} : vector<8x128xf32> to vector<8x32xf32>
    %20 = arith.negf %19 : vector<8x32xf32>
    %21 = math.exp %20 : vector<8x32xf32>
    %cst_14 = arith.constant 1.000000e+00 : f32
    %22 = vector.broadcast %cst_14 : f32 to vector<8x32xf32>
    %23 = arith.addf %22, %21 : vector<8x32xf32>
    %24 = arith.divf %22, %23 : vector<8x32xf32>
    %25 = vector.extract_strided_slice %18 {offsets = [0, 32], sizes = [8, 32], strides = [1, 1]} : vector<8x128xf32> to vector<8x32xf32>
    %26 = arith.negf %25 : vector<8x32xf32>
    %27 = math.exp %26 : vector<8x32xf32>
    %cst_15 = arith.constant 1.000000e+00 : f32
    %28 = vector.broadcast %cst_15 : f32 to vector<8x32xf32>
    %29 = arith.addf %28, %27 : vector<8x32xf32>
    %30 = arith.divf %28, %29 : vector<8x32xf32>
    %31 = vector.extract_strided_slice %18 {offsets = [0, 64], sizes = [8, 32], strides = [1, 1]} : vector<8x128xf32> to vector<8x32xf32>
    %32 = math.tanh %31 : vector<8x32xf32>
    %33 = vector.extract_strided_slice %18 {offsets = [0, 96], sizes = [8, 32], strides = [1, 1]} : vector<8x128xf32> to vector<8x32xf32>
    %34 = arith.negf %33 : vector<8x32xf32>
    %35 = math.exp %34 : vector<8x32xf32>
    %cst_16 = arith.constant 1.000000e+00 : f32
    %36 = vector.broadcast %cst_16 : f32 to vector<8x32xf32>
    %37 = arith.addf %36, %35 : vector<8x32xf32>
    %38 = arith.divf %36, %37 : vector<8x32xf32>
    %39 = arith.mulf %30, %7 : vector<8x32xf32>
    %40 = arith.mulf %24, %32 : vector<8x32xf32>
    %41 = arith.addf %39, %40 : vector<8x32xf32>
    %42 = math.tanh %41 : vector<8x32xf32>
    %43 = arith.mulf %38, %42 : vector<8x32xf32>
    %cst_17 = arith.constant dense<0.000000e+00> : vector<8x128xf32>
    %44 = tpu.matmul %7, %6, %cst_17 {dimension_numbers = #tpu.dot_dimension_numbers<[1], [0], [0], [1], [0, 0, 1, 1], [], []>} : vector<8x32xf32>, vector<32x128xf32>, vector<8x128xf32> -> vector<8x128xf32>
    %45 = arith.addf %16, %44 : vector<8x128xf32>
    %46 = vector.extract_strided_slice %45 {offsets = [0, 0], sizes = [8, 32], strides = [1, 1]} : vector<8x128xf32> to vector<8x32xf32>
    %47 = arith.negf %46 : vector<8x32xf32>
    %48 = math.exp %47 : vector<8x32xf32>
    %cst_18 = arith.constant 1.000000e+00 : f32
    %49 = vector.broadcast %cst_18 : f32 to vector<8x32xf32>
    %50 = arith.addf %49, %48 : vector<8x32xf32>
    %51 = arith.divf %49, %50 : vector<8x32xf32>
    %52 = vector.extract_strided_slice %45 {offsets = [0, 32], sizes = [8, 32], strides = [1, 1]} : vector<8x128xf32> to vector<8x32xf32>
    %53 = arith.negf %52 : vector<8x32xf32>
    %54 = math.exp %53 : vector<8x32xf32>
    %cst_19 = arith.constant 1.000000e+00 : f32
    %55 = vector.broadcast %cst_19 : f32 to vector<8x32xf32>
    %56 = arith.addf %55, %54 : vector<8x32xf32>
    %57 = arith.divf %55, %56 : vector<8x32xf32>
    %58 = vector.extract_strided_slice %45 {offsets = [0, 64], sizes = [8, 32], strides = [1, 1]} : vector<8x128xf32> to vector<8x32xf32>
    %59 = math.tanh %58 : vector<8x32xf32>
    %60 = vector.extract_strided_slice %45 {offsets = [0, 96], sizes = [8, 32], strides = [1, 1]} : vector<8x128xf32> to vector<8x32xf32>
    %61 = arith.negf %60 : vector<8x32xf32>
    %62 = math.exp %61 : vector<8x32xf32>
    %cst_20 = arith.constant 1.000000e+00 : f32
    %63 = vector.broadcast %cst_20 : f32 to vector<8x32xf32>
    %64 = arith.addf %63, %62 : vector<8x32xf32>
    %65 = arith.divf %63, %64 : vector<8x32xf32>
    %66 = arith.mulf %57, %7 : vector<8x32xf32>
    %67 = arith.mulf %51, %59 : vector<8x32xf32>
    %68 = arith.addf %66, %67 : vector<8x32xf32>
    %69 = math.tanh %68 : vector<8x32xf32>
    %70 = arith.mulf %65, %69 : vector<8x32xf32>
    %c1_i32 = arith.constant 1 : i32
    %c8_i32_21 = arith.constant 8 : i32
    %71 = arith.muli %c1_i32, %c8_i32_21 : i32
    %72 = tpu.assume_multiple %71, 8 : i32
    %c7_i32_22 = arith.constant 7 : i32
    %73 = arith.subi %c7_i32_22, %c1_i32 : i32
    %c8_i32_23 = arith.constant 8 : i32
    %74 = arith.muli %73, %c8_i32_23 : i32
    %75 = tpu.assume_multiple %74, 8 : i32
    %76 = arith.index_cast %72 : i32 to index
    %c0_24 = arith.constant 0 : index
    %77 = vector.load %arg8[%76, %c0_24] : memref<64x256xf32, #tpu.memory_space<vmem>>, vector<8x128xf32>
    %78 = arith.index_cast %75 : i32 to index
    %c128_25 = arith.constant 128 : index
    %79 = vector.load %arg8[%78, %c128_25] : memref<64x256xf32, #tpu.memory_space<vmem>>, vector<8x128xf32>
    %cst_26 = arith.constant dense<0.000000e+00> : vector<8x128xf32>
    %80 = tpu.matmul %43, %5, %cst_26 {dimension_numbers = #tpu.dot_dimension_numbers<[1], [0], [0], [1], [0, 0, 1, 1], [], []>} : vector<8x32xf32>, vector<32x128xf32>, vector<8x128xf32> -> vector<8x128xf32>
    %81 = arith.addf %77, %80 : vector<8x128xf32>
    %82 = vector.extract_strided_slice %81 {offsets = [0, 0], sizes = [8, 32], strides = [1, 1]} : vector<8x128xf32> to vector<8x32xf32>
    %83 = arith.negf %82 : vector<8x32xf32>
    %84 = math.exp %83 : vector<8x32xf32>
    %cst_27 = arith.constant 1.000000e+00 : f32
    %85 = vector.broadcast %cst_27 : f32 to vector<8x32xf32>
    %86 = arith.addf %85, %84 : vector<8x32xf32>
    %87 = arith.divf %85, %86 : vector<8x32xf32>
    %88 = vector.extract_strided_slice %81 {offsets = [0, 32], sizes = [8, 32], strides = [1, 1]} : vector<8x128xf32> to vector<8x32xf32>
    %89 = arith.negf %88 : vector<8x32xf32>
    %90 = math.exp %89 : vector<8x32xf32>
    %cst_28 = arith.constant 1.000000e+00 : f32
    %91 = vector.broadcast %cst_28 : f32 to vector<8x32xf32>
    %92 = arith.addf %91, %90 : vector<8x32xf32>
    %93 = arith.divf %91, %92 : vector<8x32xf32>
    %94 = vector.extract_strided_slice %81 {offsets = [0, 64], sizes = [8, 32], strides = [1, 1]} : vector<8x128xf32> to vector<8x32xf32>
    %95 = math.tanh %94 : vector<8x32xf32>
    %96 = vector.extract_strided_slice %81 {offsets = [0, 96], sizes = [8, 32], strides = [1, 1]} : vector<8x128xf32> to vector<8x32xf32>
    %97 = arith.negf %96 : vector<8x32xf32>
    %98 = math.exp %97 : vector<8x32xf32>
    %cst_29 = arith.constant 1.000000e+00 : f32
    %99 = vector.broadcast %cst_29 : f32 to vector<8x32xf32>
    %100 = arith.addf %99, %98 : vector<8x32xf32>
    %101 = arith.divf %99, %100 : vector<8x32xf32>
    %102 = arith.mulf %93, %41 : vector<8x32xf32>
    %103 = arith.mulf %87, %95 : vector<8x32xf32>
    %104 = arith.addf %102, %103 : vector<8x32xf32>
    %105 = math.tanh %104 : vector<8x32xf32>
    %106 = arith.mulf %101, %105 : vector<8x32xf32>
    %cst_30 = arith.constant dense<0.000000e+00> : vector<8x128xf32>
    %107 = tpu.matmul %70, %6, %cst_30 {dimension_numbers = #tpu.dot_dimension_numbers<[1], [0], [0], [1], [0, 0, 1, 1], [], []>} : vector<8x32xf32>, vector<32x128xf32>, vector<8x128xf32> -> vector<8x128xf32>
    %108 = arith.addf %79, %107 : vector<8x128xf32>
    %109 = vector.extract_strided_slice %108 {offsets = [0, 0], sizes = [8, 32], strides = [1, 1]} : vector<8x128xf32> to vector<8x32xf32>
    %110 = arith.negf %109 : vector<8x32xf32>
    %111 = math.exp %110 : vector<8x32xf32>
    %cst_31 = arith.constant 1.000000e+00 : f32
    %112 = vector.broadcast %cst_31 : f32 to vector<8x32xf32>
    %113 = arith.addf %112, %111 : vector<8x32xf32>
    %114 = arith.divf %112, %113 : vector<8x32xf32>
    %115 = vector.extract_strided_slice %108 {offsets = [0, 32], sizes = [8, 32], strides = [1, 1]} : vector<8x128xf32> to vector<8x32xf32>
    %116 = arith.negf %115 : vector<8x32xf32>
    %117 = math.exp %116 : vector<8x32xf32>
    %cst_32 = arith.constant 1.000000e+00 : f32
    %118 = vector.broadcast %cst_32 : f32 to vector<8x32xf32>
    %119 = arith.addf %118, %117 : vector<8x32xf32>
    %120 = arith.divf %118, %119 : vector<8x32xf32>
    %121 = vector.extract_strided_slice %108 {offsets = [0, 64], sizes = [8, 32], strides = [1, 1]} : vector<8x128xf32> to vector<8x32xf32>
    %122 = math.tanh %121 : vector<8x32xf32>
    %123 = vector.extract_strided_slice %108 {offsets = [0, 96], sizes = [8, 32], strides = [1, 1]} : vector<8x128xf32> to vector<8x32xf32>
    %124 = arith.negf %123 : vector<8x32xf32>
    %125 = math.exp %124 : vector<8x32xf32>
    %cst_33 = arith.constant 1.000000e+00 : f32
    %126 = vector.broadcast %cst_33 : f32 to vector<8x32xf32>
    %127 = arith.addf %126, %125 : vector<8x32xf32>
    %128 = arith.divf %126, %127 : vector<8x32xf32>
    %129 = arith.mulf %120, %68 : vector<8x32xf32>
    %130 = arith.mulf %114, %122 : vector<8x32xf32>
    %131 = arith.addf %129, %130 : vector<8x32xf32>
    %132 = math.tanh %131 : vector<8x32xf32>
    %133 = arith.mulf %128, %132 : vector<8x32xf32>
    %c2_i32 = arith.constant 2 : i32
    %c8_i32_34 = arith.constant 8 : i32
    %134 = arith.muli %c2_i32, %c8_i32_34 : i32
    %135 = tpu.assume_multiple %134, 8 : i32
    %c7_i32_35 = arith.constant 7 : i32
    %136 = arith.subi %c7_i32_35, %c2_i32 : i32
    %c8_i32_36 = arith.constant 8 : i32
    %137 = arith.muli %136, %c8_i32_36 : i32
    %138 = tpu.assume_multiple %137, 8 : i32
    %139 = arith.index_cast %135 : i32 to index
    %c0_37 = arith.constant 0 : index
    %140 = vector.load %arg8[%139, %c0_37] : memref<64x256xf32, #tpu.memory_space<vmem>>, vector<8x128xf32>
    %141 = arith.index_cast %138 : i32 to index
    %c128_38 = arith.constant 128 : index
    %142 = vector.load %arg8[%141, %c128_38] : memref<64x256xf32, #tpu.memory_space<vmem>>, vector<8x128xf32>
    %cst_39 = arith.constant dense<0.000000e+00> : vector<8x128xf32>
    %143 = tpu.matmul %106, %5, %cst_39 {dimension_numbers = #tpu.dot_dimension_numbers<[1], [0], [0], [1], [0, 0, 1, 1], [], []>} : vector<8x32xf32>, vector<32x128xf32>, vector<8x128xf32> -> vector<8x128xf32>
    %144 = arith.addf %140, %143 : vector<8x128xf32>
    %145 = vector.extract_strided_slice %144 {offsets = [0, 0], sizes = [8, 32], strides = [1, 1]} : vector<8x128xf32> to vector<8x32xf32>
    %146 = arith.negf %145 : vector<8x32xf32>
    %147 = math.exp %146 : vector<8x32xf32>
    %cst_40 = arith.constant 1.000000e+00 : f32
    %148 = vector.broadcast %cst_40 : f32 to vector<8x32xf32>
    %149 = arith.addf %148, %147 : vector<8x32xf32>
    %150 = arith.divf %148, %149 : vector<8x32xf32>
    %151 = vector.extract_strided_slice %144 {offsets = [0, 32], sizes = [8, 32], strides = [1, 1]} : vector<8x128xf32> to vector<8x32xf32>
    %152 = arith.negf %151 : vector<8x32xf32>
    %153 = math.exp %152 : vector<8x32xf32>
    %cst_41 = arith.constant 1.000000e+00 : f32
    %154 = vector.broadcast %cst_41 : f32 to vector<8x32xf32>
    %155 = arith.addf %154, %153 : vector<8x32xf32>
    %156 = arith.divf %154, %155 : vector<8x32xf32>
    %157 = vector.extract_strided_slice %144 {offsets = [0, 64], sizes = [8, 32], strides = [1, 1]} : vector<8x128xf32> to vector<8x32xf32>
    %158 = math.tanh %157 : vector<8x32xf32>
    %159 = vector.extract_strided_slice %144 {offsets = [0, 96], sizes = [8, 32], strides = [1, 1]} : vector<8x128xf32> to vector<8x32xf32>
    %160 = arith.negf %159 : vector<8x32xf32>
    %161 = math.exp %160 : vector<8x32xf32>
    %cst_42 = arith.constant 1.000000e+00 : f32
    %162 = vector.broadcast %cst_42 : f32 to vector<8x32xf32>
    %163 = arith.addf %162, %161 : vector<8x32xf32>
    %164 = arith.divf %162, %163 : vector<8x32xf32>
    %165 = arith.mulf %156, %104 : vector<8x32xf32>
    %166 = arith.mulf %150, %158 : vector<8x32xf32>
    %167 = arith.addf %165, %166 : vector<8x32xf32>
    %168 = math.tanh %167 : vector<8x32xf32>
    %169 = arith.mulf %164, %168 : vector<8x32xf32>
    %cst_43 = arith.constant dense<0.000000e+00> : vector<8x128xf32>
    %170 = tpu.matmul %133, %6, %cst_43 {dimension_numbers = #tpu.dot_dimension_numbers<[1], [0], [0], [1], [0, 0, 1, 1], [], []>} : vector<8x32xf32>, vector<32x128xf32>, vector<8x128xf32> -> vector<8x128xf32>
    %171 = arith.addf %142, %170 : vector<8x128xf32>
    %172 = vector.extract_strided_slice %171 {offsets = [0, 0], sizes = [8, 32], strides = [1, 1]} : vector<8x128xf32> to vector<8x32xf32>
    %173 = arith.negf %172 : vector<8x32xf32>
    %174 = math.exp %173 : vector<8x32xf32>
    %cst_44 = arith.constant 1.000000e+00 : f32
    %175 = vector.broadcast %cst_44 : f32 to vector<8x32xf32>
    %176 = arith.addf %175, %174 : vector<8x32xf32>
    %177 = arith.divf %175, %176 : vector<8x32xf32>
    %178 = vector.extract_strided_slice %171 {offsets = [0, 32], sizes = [8, 32], strides = [1, 1]} : vector<8x128xf32> to vector<8x32xf32>
    %179 = arith.negf %178 : vector<8x32xf32>
    %180 = math.exp %179 : vector<8x32xf32>
    %cst_45 = arith.constant 1.000000e+00 : f32
    %181 = vector.broadcast %cst_45 : f32 to vector<8x32xf32>
    %182 = arith.addf %181, %180 : vector<8x32xf32>
    %183 = arith.divf %181, %182 : vector<8x32xf32>
    %184 = vector.extract_strided_slice %171 {offsets = [0, 64], sizes = [8, 32], strides = [1, 1]} : vector<8x128xf32> to vector<8x32xf32>
    %185 = math.tanh %184 : vector<8x32xf32>
    %186 = vector.extract_strided_slice %171 {offsets = [0, 96], sizes = [8, 32], strides = [1, 1]} : vector<8x128xf32> to vector<8x32xf32>
    %187 = arith.negf %186 : vector<8x32xf32>
    %188 = math.exp %187 : vector<8x32xf32>
    %cst_46 = arith.constant 1.000000e+00 : f32
    %189 = vector.broadcast %cst_46 : f32 to vector<8x32xf32>
    %190 = arith.addf %189, %188 : vector<8x32xf32>
    %191 = arith.divf %189, %190 : vector<8x32xf32>
    %192 = arith.mulf %183, %131 : vector<8x32xf32>
    %193 = arith.mulf %177, %185 : vector<8x32xf32>
    %194 = arith.addf %192, %193 : vector<8x32xf32>
    %195 = math.tanh %194 : vector<8x32xf32>
    %196 = arith.mulf %191, %195 : vector<8x32xf32>
    %c3_i32 = arith.constant 3 : i32
    %c8_i32_47 = arith.constant 8 : i32
    %197 = arith.muli %c3_i32, %c8_i32_47 : i32
    %198 = tpu.assume_multiple %197, 8 : i32
    %c7_i32_48 = arith.constant 7 : i32
    %199 = arith.subi %c7_i32_48, %c3_i32 : i32
    %c8_i32_49 = arith.constant 8 : i32
    %200 = arith.muli %199, %c8_i32_49 : i32
    %201 = tpu.assume_multiple %200, 8 : i32
    %202 = arith.index_cast %198 : i32 to index
    %c0_50 = arith.constant 0 : index
    %203 = vector.load %arg8[%202, %c0_50] : memref<64x256xf32, #tpu.memory_space<vmem>>, vector<8x128xf32>
    %204 = arith.index_cast %201 : i32 to index
    %c128_51 = arith.constant 128 : index
    %205 = vector.load %arg8[%204, %c128_51] : memref<64x256xf32, #tpu.memory_space<vmem>>, vector<8x128xf32>
    %cst_52 = arith.constant dense<0.000000e+00> : vector<8x128xf32>
    %206 = tpu.matmul %169, %5, %cst_52 {dimension_numbers = #tpu.dot_dimension_numbers<[1], [0], [0], [1], [0, 0, 1, 1], [], []>} : vector<8x32xf32>, vector<32x128xf32>, vector<8x128xf32> -> vector<8x128xf32>
    %207 = arith.addf %203, %206 : vector<8x128xf32>
    %208 = vector.extract_strided_slice %207 {offsets = [0, 0], sizes = [8, 32], strides = [1, 1]} : vector<8x128xf32> to vector<8x32xf32>
    %209 = arith.negf %208 : vector<8x32xf32>
    %210 = math.exp %209 : vector<8x32xf32>
    %cst_53 = arith.constant 1.000000e+00 : f32
    %211 = vector.broadcast %cst_53 : f32 to vector<8x32xf32>
    %212 = arith.addf %211, %210 : vector<8x32xf32>
    %213 = arith.divf %211, %212 : vector<8x32xf32>
    %214 = vector.extract_strided_slice %207 {offsets = [0, 32], sizes = [8, 32], strides = [1, 1]} : vector<8x128xf32> to vector<8x32xf32>
    %215 = arith.negf %214 : vector<8x32xf32>
    %216 = math.exp %215 : vector<8x32xf32>
    %cst_54 = arith.constant 1.000000e+00 : f32
    %217 = vector.broadcast %cst_54 : f32 to vector<8x32xf32>
    %218 = arith.addf %217, %216 : vector<8x32xf32>
    %219 = arith.divf %217, %218 : vector<8x32xf32>
    %220 = vector.extract_strided_slice %207 {offsets = [0, 64], sizes = [8, 32], strides = [1, 1]} : vector<8x128xf32> to vector<8x32xf32>
    %221 = math.tanh %220 : vector<8x32xf32>
    %222 = vector.extract_strided_slice %207 {offsets = [0, 96], sizes = [8, 32], strides = [1, 1]} : vector<8x128xf32> to vector<8x32xf32>
    %223 = arith.negf %222 : vector<8x32xf32>
    %224 = math.exp %223 : vector<8x32xf32>
    %cst_55 = arith.constant 1.000000e+00 : f32
    %225 = vector.broadcast %cst_55 : f32 to vector<8x32xf32>
    %226 = arith.addf %225, %224 : vector<8x32xf32>
    %227 = arith.divf %225, %226 : vector<8x32xf32>
    %228 = arith.mulf %219, %167 : vector<8x32xf32>
    %229 = arith.mulf %213, %221 : vector<8x32xf32>
    %230 = arith.addf %228, %229 : vector<8x32xf32>
    %231 = math.tanh %230 : vector<8x32xf32>
    %232 = arith.mulf %227, %231 : vector<8x32xf32>
    %cst_56 = arith.constant dense<0.000000e+00> : vector<8x128xf32>
    %233 = tpu.matmul %196, %6, %cst_56 {dimension_numbers = #tpu.dot_dimension_numbers<[1], [0], [0], [1], [0, 0, 1, 1], [], []>} : vector<8x32xf32>, vector<32x128xf32>, vector<8x128xf32> -> vector<8x128xf32>
    %234 = arith.addf %205, %233 : vector<8x128xf32>
    %235 = vector.extract_strided_slice %234 {offsets = [0, 0], sizes = [8, 32], strides = [1, 1]} : vector<8x128xf32> to vector<8x32xf32>
    %236 = arith.negf %235 : vector<8x32xf32>
    %237 = math.exp %236 : vector<8x32xf32>
    %cst_57 = arith.constant 1.000000e+00 : f32
    %238 = vector.broadcast %cst_57 : f32 to vector<8x32xf32>
    %239 = arith.addf %238, %237 : vector<8x32xf32>
    %240 = arith.divf %238, %239 : vector<8x32xf32>
    %241 = vector.extract_strided_slice %234 {offsets = [0, 32], sizes = [8, 32], strides = [1, 1]} : vector<8x128xf32> to vector<8x32xf32>
    %242 = arith.negf %241 : vector<8x32xf32>
    %243 = math.exp %242 : vector<8x32xf32>
    %cst_58 = arith.constant 1.000000e+00 : f32
    %244 = vector.broadcast %cst_58 : f32 to vector<8x32xf32>
    %245 = arith.addf %244, %243 : vector<8x32xf32>
    %246 = arith.divf %244, %245 : vector<8x32xf32>
    %247 = vector.extract_strided_slice %234 {offsets = [0, 64], sizes = [8, 32], strides = [1, 1]} : vector<8x128xf32> to vector<8x32xf32>
    %248 = math.tanh %247 : vector<8x32xf32>
    %249 = vector.extract_strided_slice %234 {offsets = [0, 96], sizes = [8, 32], strides = [1, 1]} : vector<8x128xf32> to vector<8x32xf32>
    %250 = arith.negf %249 : vector<8x32xf32>
    %251 = math.exp %250 : vector<8x32xf32>
    %cst_59 = arith.constant 1.000000e+00 : f32
    %252 = vector.broadcast %cst_59 : f32 to vector<8x32xf32>
    %253 = arith.addf %252, %251 : vector<8x32xf32>
    %254 = arith.divf %252, %253 : vector<8x32xf32>
    %255 = arith.mulf %246, %194 : vector<8x32xf32>
    %256 = arith.mulf %240, %248 : vector<8x32xf32>
    %257 = arith.addf %255, %256 : vector<8x32xf32>
    %258 = math.tanh %257 : vector<8x32xf32>
    %259 = arith.mulf %254, %258 : vector<8x32xf32>
    %c4_i32 = arith.constant 4 : i32
    %c8_i32_60 = arith.constant 8 : i32
    %260 = arith.muli %c4_i32, %c8_i32_60 : i32
    %261 = tpu.assume_multiple %260, 8 : i32
    %c7_i32_61 = arith.constant 7 : i32
    %262 = arith.subi %c7_i32_61, %c4_i32 : i32
    %c8_i32_62 = arith.constant 8 : i32
    %263 = arith.muli %262, %c8_i32_62 : i32
    %264 = tpu.assume_multiple %263, 8 : i32
    %265 = arith.index_cast %261 : i32 to index
    %c0_63 = arith.constant 0 : index
    %266 = vector.load %arg8[%265, %c0_63] : memref<64x256xf32, #tpu.memory_space<vmem>>, vector<8x128xf32>
    %267 = arith.index_cast %264 : i32 to index
    %c128_64 = arith.constant 128 : index
    %268 = vector.load %arg8[%267, %c128_64] : memref<64x256xf32, #tpu.memory_space<vmem>>, vector<8x128xf32>
    %cst_65 = arith.constant dense<0.000000e+00> : vector<8x128xf32>
    %269 = tpu.matmul %232, %5, %cst_65 {dimension_numbers = #tpu.dot_dimension_numbers<[1], [0], [0], [1], [0, 0, 1, 1], [], []>} : vector<8x32xf32>, vector<32x128xf32>, vector<8x128xf32> -> vector<8x128xf32>
    %270 = arith.addf %266, %269 : vector<8x128xf32>
    %271 = vector.extract_strided_slice %270 {offsets = [0, 0], sizes = [8, 32], strides = [1, 1]} : vector<8x128xf32> to vector<8x32xf32>
    %272 = arith.negf %271 : vector<8x32xf32>
    %273 = math.exp %272 : vector<8x32xf32>
    %cst_66 = arith.constant 1.000000e+00 : f32
    %274 = vector.broadcast %cst_66 : f32 to vector<8x32xf32>
    %275 = arith.addf %274, %273 : vector<8x32xf32>
    %276 = arith.divf %274, %275 : vector<8x32xf32>
    %277 = vector.extract_strided_slice %270 {offsets = [0, 32], sizes = [8, 32], strides = [1, 1]} : vector<8x128xf32> to vector<8x32xf32>
    %278 = arith.negf %277 : vector<8x32xf32>
    %279 = math.exp %278 : vector<8x32xf32>
    %cst_67 = arith.constant 1.000000e+00 : f32
    %280 = vector.broadcast %cst_67 : f32 to vector<8x32xf32>
    %281 = arith.addf %280, %279 : vector<8x32xf32>
    %282 = arith.divf %280, %281 : vector<8x32xf32>
    %283 = vector.extract_strided_slice %270 {offsets = [0, 64], sizes = [8, 32], strides = [1, 1]} : vector<8x128xf32> to vector<8x32xf32>
    %284 = math.tanh %283 : vector<8x32xf32>
    %285 = vector.extract_strided_slice %270 {offsets = [0, 96], sizes = [8, 32], strides = [1, 1]} : vector<8x128xf32> to vector<8x32xf32>
    %286 = arith.negf %285 : vector<8x32xf32>
    %287 = math.exp %286 : vector<8x32xf32>
    %cst_68 = arith.constant 1.000000e+00 : f32
    %288 = vector.broadcast %cst_68 : f32 to vector<8x32xf32>
    %289 = arith.addf %288, %287 : vector<8x32xf32>
    %290 = arith.divf %288, %289 : vector<8x32xf32>
    %291 = arith.mulf %282, %230 : vector<8x32xf32>
    %292 = arith.mulf %276, %284 : vector<8x32xf32>
    %293 = arith.addf %291, %292 : vector<8x32xf32>
    %294 = math.tanh %293 : vector<8x32xf32>
    %295 = arith.mulf %290, %294 : vector<8x32xf32>
    %cst_69 = arith.constant dense<0.000000e+00> : vector<8x128xf32>
    %296 = tpu.matmul %259, %6, %cst_69 {dimension_numbers = #tpu.dot_dimension_numbers<[1], [0], [0], [1], [0, 0, 1, 1], [], []>} : vector<8x32xf32>, vector<32x128xf32>, vector<8x128xf32> -> vector<8x128xf32>
    %297 = arith.addf %268, %296 : vector<8x128xf32>
    %298 = vector.extract_strided_slice %297 {offsets = [0, 0], sizes = [8, 32], strides = [1, 1]} : vector<8x128xf32> to vector<8x32xf32>
    %299 = arith.negf %298 : vector<8x32xf32>
    %300 = math.exp %299 : vector<8x32xf32>
    %cst_70 = arith.constant 1.000000e+00 : f32
    %301 = vector.broadcast %cst_70 : f32 to vector<8x32xf32>
    %302 = arith.addf %301, %300 : vector<8x32xf32>
    %303 = arith.divf %301, %302 : vector<8x32xf32>
    %304 = vector.extract_strided_slice %297 {offsets = [0, 32], sizes = [8, 32], strides = [1, 1]} : vector<8x128xf32> to vector<8x32xf32>
    %305 = arith.negf %304 : vector<8x32xf32>
    %306 = math.exp %305 : vector<8x32xf32>
    %cst_71 = arith.constant 1.000000e+00 : f32
    %307 = vector.broadcast %cst_71 : f32 to vector<8x32xf32>
    %308 = arith.addf %307, %306 : vector<8x32xf32>
    %309 = arith.divf %307, %308 : vector<8x32xf32>
    %310 = vector.extract_strided_slice %297 {offsets = [0, 64], sizes = [8, 32], strides = [1, 1]} : vector<8x128xf32> to vector<8x32xf32>
    %311 = math.tanh %310 : vector<8x32xf32>
    %312 = vector.extract_strided_slice %297 {offsets = [0, 96], sizes = [8, 32], strides = [1, 1]} : vector<8x128xf32> to vector<8x32xf32>
    %313 = arith.negf %312 : vector<8x32xf32>
    %314 = math.exp %313 : vector<8x32xf32>
    %cst_72 = arith.constant 1.000000e+00 : f32
    %315 = vector.broadcast %cst_72 : f32 to vector<8x32xf32>
    %316 = arith.addf %315, %314 : vector<8x32xf32>
    %317 = arith.divf %315, %316 : vector<8x32xf32>
    %318 = arith.mulf %309, %257 : vector<8x32xf32>
    %319 = arith.mulf %303, %311 : vector<8x32xf32>
    %320 = arith.addf %318, %319 : vector<8x32xf32>
    %321 = math.tanh %320 : vector<8x32xf32>
    %322 = arith.mulf %317, %321 : vector<8x32xf32>
    %c5_i32 = arith.constant 5 : i32
    %c8_i32_73 = arith.constant 8 : i32
    %323 = arith.muli %c5_i32, %c8_i32_73 : i32
    %324 = tpu.assume_multiple %323, 8 : i32
    %c7_i32_74 = arith.constant 7 : i32
    %325 = arith.subi %c7_i32_74, %c5_i32 : i32
    %c8_i32_75 = arith.constant 8 : i32
    %326 = arith.muli %325, %c8_i32_75 : i32
    %327 = tpu.assume_multiple %326, 8 : i32
    %328 = arith.index_cast %324 : i32 to index
    %c0_76 = arith.constant 0 : index
    %329 = vector.load %arg8[%328, %c0_76] : memref<64x256xf32, #tpu.memory_space<vmem>>, vector<8x128xf32>
    %330 = arith.index_cast %327 : i32 to index
    %c128_77 = arith.constant 128 : index
    %331 = vector.load %arg8[%330, %c128_77] : memref<64x256xf32, #tpu.memory_space<vmem>>, vector<8x128xf32>
    %cst_78 = arith.constant dense<0.000000e+00> : vector<8x128xf32>
    %332 = tpu.matmul %295, %5, %cst_78 {dimension_numbers = #tpu.dot_dimension_numbers<[1], [0], [0], [1], [0, 0, 1, 1], [], []>} : vector<8x32xf32>, vector<32x128xf32>, vector<8x128xf32> -> vector<8x128xf32>
    %333 = arith.addf %329, %332 : vector<8x128xf32>
    %334 = vector.extract_strided_slice %333 {offsets = [0, 0], sizes = [8, 32], strides = [1, 1]} : vector<8x128xf32> to vector<8x32xf32>
    %335 = arith.negf %334 : vector<8x32xf32>
    %336 = math.exp %335 : vector<8x32xf32>
    %cst_79 = arith.constant 1.000000e+00 : f32
    %337 = vector.broadcast %cst_79 : f32 to vector<8x32xf32>
    %338 = arith.addf %337, %336 : vector<8x32xf32>
    %339 = arith.divf %337, %338 : vector<8x32xf32>
    %340 = vector.extract_strided_slice %333 {offsets = [0, 32], sizes = [8, 32], strides = [1, 1]} : vector<8x128xf32> to vector<8x32xf32>
    %341 = arith.negf %340 : vector<8x32xf32>
    %342 = math.exp %341 : vector<8x32xf32>
    %cst_80 = arith.constant 1.000000e+00 : f32
    %343 = vector.broadcast %cst_80 : f32 to vector<8x32xf32>
    %344 = arith.addf %343, %342 : vector<8x32xf32>
    %345 = arith.divf %343, %344 : vector<8x32xf32>
    %346 = vector.extract_strided_slice %333 {offsets = [0, 64], sizes = [8, 32], strides = [1, 1]} : vector<8x128xf32> to vector<8x32xf32>
    %347 = math.tanh %346 : vector<8x32xf32>
    %348 = vector.extract_strided_slice %333 {offsets = [0, 96], sizes = [8, 32], strides = [1, 1]} : vector<8x128xf32> to vector<8x32xf32>
    %349 = arith.negf %348 : vector<8x32xf32>
    %350 = math.exp %349 : vector<8x32xf32>
    %cst_81 = arith.constant 1.000000e+00 : f32
    %351 = vector.broadcast %cst_81 : f32 to vector<8x32xf32>
    %352 = arith.addf %351, %350 : vector<8x32xf32>
    %353 = arith.divf %351, %352 : vector<8x32xf32>
    %354 = arith.mulf %345, %293 : vector<8x32xf32>
    %355 = arith.mulf %339, %347 : vector<8x32xf32>
    %356 = arith.addf %354, %355 : vector<8x32xf32>
    %357 = math.tanh %356 : vector<8x32xf32>
    %358 = arith.mulf %353, %357 : vector<8x32xf32>
    %cst_82 = arith.constant dense<0.000000e+00> : vector<8x128xf32>
    %359 = tpu.matmul %322, %6, %cst_82 {dimension_numbers = #tpu.dot_dimension_numbers<[1], [0], [0], [1], [0, 0, 1, 1], [], []>} : vector<8x32xf32>, vector<32x128xf32>, vector<8x128xf32> -> vector<8x128xf32>
    %360 = arith.addf %331, %359 : vector<8x128xf32>
    %361 = vector.extract_strided_slice %360 {offsets = [0, 0], sizes = [8, 32], strides = [1, 1]} : vector<8x128xf32> to vector<8x32xf32>
    %362 = arith.negf %361 : vector<8x32xf32>
    %363 = math.exp %362 : vector<8x32xf32>
    %cst_83 = arith.constant 1.000000e+00 : f32
    %364 = vector.broadcast %cst_83 : f32 to vector<8x32xf32>
    %365 = arith.addf %364, %363 : vector<8x32xf32>
    %366 = arith.divf %364, %365 : vector<8x32xf32>
    %367 = vector.extract_strided_slice %360 {offsets = [0, 32], sizes = [8, 32], strides = [1, 1]} : vector<8x128xf32> to vector<8x32xf32>
    %368 = arith.negf %367 : vector<8x32xf32>
    %369 = math.exp %368 : vector<8x32xf32>
    %cst_84 = arith.constant 1.000000e+00 : f32
    %370 = vector.broadcast %cst_84 : f32 to vector<8x32xf32>
    %371 = arith.addf %370, %369 : vector<8x32xf32>
    %372 = arith.divf %370, %371 : vector<8x32xf32>
    %373 = vector.extract_strided_slice %360 {offsets = [0, 64], sizes = [8, 32], strides = [1, 1]} : vector<8x128xf32> to vector<8x32xf32>
    %374 = math.tanh %373 : vector<8x32xf32>
    %375 = vector.extract_strided_slice %360 {offsets = [0, 96], sizes = [8, 32], strides = [1, 1]} : vector<8x128xf32> to vector<8x32xf32>
    %376 = arith.negf %375 : vector<8x32xf32>
    %377 = math.exp %376 : vector<8x32xf32>
    %cst_85 = arith.constant 1.000000e+00 : f32
    %378 = vector.broadcast %cst_85 : f32 to vector<8x32xf32>
    %379 = arith.addf %378, %377 : vector<8x32xf32>
    %380 = arith.divf %378, %379 : vector<8x32xf32>
    %381 = arith.mulf %372, %320 : vector<8x32xf32>
    %382 = arith.mulf %366, %374 : vector<8x32xf32>
    %383 = arith.addf %381, %382 : vector<8x32xf32>
    %384 = math.tanh %383 : vector<8x32xf32>
    %385 = arith.mulf %380, %384 : vector<8x32xf32>
    %c6_i32 = arith.constant 6 : i32
    %c8_i32_86 = arith.constant 8 : i32
    %386 = arith.muli %c6_i32, %c8_i32_86 : i32
    %387 = tpu.assume_multiple %386, 8 : i32
    %c7_i32_87 = arith.constant 7 : i32
    %388 = arith.subi %c7_i32_87, %c6_i32 : i32
    %c8_i32_88 = arith.constant 8 : i32
    %389 = arith.muli %388, %c8_i32_88 : i32
    %390 = tpu.assume_multiple %389, 8 : i32
    %391 = arith.index_cast %387 : i32 to index
    %c0_89 = arith.constant 0 : index
    %392 = vector.load %arg8[%391, %c0_89] : memref<64x256xf32, #tpu.memory_space<vmem>>, vector<8x128xf32>
    %393 = arith.index_cast %390 : i32 to index
    %c128_90 = arith.constant 128 : index
    %394 = vector.load %arg8[%393, %c128_90] : memref<64x256xf32, #tpu.memory_space<vmem>>, vector<8x128xf32>
    %cst_91 = arith.constant dense<0.000000e+00> : vector<8x128xf32>
    %395 = tpu.matmul %358, %5, %cst_91 {dimension_numbers = #tpu.dot_dimension_numbers<[1], [0], [0], [1], [0, 0, 1, 1], [], []>} : vector<8x32xf32>, vector<32x128xf32>, vector<8x128xf32> -> vector<8x128xf32>
    %396 = arith.addf %392, %395 : vector<8x128xf32>
    %397 = vector.extract_strided_slice %396 {offsets = [0, 0], sizes = [8, 32], strides = [1, 1]} : vector<8x128xf32> to vector<8x32xf32>
    %398 = arith.negf %397 : vector<8x32xf32>
    %399 = math.exp %398 : vector<8x32xf32>
    %cst_92 = arith.constant 1.000000e+00 : f32
    %400 = vector.broadcast %cst_92 : f32 to vector<8x32xf32>
    %401 = arith.addf %400, %399 : vector<8x32xf32>
    %402 = arith.divf %400, %401 : vector<8x32xf32>
    %403 = vector.extract_strided_slice %396 {offsets = [0, 32], sizes = [8, 32], strides = [1, 1]} : vector<8x128xf32> to vector<8x32xf32>
    %404 = arith.negf %403 : vector<8x32xf32>
    %405 = math.exp %404 : vector<8x32xf32>
    %cst_93 = arith.constant 1.000000e+00 : f32
    %406 = vector.broadcast %cst_93 : f32 to vector<8x32xf32>
    %407 = arith.addf %406, %405 : vector<8x32xf32>
    %408 = arith.divf %406, %407 : vector<8x32xf32>
    %409 = vector.extract_strided_slice %396 {offsets = [0, 64], sizes = [8, 32], strides = [1, 1]} : vector<8x128xf32> to vector<8x32xf32>
    %410 = math.tanh %409 : vector<8x32xf32>
    %411 = vector.extract_strided_slice %396 {offsets = [0, 96], sizes = [8, 32], strides = [1, 1]} : vector<8x128xf32> to vector<8x32xf32>
    %412 = arith.negf %411 : vector<8x32xf32>
    %413 = math.exp %412 : vector<8x32xf32>
    %cst_94 = arith.constant 1.000000e+00 : f32
    %414 = vector.broadcast %cst_94 : f32 to vector<8x32xf32>
    %415 = arith.addf %414, %413 : vector<8x32xf32>
    %416 = arith.divf %414, %415 : vector<8x32xf32>
    %417 = arith.mulf %408, %356 : vector<8x32xf32>
    %418 = arith.mulf %402, %410 : vector<8x32xf32>
    %419 = arith.addf %417, %418 : vector<8x32xf32>
    %420 = math.tanh %419 : vector<8x32xf32>
    %421 = arith.mulf %416, %420 : vector<8x32xf32>
    %cst_95 = arith.constant dense<0.000000e+00> : vector<8x128xf32>
    %422 = tpu.matmul %385, %6, %cst_95 {dimension_numbers = #tpu.dot_dimension_numbers<[1], [0], [0], [1], [0, 0, 1, 1], [], []>} : vector<8x32xf32>, vector<32x128xf32>, vector<8x128xf32> -> vector<8x128xf32>
    %423 = arith.addf %394, %422 : vector<8x128xf32>
    %424 = vector.extract_strided_slice %423 {offsets = [0, 0], sizes = [8, 32], strides = [1, 1]} : vector<8x128xf32> to vector<8x32xf32>
    %425 = arith.negf %424 : vector<8x32xf32>
    %426 = math.exp %425 : vector<8x32xf32>
    %cst_96 = arith.constant 1.000000e+00 : f32
    %427 = vector.broadcast %cst_96 : f32 to vector<8x32xf32>
    %428 = arith.addf %427, %426 : vector<8x32xf32>
    %429 = arith.divf %427, %428 : vector<8x32xf32>
    %430 = vector.extract_strided_slice %423 {offsets = [0, 32], sizes = [8, 32], strides = [1, 1]} : vector<8x128xf32> to vector<8x32xf32>
    %431 = arith.negf %430 : vector<8x32xf32>
    %432 = math.exp %431 : vector<8x32xf32>
    %cst_97 = arith.constant 1.000000e+00 : f32
    %433 = vector.broadcast %cst_97 : f32 to vector<8x32xf32>
    %434 = arith.addf %433, %432 : vector<8x32xf32>
    %435 = arith.divf %433, %434 : vector<8x32xf32>
    %436 = vector.extract_strided_slice %423 {offsets = [0, 64], sizes = [8, 32], strides = [1, 1]} : vector<8x128xf32> to vector<8x32xf32>
    %437 = math.tanh %436 : vector<8x32xf32>
    %438 = vector.extract_strided_slice %423 {offsets = [0, 96], sizes = [8, 32], strides = [1, 1]} : vector<8x128xf32> to vector<8x32xf32>
    %439 = arith.negf %438 : vector<8x32xf32>
    %440 = math.exp %439 : vector<8x32xf32>
    %cst_98 = arith.constant 1.000000e+00 : f32
    %441 = vector.broadcast %cst_98 : f32 to vector<8x32xf32>
    %442 = arith.addf %441, %440 : vector<8x32xf32>
    %443 = arith.divf %441, %442 : vector<8x32xf32>
    %444 = arith.mulf %435, %383 : vector<8x32xf32>
    %445 = arith.mulf %429, %437 : vector<8x32xf32>
    %446 = arith.addf %444, %445 : vector<8x32xf32>
    %447 = math.tanh %446 : vector<8x32xf32>
    %448 = arith.mulf %443, %447 : vector<8x32xf32>
    %c7_i32_99 = arith.constant 7 : i32
    %c8_i32_100 = arith.constant 8 : i32
    %449 = arith.muli %c7_i32_99, %c8_i32_100 : i32
    %450 = tpu.assume_multiple %449, 8 : i32
    %c7_i32_101 = arith.constant 7 : i32
    %451 = arith.subi %c7_i32_101, %c7_i32_99 : i32
    %c8_i32_102 = arith.constant 8 : i32
    %452 = arith.muli %451, %c8_i32_102 : i32
    %453 = tpu.assume_multiple %452, 8 : i32
    %454 = arith.index_cast %450 : i32 to index
    %c0_103 = arith.constant 0 : index
    %455 = vector.load %arg8[%454, %c0_103] : memref<64x256xf32, #tpu.memory_space<vmem>>, vector<8x128xf32>
    %456 = arith.index_cast %453 : i32 to index
    %c128_104 = arith.constant 128 : index
    %457 = vector.load %arg8[%456, %c128_104] : memref<64x256xf32, #tpu.memory_space<vmem>>, vector<8x128xf32>
    %cst_105 = arith.constant dense<0.000000e+00> : vector<8x128xf32>
    %458 = tpu.matmul %421, %5, %cst_105 {dimension_numbers = #tpu.dot_dimension_numbers<[1], [0], [0], [1], [0, 0, 1, 1], [], []>} : vector<8x32xf32>, vector<32x128xf32>, vector<8x128xf32> -> vector<8x128xf32>
    %459 = arith.addf %455, %458 : vector<8x128xf32>
    %460 = vector.extract_strided_slice %459 {offsets = [0, 0], sizes = [8, 32], strides = [1, 1]} : vector<8x128xf32> to vector<8x32xf32>
    %461 = arith.negf %460 : vector<8x32xf32>
    %462 = math.exp %461 : vector<8x32xf32>
    %cst_106 = arith.constant 1.000000e+00 : f32
    %463 = vector.broadcast %cst_106 : f32 to vector<8x32xf32>
    %464 = arith.addf %463, %462 : vector<8x32xf32>
    %465 = arith.divf %463, %464 : vector<8x32xf32>
    %466 = vector.extract_strided_slice %459 {offsets = [0, 32], sizes = [8, 32], strides = [1, 1]} : vector<8x128xf32> to vector<8x32xf32>
    %467 = arith.negf %466 : vector<8x32xf32>
    %468 = math.exp %467 : vector<8x32xf32>
    %cst_107 = arith.constant 1.000000e+00 : f32
    %469 = vector.broadcast %cst_107 : f32 to vector<8x32xf32>
    %470 = arith.addf %469, %468 : vector<8x32xf32>
    %471 = arith.divf %469, %470 : vector<8x32xf32>
    %472 = vector.extract_strided_slice %459 {offsets = [0, 64], sizes = [8, 32], strides = [1, 1]} : vector<8x128xf32> to vector<8x32xf32>
    %473 = math.tanh %472 : vector<8x32xf32>
    %474 = vector.extract_strided_slice %459 {offsets = [0, 96], sizes = [8, 32], strides = [1, 1]} : vector<8x128xf32> to vector<8x32xf32>
    %475 = arith.negf %474 : vector<8x32xf32>
    %476 = math.exp %475 : vector<8x32xf32>
    %cst_108 = arith.constant 1.000000e+00 : f32
    %477 = vector.broadcast %cst_108 : f32 to vector<8x32xf32>
    %478 = arith.addf %477, %476 : vector<8x32xf32>
    %479 = arith.divf %477, %478 : vector<8x32xf32>
    %480 = arith.mulf %471, %419 : vector<8x32xf32>
    %481 = arith.mulf %465, %473 : vector<8x32xf32>
    %482 = arith.addf %480, %481 : vector<8x32xf32>
    %483 = math.tanh %482 : vector<8x32xf32>
    %484 = arith.mulf %479, %483 : vector<8x32xf32>
    %cst_109 = arith.constant dense<0.000000e+00> : vector<8x128xf32>
    %485 = tpu.matmul %448, %6, %cst_109 {dimension_numbers = #tpu.dot_dimension_numbers<[1], [0], [0], [1], [0, 0, 1, 1], [], []>} : vector<8x32xf32>, vector<32x128xf32>, vector<8x128xf32> -> vector<8x128xf32>
    %486 = arith.addf %457, %485 : vector<8x128xf32>
    %487 = vector.extract_strided_slice %486 {offsets = [0, 0], sizes = [8, 32], strides = [1, 1]} : vector<8x128xf32> to vector<8x32xf32>
    %488 = arith.negf %487 : vector<8x32xf32>
    %489 = math.exp %488 : vector<8x32xf32>
    %cst_110 = arith.constant 1.000000e+00 : f32
    %490 = vector.broadcast %cst_110 : f32 to vector<8x32xf32>
    %491 = arith.addf %490, %489 : vector<8x32xf32>
    %492 = arith.divf %490, %491 : vector<8x32xf32>
    %493 = vector.extract_strided_slice %486 {offsets = [0, 32], sizes = [8, 32], strides = [1, 1]} : vector<8x128xf32> to vector<8x32xf32>
    %494 = arith.negf %493 : vector<8x32xf32>
    %495 = math.exp %494 : vector<8x32xf32>
    %cst_111 = arith.constant 1.000000e+00 : f32
    %496 = vector.broadcast %cst_111 : f32 to vector<8x32xf32>
    %497 = arith.addf %496, %495 : vector<8x32xf32>
    %498 = arith.divf %496, %497 : vector<8x32xf32>
    %499 = vector.extract_strided_slice %486 {offsets = [0, 64], sizes = [8, 32], strides = [1, 1]} : vector<8x128xf32> to vector<8x32xf32>
    %500 = math.tanh %499 : vector<8x32xf32>
    %501 = vector.extract_strided_slice %486 {offsets = [0, 96], sizes = [8, 32], strides = [1, 1]} : vector<8x128xf32> to vector<8x32xf32>
    %502 = arith.negf %501 : vector<8x32xf32>
    %503 = math.exp %502 : vector<8x32xf32>
    %cst_112 = arith.constant 1.000000e+00 : f32
    %504 = vector.broadcast %cst_112 : f32 to vector<8x32xf32>
    %505 = arith.addf %504, %503 : vector<8x32xf32>
    %506 = arith.divf %504, %505 : vector<8x32xf32>
    %507 = arith.mulf %498, %446 : vector<8x32xf32>
    %508 = arith.mulf %492, %500 : vector<8x32xf32>
    %509 = arith.addf %507, %508 : vector<8x32xf32>
    %510 = math.tanh %509 : vector<8x32xf32>
    %511 = arith.mulf %506, %510 : vector<8x32xf32>
    %c8_i32_113 = arith.constant 8 : i32
    %c0_114 = arith.constant 0 : index
    %c0_115 = arith.constant 0 : index
    %512 = vector.load %arg5[%c0_114, %c0_115] : memref<64x128xf32, #tpu.memory_space<vmem>>, vector<32x128xf32>
    %cst_116 = arith.constant dense<0.000000e+00> : vector<8x128xf32>
    %513 = tpu.matmul %484, %512, %cst_116 {dimension_numbers = #tpu.dot_dimension_numbers<[1], [0], [0], [1], [0, 0, 1, 1], [], []>} : vector<8x32xf32>, vector<32x128xf32>, vector<8x128xf32> -> vector<8x128xf32>
    %c32 = arith.constant 32 : index
    %c0_117 = arith.constant 0 : index
    %514 = vector.load %arg5[%c32, %c0_117] : memref<64x128xf32, #tpu.memory_space<vmem>>, vector<32x128xf32>
    %cst_118 = arith.constant dense<0.000000e+00> : vector<8x128xf32>
    %515 = tpu.matmul %511, %514, %cst_118 {dimension_numbers = #tpu.dot_dimension_numbers<[1], [0], [0], [1], [0, 0, 1, 1], [], []>} : vector<8x32xf32>, vector<32x128xf32>, vector<8x128xf32> -> vector<8x128xf32>
    %516 = arith.addf %513, %515 : vector<8x128xf32>
    %c0_119 = arith.constant 0 : index
    %c0_120 = arith.constant 0 : index
    %517 = vector.load %arg6[%c0_119, %c0_120] : memref<1x128xf32, #tpu.memory_space<vmem>>, vector<1x128xf32>
    %518 = vector.broadcast %517 : vector<1x128xf32> to vector<8x128xf32>
    %519 = arith.addf %516, %518 : vector<8x128xf32>
    %c0_121 = arith.constant 0 : index
    %c0_122 = arith.constant 0 : index
    %520 = vector.load %arg7[%c0_121, %c0_122] : memref<8x128xf32, #tpu.memory_space<vmem>>, vector<8x128xf32>
    tpu.vector_store %arg7[%c0_121, %c0_122], %519 {strides = array<i32>} : memref<8x128xf32, #tpu.memory_space<vmem>>, vector<8x128xf32>,
    return
  }
  func.func @transform_0(%arg0: i32) -> (i32, i32, i32) {
    %c0_i32 = arith.constant 0 : i32
    %c0_i32_0 = arith.constant 0 : i32
    %c0_i32_1 = arith.constant 0 : i32
    return %arg0, %c0_i32, %c0_i32_0 : i32, i32, i32
  }
  func.func @transform_1(%arg0: i32) -> (i32, i32) {
    %c0_i32 = arith.constant 0 : i32
    %c0_i32_0 = arith.constant 0 : i32
    %c0_i32_1 = arith.constant 0 : i32
    return %c0_i32, %c0_i32_0 : i32, i32
  }
  func.func @transform_2(%arg0: i32) -> (i32, i32) {
    %c0_i32 = arith.constant 0 : i32
    %c0_i32_0 = arith.constant 0 : i32
    %c0_i32_1 = arith.constant 0 : i32
    return %c0_i32, %c0_i32_0 : i32, i32
  }
  func.func @transform_3(%arg0: i32) -> (i32, i32) {
    %c0_i32 = arith.constant 0 : i32
    %c0_i32_0 = arith.constant 0 : i32
    %c0_i32_1 = arith.constant 0 : i32
    return %c0_i32, %c0_i32_0 : i32, i32
  }
  func.func @transform_4(%arg0: i32) -> (i32, i32) {
    %c0_i32 = arith.constant 0 : i32
    %c0_i32_0 = arith.constant 0 : i32
    %c0_i32_1 = arith.constant 0 : i32
    return %c0_i32, %c0_i32_0 : i32, i32
  }
  func.func @transform_5(%arg0: i32) -> (i32, i32) {
    %c0_i32 = arith.constant 0 : i32
    %c0_i32_0 = arith.constant 0 : i32
    %c0_i32_1 = arith.constant 0 : i32
    return %c0_i32, %c0_i32_0 : i32, i32
  }
  func.func @transform_6(%arg0: i32) -> (i32, i32) {
    %c0_i32 = arith.constant 0 : i32
    %c0_i32_0 = arith.constant 0 : i32
    return %arg0, %c0_i32 : i32, i32
  }
}

module attributes {stable_mosaic.version = 11 : i64} {
  func.func @bilstm_fc_kernel(%arg0: i32, %arg1: memref<1x64x17xf32, #tpu.memory_space<vmem>>, %arg2: memref<17x256xf32, #tpu.memory_space<vmem>>, %arg3: memref<32x128xf32, #tpu.memory_space<vmem>>, %arg4: memref<32x128xf32, #tpu.memory_space<vmem>>, %arg5: memref<64x128xf32, #tpu.memory_space<vmem>>, %arg6: memref<1x128xf32, #tpu.memory_space<vmem>>, %arg7: memref<8x128xf32, #tpu.memory_space<vmem>>, %arg8: memref<64x256xf32, #tpu.memory_space<vmem>>) attributes {dimension_semantics = [#tpu.dimension_semantics<parallel>], iteration_bounds = array<i64: 1>, scalar_prefetch = 0 : i64, scratch_operands = 1 : i64, tpu.core_type = #tpu.core_type<tc>, window_params = [{transform_indices = @transform_0, window_bounds = array<i64: 1, 64, 17>}, {pipeline_mode = #tpu.pipeline_mode<synchronous>, transform_indices = @transform_1, window_bounds = array<i64: 17, 256>}, {pipeline_mode = #tpu.pipeline_mode<synchronous>, transform_indices = @transform_2, window_bounds = array<i64: 32, 128>}, {pipeline_mode = #tpu.pipeline_mode<synchronous>, transform_indices = @transform_3, window_bounds = array<i64: 32, 128>}, {pipeline_mode = #tpu.pipeline_mode<synchronous>, transform_indices = @transform_4, window_bounds = array<i64: 64, 128>}, {pipeline_mode = #tpu.pipeline_mode<synchronous>, transform_indices = @transform_5, window_bounds = array<i64: 1, 128>}, {transform_indices = @transform_6, window_bounds = array<i64: 8, 128>}]} {
    %c0 = arith.constant 0 : index
    %c0_0 = arith.constant 0 : index
    %c0_1 = arith.constant 0 : index
    %0 = vector.load %arg1[%c0, %c0_0, %c0_1] : memref<1x64x17xf32, #tpu.memory_space<vmem>>, vector<1x64x17xf32>
    %1 = vector.shape_cast %0 : vector<1x64x17xf32> to vector<64x17xf32>
    %c0_2 = arith.constant 0 : index
    %c0_3 = arith.constant 0 : index
    %2 = vector.load %arg2[%c0_2, %c0_3] : memref<17x256xf32, #tpu.memory_space<vmem>>, vector<17x256xf32>
    %cst = arith.constant dense<0.000000e+00> : vector<64x256xf32>
    %3 = tpu.matmul %1, %2, %cst {dimension_numbers = #tpu.dot_dimension_numbers<[1], [0], [0], [1], [0, 0, 1, 1], [], []>} : vector<64x17xf32>, vector<17x256xf32>, vector<64x256xf32> -> vector<64x256xf32>
    %c0_4 = arith.constant 0 : index
    %c0_5 = arith.constant 0 : index
    %4 = vector.load %arg8[%c0_4, %c0_5] : memref<64x256xf32, #tpu.memory_space<vmem>>, vector<64x256xf32>
    tpu.vector_store %arg8[%c0_4, %c0_5], %3 {strides = array<i32>} : memref<64x256xf32, #tpu.memory_space<vmem>>, vector<64x256xf32>,
    %c0_6 = arith.constant 0 : index
    %c0_7 = arith.constant 0 : index
    %5 = vector.load %arg3[%c0_6, %c0_7] : memref<32x128xf32, #tpu.memory_space<vmem>>, vector<32x128xf32>
    %c0_8 = arith.constant 0 : index
    %c0_9 = arith.constant 0 : index
    %6 = vector.load %arg4[%c0_8, %c0_9] : memref<32x128xf32, #tpu.memory_space<vmem>>, vector<32x128xf32>
    %cst_10 = arith.constant 0.000000e+00 : f32
    %7 = vector.broadcast %cst_10 : f32 to vector<8x32xf32>
    %c0_i32 = arith.constant 0 : i32
    %c8_i32 = arith.constant 8 : i32
    %8 = arith.muli %c0_i32, %c8_i32 : i32
    %9 = tpu.assume_multiple %8, 8 : i32
    %c7_i32 = arith.constant 7 : i32
    %10 = arith.subi %c7_i32, %c0_i32 : i32
    %c8_i32_11 = arith.constant 8 : i32
    %11 = arith.muli %10, %c8_i32_11 : i32
    %12 = tpu.assume_multiple %11, 8 : i32
    %13 = arith.index_cast %9 : i32 to index
    %c0_12 = arith.constant 0 : index
    %14 = vector.load %arg8[%13, %c0_12] : memref<64x256xf32, #tpu.memory_space<vmem>>, vector<8x128xf32>
    %15 = arith.index_cast %12 : i32 to index
    %c128 = arith.constant 128 : index
    %16 = vector.load %arg8[%15, %c128] : memref<64x256xf32, #tpu.memory_space<vmem>>, vector<8x128xf32>
    %cst_13 = arith.constant dense<0.000000e+00> : vector<8x128xf32>
    %17 = tpu.matmul %7, %5, %cst_13 {dimension_numbers = #tpu.dot_dimension_numbers<[1], [0], [0], [1], [0, 0, 1, 1], [], []>} : vector<8x32xf32>, vector<32x128xf32>, vector<8x128xf32> -> vector<8x128xf32>
    %18 = arith.addf %14, %17 : vector<8x128xf32>
    %19 = vector.extract_strided_slice %18 {offsets = [0, 0], sizes = [8, 32], strides = [1, 1]} : vector<8x128xf32> to vector<8x32xf32>
    %20 = arith.negf %19 : vector<8x32xf32>
    %21 = math.exp %20 : vector<8x32xf32>
    %cst_14 = arith.constant 1.000000e+00 : f32
    %22 = vector.broadcast %cst_14 : f32 to vector<8x32xf32>
    %23 = arith.addf %22, %21 : vector<8x32xf32>
    %24 = arith.divf %22, %23 : vector<8x32xf32>
    %25 = vector.extract_strided_slice %18 {offsets = [0, 32], sizes = [8, 32], strides = [1, 1]} : vector<8x128xf32> to vector<8x32xf32>
    %26 = arith.negf %25 : vector<8x32xf32>
    %27 = math.exp %26 : vector<8x32xf32>
    %cst_15 = arith.constant 1.000000e+00 : f32
    %28 = vector.broadcast %cst_15 : f32 to vector<8x32xf32>
    %29 = arith.addf %28, %27 : vector<8x32xf32>
    %30 = arith.divf %28, %29 : vector<8x32xf32>
    %31 = vector.extract_strided_slice %18 {offsets = [0, 64], sizes = [8, 32], strides = [1, 1]} : vector<8x128xf32> to vector<8x32xf32>
    %32 = math.tanh %31 : vector<8x32xf32>
    %33 = vector.extract_strided_slice %18 {offsets = [0, 96], sizes = [8, 32], strides = [1, 1]} : vector<8x128xf32> to vector<8x32xf32>
    %34 = arith.negf %33 : vector<8x32xf32>
    %35 = math.exp %34 : vector<8x32xf32>
    %cst_16 = arith.constant 1.000000e+00 : f32
    %36 = vector.broadcast %cst_16 : f32 to vector<8x32xf32>
    %37 = arith.addf %36, %35 : vector<8x32xf32>
    %38 = arith.divf %36, %37 : vector<8x32xf32>
    %39 = arith.mulf %30, %7 : vector<8x32xf32>
    %40 = arith.mulf %24, %32 : vector<8x32xf32>
    %41 = arith.addf %39, %40 : vector<8x32xf32>
    %42 = math.tanh %41 : vector<8x32xf32>
    %43 = arith.mulf %38, %42 : vector<8x32xf32>
    %cst_17 = arith.constant dense<0.000000e+00> : vector<8x128xf32>
    %44 = tpu.matmul %7, %6, %cst_17 {dimension_numbers = #tpu.dot_dimension_numbers<[1], [0], [0], [1], [0, 0, 1, 1], [], []>} : vector<8x32xf32>, vector<32x128xf32>, vector<8x128xf32> -> vector<8x128xf32>
    %45 = arith.addf %16, %44 : vector<8x128xf32>
    %46 = vector.extract_strided_slice %45 {offsets = [0, 0], sizes = [8, 32], strides = [1, 1]} : vector<8x128xf32> to vector<8x32xf32>
    %47 = arith.negf %46 : vector<8x32xf32>
    %48 = math.exp %47 : vector<8x32xf32>
    %cst_18 = arith.constant 1.000000e+00 : f32
    %49 = vector.broadcast %cst_18 : f32 to vector<8x32xf32>
    %50 = arith.addf %49, %48 : vector<8x32xf32>
    %51 = arith.divf %49, %50 : vector<8x32xf32>
    %52 = vector.extract_strided_slice %45 {offsets = [0, 32], sizes = [8, 32], strides = [1, 1]} : vector<8x128xf32> to vector<8x32xf32>
    %53 = arith.negf %52 : vector<8x32xf32>
    %54 = math.exp %53 : vector<8x32xf32>
    %cst_19 = arith.constant 1.000000e+00 : f32
    %55 = vector.broadcast %cst_19 : f32 to vector<8x32xf32>
    %56 = arith.addf %55, %54 : vector<8x32xf32>
    %57 = arith.divf %55, %56 : vector<8x32xf32>
    %58 = vector.extract_strided_slice %45 {offsets = [0, 64], sizes = [8, 32], strides = [1, 1]} : vector<8x128xf32> to vector<8x32xf32>
    %59 = math.tanh %58 : vector<8x32xf32>
    %60 = vector.extract_strided_slice %45 {offsets = [0, 96], sizes = [8, 32], strides = [1, 1]} : vector<8x128xf32> to vector<8x32xf32>
    %61 = arith.negf %60 : vector<8x32xf32>
    %62 = math.exp %61 : vector<8x32xf32>
    %cst_20 = arith.constant 1.000000e+00 : f32
    %63 = vector.broadcast %cst_20 : f32 to vector<8x32xf32>
    %64 = arith.addf %63, %62 : vector<8x32xf32>
    %65 = arith.divf %63, %64 : vector<8x32xf32>
    %66 = arith.mulf %57, %7 : vector<8x32xf32>
    %67 = arith.mulf %51, %59 : vector<8x32xf32>
    %68 = arith.addf %66, %67 : vector<8x32xf32>
    %69 = math.tanh %68 : vector<8x32xf32>
    %70 = arith.mulf %65, %69 : vector<8x32xf32>
    %c1_i32 = arith.constant 1 : i32
    %c8_i32_21 = arith.constant 8 : i32
    %71 = arith.muli %c1_i32, %c8_i32_21 : i32
    %72 = tpu.assume_multiple %71, 8 : i32
    %c7_i32_22 = arith.constant 7 : i32
    %73 = arith.subi %c7_i32_22, %c1_i32 : i32
    %c8_i32_23 = arith.constant 8 : i32
    %74 = arith.muli %73, %c8_i32_23 : i32
    %75 = tpu.assume_multiple %74, 8 : i32
    %76 = arith.index_cast %72 : i32 to index
    %c0_24 = arith.constant 0 : index
    %77 = vector.load %arg8[%76, %c0_24] : memref<64x256xf32, #tpu.memory_space<vmem>>, vector<8x128xf32>
    %78 = arith.index_cast %75 : i32 to index
    %c128_25 = arith.constant 128 : index
    %79 = vector.load %arg8[%78, %c128_25] : memref<64x256xf32, #tpu.memory_space<vmem>>, vector<8x128xf32>
    %cst_26 = arith.constant dense<0.000000e+00> : vector<8x128xf32>
    %80 = tpu.matmul %43, %5, %cst_26 {dimension_numbers = #tpu.dot_dimension_numbers<[1], [0], [0], [1], [0, 0, 1, 1], [], []>} : vector<8x32xf32>, vector<32x128xf32>, vector<8x128xf32> -> vector<8x128xf32>
    %81 = arith.addf %77, %80 : vector<8x128xf32>
    %82 = vector.extract_strided_slice %81 {offsets = [0, 0], sizes = [8, 32], strides = [1, 1]} : vector<8x128xf32> to vector<8x32xf32>
    %83 = arith.negf %82 : vector<8x32xf32>
    %84 = math.exp %83 : vector<8x32xf32>
    %cst_27 = arith.constant 1.000000e+00 : f32
    %85 = vector.broadcast %cst_27 : f32 to vector<8x32xf32>
    %86 = arith.addf %85, %84 : vector<8x32xf32>
    %87 = arith.divf %85, %86 : vector<8x32xf32>
    %88 = vector.extract_strided_slice %81 {offsets = [0, 32], sizes = [8, 32], strides = [1, 1]} : vector<8x128xf32> to vector<8x32xf32>
    %89 = arith.negf %88 : vector<8x32xf32>
    %90 = math.exp %89 : vector<8x32xf32>
    %cst_28 = arith.constant 1.000000e+00 : f32
    %91 = vector.broadcast %cst_28 : f32 to vector<8x32xf32>
    %92 = arith.addf %91, %90 : vector<8x32xf32>
    %93 = arith.divf %91, %92 : vector<8x32xf32>
    %94 = vector.extract_strided_slice %81 {offsets = [0, 64], sizes = [8, 32], strides = [1, 1]} : vector<8x128xf32> to vector<8x32xf32>
    %95 = math.tanh %94 : vector<8x32xf32>
    %96 = vector.extract_strided_slice %81 {offsets = [0, 96], sizes = [8, 32], strides = [1, 1]} : vector<8x128xf32> to vector<8x32xf32>
    %97 = arith.negf %96 : vector<8x32xf32>
    %98 = math.exp %97 : vector<8x32xf32>
    %cst_29 = arith.constant 1.000000e+00 : f32
    %99 = vector.broadcast %cst_29 : f32 to vector<8x32xf32>
    %100 = arith.addf %99, %98 : vector<8x32xf32>
    %101 = arith.divf %99, %100 : vector<8x32xf32>
    %102 = arith.mulf %93, %41 : vector<8x32xf32>
    %103 = arith.mulf %87, %95 : vector<8x32xf32>
    %104 = arith.addf %102, %103 : vector<8x32xf32>
    %105 = math.tanh %104 : vector<8x32xf32>
    %106 = arith.mulf %101, %105 : vector<8x32xf32>
    %cst_30 = arith.constant dense<0.000000e+00> : vector<8x128xf32>
    %107 = tpu.matmul %70, %6, %cst_30 {dimension_numbers = #tpu.dot_dimension_numbers<[1], [0], [0], [1], [0, 0, 1, 1], [], []>} : vector<8x32xf32>, vector<32x128xf32>, vector<8x128xf32> -> vector<8x128xf32>
    %108 = arith.addf %79, %107 : vector<8x128xf32>
    %109 = vector.extract_strided_slice %108 {offsets = [0, 0], sizes = [8, 32], strides = [1, 1]} : vector<8x128xf32> to vector<8x32xf32>
    %110 = arith.negf %109 : vector<8x32xf32>
    %111 = math.exp %110 : vector<8x32xf32>
    %cst_31 = arith.constant 1.000000e+00 : f32
    %112 = vector.broadcast %cst_31 : f32 to vector<8x32xf32>
    %113 = arith.addf %112, %111 : vector<8x32xf32>
    %114 = arith.divf %112, %113 : vector<8x32xf32>
    %115 = vector.extract_strided_slice %108 {offsets = [0, 32], sizes = [8, 32], strides = [1, 1]} : vector<8x128xf32> to vector<8x32xf32>
    %116 = arith.negf %115 : vector<8x32xf32>
    %117 = math.exp %116 : vector<8x32xf32>
    %cst_32 = arith.constant 1.000000e+00 : f32
    %118 = vector.broadcast %cst_32 : f32 to vector<8x32xf32>
    %119 = arith.addf %118, %117 : vector<8x32xf32>
    %120 = arith.divf %118, %119 : vector<8x32xf32>
    %121 = vector.extract_strided_slice %108 {offsets = [0, 64], sizes = [8, 32], strides = [1, 1]} : vector<8x128xf32> to vector<8x32xf32>
    %122 = math.tanh %121 : vector<8x32xf32>
    %123 = vector.extract_strided_slice %108 {offsets = [0, 96], sizes = [8, 32], strides = [1, 1]} : vector<8x128xf32> to vector<8x32xf32>
    %124 = arith.negf %123 : vector<8x32xf32>
    %125 = math.exp %124 : vector<8x32xf32>
    %cst_33 = arith.constant 1.000000e+00 : f32
    %126 = vector.broadcast %cst_33 : f32 to vector<8x32xf32>
    %127 = arith.addf %126, %125 : vector<8x32xf32>
    %128 = arith.divf %126, %127 : vector<8x32xf32>
    %129 = arith.mulf %120, %68 : vector<8x32xf32>
    %130 = arith.mulf %114, %122 : vector<8x32xf32>
    %131 = arith.addf %129, %130 : vector<8x32xf32>
    %132 = math.tanh %131 : vector<8x32xf32>
    %133 = arith.mulf %128, %132 : vector<8x32xf32>
    %c2_i32 = arith.constant 2 : i32
    %c8_i32_34 = arith.constant 8 : i32
    %134 = arith.muli %c2_i32, %c8_i32_34 : i32
    %135 = tpu.assume_multiple %134, 8 : i32
    %c7_i32_35 = arith.constant 7 : i32
    %136 = arith.subi %c7_i32_35, %c2_i32 : i32
    %c8_i32_36 = arith.constant 8 : i32
    %137 = arith.muli %136, %c8_i32_36 : i32
    %138 = tpu.assume_multiple %137, 8 : i32
    %139 = arith.index_cast %135 : i32 to index
    %c0_37 = arith.constant 0 : index
    %140 = vector.load %arg8[%139, %c0_37] : memref<64x256xf32, #tpu.memory_space<vmem>>, vector<8x128xf32>
    %141 = arith.index_cast %138 : i32 to index
    %c128_38 = arith.constant 128 : index
    %142 = vector.load %arg8[%141, %c128_38] : memref<64x256xf32, #tpu.memory_space<vmem>>, vector<8x128xf32>
    %cst_39 = arith.constant dense<0.000000e+00> : vector<8x128xf32>
    %143 = tpu.matmul %106, %5, %cst_39 {dimension_numbers = #tpu.dot_dimension_numbers<[1], [0], [0], [1], [0, 0, 1, 1], [], []>} : vector<8x32xf32>, vector<32x128xf32>, vector<8x128xf32> -> vector<8x128xf32>
    %144 = arith.addf %140, %143 : vector<8x128xf32>
    %145 = vector.extract_strided_slice %144 {offsets = [0, 0], sizes = [8, 32], strides = [1, 1]} : vector<8x128xf32> to vector<8x32xf32>
    %146 = arith.negf %145 : vector<8x32xf32>
    %147 = math.exp %146 : vector<8x32xf32>
    %cst_40 = arith.constant 1.000000e+00 : f32
    %148 = vector.broadcast %cst_40 : f32 to vector<8x32xf32>
    %149 = arith.addf %148, %147 : vector<8x32xf32>
    %150 = arith.divf %148, %149 : vector<8x32xf32>
    %151 = vector.extract_strided_slice %144 {offsets = [0, 32], sizes = [8, 32], strides = [1, 1]} : vector<8x128xf32> to vector<8x32xf32>
    %152 = arith.negf %151 : vector<8x32xf32>
    %153 = math.exp %152 : vector<8x32xf32>
    %cst_41 = arith.constant 1.000000e+00 : f32
    %154 = vector.broadcast %cst_41 : f32 to vector<8x32xf32>
    %155 = arith.addf %154, %153 : vector<8x32xf32>
    %156 = arith.divf %154, %155 : vector<8x32xf32>
    %157 = vector.extract_strided_slice %144 {offsets = [0, 64], sizes = [8, 32], strides = [1, 1]} : vector<8x128xf32> to vector<8x32xf32>
    %158 = math.tanh %157 : vector<8x32xf32>
    %159 = vector.extract_strided_slice %144 {offsets = [0, 96], sizes = [8, 32], strides = [1, 1]} : vector<8x128xf32> to vector<8x32xf32>
    %160 = arith.negf %159 : vector<8x32xf32>
    %161 = math.exp %160 : vector<8x32xf32>
    %cst_42 = arith.constant 1.000000e+00 : f32
    %162 = vector.broadcast %cst_42 : f32 to vector<8x32xf32>
    %163 = arith.addf %162, %161 : vector<8x32xf32>
    %164 = arith.divf %162, %163 : vector<8x32xf32>
    %165 = arith.mulf %156, %104 : vector<8x32xf32>
    %166 = arith.mulf %150, %158 : vector<8x32xf32>
    %167 = arith.addf %165, %166 : vector<8x32xf32>
    %168 = math.tanh %167 : vector<8x32xf32>
    %169 = arith.mulf %164, %168 : vector<8x32xf32>
    %cst_43 = arith.constant dense<0.000000e+00> : vector<8x128xf32>
    %170 = tpu.matmul %133, %6, %cst_43 {dimension_numbers = #tpu.dot_dimension_numbers<[1], [0], [0], [1], [0, 0, 1, 1], [], []>} : vector<8x32xf32>, vector<32x128xf32>, vector<8x128xf32> -> vector<8x128xf32>
    %171 = arith.addf %142, %170 : vector<8x128xf32>
    %172 = vector.extract_strided_slice %171 {offsets = [0, 0], sizes = [8, 32], strides = [1, 1]} : vector<8x128xf32> to vector<8x32xf32>
    %173 = arith.negf %172 : vector<8x32xf32>
    %174 = math.exp %173 : vector<8x32xf32>
    %cst_44 = arith.constant 1.000000e+00 : f32
    %175 = vector.broadcast %cst_44 : f32 to vector<8x32xf32>
    %176 = arith.addf %175, %174 : vector<8x32xf32>
    %177 = arith.divf %175, %176 : vector<8x32xf32>
    %178 = vector.extract_strided_slice %171 {offsets = [0, 32], sizes = [8, 32], strides = [1, 1]} : vector<8x128xf32> to vector<8x32xf32>
    %179 = arith.negf %178 : vector<8x32xf32>
    %180 = math.exp %179 : vector<8x32xf32>
    %cst_45 = arith.constant 1.000000e+00 : f32
    %181 = vector.broadcast %cst_45 : f32 to vector<8x32xf32>
    %182 = arith.addf %181, %180 : vector<8x32xf32>
    %183 = arith.divf %181, %182 : vector<8x32xf32>
    %184 = vector.extract_strided_slice %171 {offsets = [0, 64], sizes = [8, 32], strides = [1, 1]} : vector<8x128xf32> to vector<8x32xf32>
    %185 = math.tanh %184 : vector<8x32xf32>
    %186 = vector.extract_strided_slice %171 {offsets = [0, 96], sizes = [8, 32], strides = [1, 1]} : vector<8x128xf32> to vector<8x32xf32>
    %187 = arith.negf %186 : vector<8x32xf32>
    %188 = math.exp %187 : vector<8x32xf32>
    %cst_46 = arith.constant 1.000000e+00 : f32
    %189 = vector.broadcast %cst_46 : f32 to vector<8x32xf32>
    %190 = arith.addf %189, %188 : vector<8x32xf32>
    %191 = arith.divf %189, %190 : vector<8x32xf32>
    %192 = arith.mulf %183, %131 : vector<8x32xf32>
    %193 = arith.mulf %177, %185 : vector<8x32xf32>
    %194 = arith.addf %192, %193 : vector<8x32xf32>
    %195 = math.tanh %194 : vector<8x32xf32>
    %196 = arith.mulf %191, %195 : vector<8x32xf32>
    %c3_i32 = arith.constant 3 : i32
    %c8_i32_47 = arith.constant 8 : i32
    %197 = arith.muli %c3_i32, %c8_i32_47 : i32
    %198 = tpu.assume_multiple %197, 8 : i32
    %c7_i32_48 = arith.constant 7 : i32
    %199 = arith.subi %c7_i32_48, %c3_i32 : i32
    %c8_i32_49 = arith.constant 8 : i32
    %200 = arith.muli %199, %c8_i32_49 : i32
    %201 = tpu.assume_multiple %200, 8 : i32
    %202 = arith.index_cast %198 : i32 to index
    %c0_50 = arith.constant 0 : index
    %203 = vector.load %arg8[%202, %c0_50] : memref<64x256xf32, #tpu.memory_space<vmem>>, vector<8x128xf32>
    %204 = arith.index_cast %201 : i32 to index
    %c128_51 = arith.constant 128 : index
    %205 = vector.load %arg8[%204, %c128_51] : memref<64x256xf32, #tpu.memory_space<vmem>>, vector<8x128xf32>
    %cst_52 = arith.constant dense<0.000000e+00> : vector<8x128xf32>
    %206 = tpu.matmul %169, %5, %cst_52 {dimension_numbers = #tpu.dot_dimension_numbers<[1], [0], [0], [1], [0, 0, 1, 1], [], []>} : vector<8x32xf32>, vector<32x128xf32>, vector<8x128xf32> -> vector<8x128xf32>
    %207 = arith.addf %203, %206 : vector<8x128xf32>
    %208 = vector.extract_strided_slice %207 {offsets = [0, 0], sizes = [8, 32], strides = [1, 1]} : vector<8x128xf32> to vector<8x32xf32>
    %209 = arith.negf %208 : vector<8x32xf32>
    %210 = math.exp %209 : vector<8x32xf32>
    %cst_53 = arith.constant 1.000000e+00 : f32
    %211 = vector.broadcast %cst_53 : f32 to vector<8x32xf32>
    %212 = arith.addf %211, %210 : vector<8x32xf32>
    %213 = arith.divf %211, %212 : vector<8x32xf32>
    %214 = vector.extract_strided_slice %207 {offsets = [0, 32], sizes = [8, 32], strides = [1, 1]} : vector<8x128xf32> to vector<8x32xf32>
    %215 = arith.negf %214 : vector<8x32xf32>
    %216 = math.exp %215 : vector<8x32xf32>
    %cst_54 = arith.constant 1.000000e+00 : f32
    %217 = vector.broadcast %cst_54 : f32 to vector<8x32xf32>
    %218 = arith.addf %217, %216 : vector<8x32xf32>
    %219 = arith.divf %217, %218 : vector<8x32xf32>
    %220 = vector.extract_strided_slice %207 {offsets = [0, 64], sizes = [8, 32], strides = [1, 1]} : vector<8x128xf32> to vector<8x32xf32>
    %221 = math.tanh %220 : vector<8x32xf32>
    %222 = vector.extract_strided_slice %207 {offsets = [0, 96], sizes = [8, 32], strides = [1, 1]} : vector<8x128xf32> to vector<8x32xf32>
    %223 = arith.negf %222 : vector<8x32xf32>
    %224 = math.exp %223 : vector<8x32xf32>
    %cst_55 = arith.constant 1.000000e+00 : f32
    %225 = vector.broadcast %cst_55 : f32 to vector<8x32xf32>
    %226 = arith.addf %225, %224 : vector<8x32xf32>
    %227 = arith.divf %225, %226 : vector<8x32xf32>
    %228 = arith.mulf %219, %167 : vector<8x32xf32>
    %229 = arith.mulf %213, %221 : vector<8x32xf32>
    %230 = arith.addf %228, %229 : vector<8x32xf32>
    %231 = math.tanh %230 : vector<8x32xf32>
    %232 = arith.mulf %227, %231 : vector<8x32xf32>
    %cst_56 = arith.constant dense<0.000000e+00> : vector<8x128xf32>
    %233 = tpu.matmul %196, %6, %cst_56 {dimension_numbers = #tpu.dot_dimension_numbers<[1], [0], [0], [1], [0, 0, 1, 1], [], []>} : vector<8x32xf32>, vector<32x128xf32>, vector<8x128xf32> -> vector<8x128xf32>
    %234 = arith.addf %205, %233 : vector<8x128xf32>
    %235 = vector.extract_strided_slice %234 {offsets = [0, 0], sizes = [8, 32], strides = [1, 1]} : vector<8x128xf32> to vector<8x32xf32>
    %236 = arith.negf %235 : vector<8x32xf32>
    %237 = math.exp %236 : vector<8x32xf32>
    %cst_57 = arith.constant 1.000000e+00 : f32
    %238 = vector.broadcast %cst_57 : f32 to vector<8x32xf32>
    %239 = arith.addf %238, %237 : vector<8x32xf32>
    %240 = arith.divf %238, %239 : vector<8x32xf32>
    %241 = vector.extract_strided_slice %234 {offsets = [0, 32], sizes = [8, 32], strides = [1, 1]} : vector<8x128xf32> to vector<8x32xf32>
    %242 = arith.negf %241 : vector<8x32xf32>
    %243 = math.exp %242 : vector<8x32xf32>
    %cst_58 = arith.constant 1.000000e+00 : f32
    %244 = vector.broadcast %cst_58 : f32 to vector<8x32xf32>
    %245 = arith.addf %244, %243 : vector<8x32xf32>
    %246 = arith.divf %244, %245 : vector<8x32xf32>
    %247 = vector.extract_strided_slice %234 {offsets = [0, 64], sizes = [8, 32], strides = [1, 1]} : vector<8x128xf32> to vector<8x32xf32>
    %248 = math.tanh %247 : vector<8x32xf32>
    %249 = vector.extract_strided_slice %234 {offsets = [0, 96], sizes = [8, 32], strides = [1, 1]} : vector<8x128xf32> to vector<8x32xf32>
    %250 = arith.negf %249 : vector<8x32xf32>
    %251 = math.exp %250 : vector<8x32xf32>
    %cst_59 = arith.constant 1.000000e+00 : f32
    %252 = vector.broadcast %cst_59 : f32 to vector<8x32xf32>
    %253 = arith.addf %252, %251 : vector<8x32xf32>
    %254 = arith.divf %252, %253 : vector<8x32xf32>
    %255 = arith.mulf %246, %194 : vector<8x32xf32>
    %256 = arith.mulf %240, %248 : vector<8x32xf32>
    %257 = arith.addf %255, %256 : vector<8x32xf32>
    %258 = math.tanh %257 : vector<8x32xf32>
    %259 = arith.mulf %254, %258 : vector<8x32xf32>
    %c4_i32 = arith.constant 4 : i32
    %c8_i32_60 = arith.constant 8 : i32
    %260 = arith.muli %c4_i32, %c8_i32_60 : i32
    %261 = tpu.assume_multiple %260, 8 : i32
    %c7_i32_61 = arith.constant 7 : i32
    %262 = arith.subi %c7_i32_61, %c4_i32 : i32
    %c8_i32_62 = arith.constant 8 : i32
    %263 = arith.muli %262, %c8_i32_62 : i32
    %264 = tpu.assume_multiple %263, 8 : i32
    %265 = arith.index_cast %261 : i32 to index
    %c0_63 = arith.constant 0 : index
    %266 = vector.load %arg8[%265, %c0_63] : memref<64x256xf32, #tpu.memory_space<vmem>>, vector<8x128xf32>
    %267 = arith.index_cast %264 : i32 to index
    %c128_64 = arith.constant 128 : index
    %268 = vector.load %arg8[%267, %c128_64] : memref<64x256xf32, #tpu.memory_space<vmem>>, vector<8x128xf32>
    %cst_65 = arith.constant dense<0.000000e+00> : vector<8x128xf32>
    %269 = tpu.matmul %232, %5, %cst_65 {dimension_numbers = #tpu.dot_dimension_numbers<[1], [0], [0], [1], [0, 0, 1, 1], [], []>} : vector<8x32xf32>, vector<32x128xf32>, vector<8x128xf32> -> vector<8x128xf32>
    %270 = arith.addf %266, %269 : vector<8x128xf32>
    %271 = vector.extract_strided_slice %270 {offsets = [0, 0], sizes = [8, 32], strides = [1, 1]} : vector<8x128xf32> to vector<8x32xf32>
    %272 = arith.negf %271 : vector<8x32xf32>
    %273 = math.exp %272 : vector<8x32xf32>
    %cst_66 = arith.constant 1.000000e+00 : f32
    %274 = vector.broadcast %cst_66 : f32 to vector<8x32xf32>
    %275 = arith.addf %274, %273 : vector<8x32xf32>
    %276 = arith.divf %274, %275 : vector<8x32xf32>
    %277 = vector.extract_strided_slice %270 {offsets = [0, 32], sizes = [8, 32], strides = [1, 1]} : vector<8x128xf32> to vector<8x32xf32>
    %278 = arith.negf %277 : vector<8x32xf32>
    %279 = math.exp %278 : vector<8x32xf32>
    %cst_67 = arith.constant 1.000000e+00 : f32
    %280 = vector.broadcast %cst_67 : f32 to vector<8x32xf32>
    %281 = arith.addf %280, %279 : vector<8x32xf32>
    %282 = arith.divf %280, %281 : vector<8x32xf32>
    %283 = vector.extract_strided_slice %270 {offsets = [0, 64], sizes = [8, 32], strides = [1, 1]} : vector<8x128xf32> to vector<8x32xf32>
    %284 = math.tanh %283 : vector<8x32xf32>
    %285 = vector.extract_strided_slice %270 {offsets = [0, 96], sizes = [8, 32], strides = [1, 1]} : vector<8x128xf32> to vector<8x32xf32>
    %286 = arith.negf %285 : vector<8x32xf32>
    %287 = math.exp %286 : vector<8x32xf32>
    %cst_68 = arith.constant 1.000000e+00 : f32
    %288 = vector.broadcast %cst_68 : f32 to vector<8x32xf32>
    %289 = arith.addf %288, %287 : vector<8x32xf32>
    %290 = arith.divf %288, %289 : vector<8x32xf32>
    %291 = arith.mulf %282, %230 : vector<8x32xf32>
    %292 = arith.mulf %276, %284 : vector<8x32xf32>
    %293 = arith.addf %291, %292 : vector<8x32xf32>
    %294 = math.tanh %293 : vector<8x32xf32>
    %295 = arith.mulf %290, %294 : vector<8x32xf32>
    %cst_69 = arith.constant dense<0.000000e+00> : vector<8x128xf32>
    %296 = tpu.matmul %259, %6, %cst_69 {dimension_numbers = #tpu.dot_dimension_numbers<[1], [0], [0], [1], [0, 0, 1, 1], [], []>} : vector<8x32xf32>, vector<32x128xf32>, vector<8x128xf32> -> vector<8x128xf32>
    %297 = arith.addf %268, %296 : vector<8x128xf32>
    %298 = vector.extract_strided_slice %297 {offsets = [0, 0], sizes = [8, 32], strides = [1, 1]} : vector<8x128xf32> to vector<8x32xf32>
    %299 = arith.negf %298 : vector<8x32xf32>
    %300 = math.exp %299 : vector<8x32xf32>
    %cst_70 = arith.constant 1.000000e+00 : f32
    %301 = vector.broadcast %cst_70 : f32 to vector<8x32xf32>
    %302 = arith.addf %301, %300 : vector<8x32xf32>
    %303 = arith.divf %301, %302 : vector<8x32xf32>
    %304 = vector.extract_strided_slice %297 {offsets = [0, 32], sizes = [8, 32], strides = [1, 1]} : vector<8x128xf32> to vector<8x32xf32>
    %305 = arith.negf %304 : vector<8x32xf32>
    %306 = math.exp %305 : vector<8x32xf32>
    %cst_71 = arith.constant 1.000000e+00 : f32
    %307 = vector.broadcast %cst_71 : f32 to vector<8x32xf32>
    %308 = arith.addf %307, %306 : vector<8x32xf32>
    %309 = arith.divf %307, %308 : vector<8x32xf32>
    %310 = vector.extract_strided_slice %297 {offsets = [0, 64], sizes = [8, 32], strides = [1, 1]} : vector<8x128xf32> to vector<8x32xf32>
    %311 = math.tanh %310 : vector<8x32xf32>
    %312 = vector.extract_strided_slice %297 {offsets = [0, 96], sizes = [8, 32], strides = [1, 1]} : vector<8x128xf32> to vector<8x32xf32>
    %313 = arith.negf %312 : vector<8x32xf32>
    %314 = math.exp %313 : vector<8x32xf32>
    %cst_72 = arith.constant 1.000000e+00 : f32
    %315 = vector.broadcast %cst_72 : f32 to vector<8x32xf32>
    %316 = arith.addf %315, %314 : vector<8x32xf32>
    %317 = arith.divf %315, %316 : vector<8x32xf32>
    %318 = arith.mulf %309, %257 : vector<8x32xf32>
    %319 = arith.mulf %303, %311 : vector<8x32xf32>
    %320 = arith.addf %318, %319 : vector<8x32xf32>
    %321 = math.tanh %320 : vector<8x32xf32>
    %322 = arith.mulf %317, %321 : vector<8x32xf32>
    %c5_i32 = arith.constant 5 : i32
    %c8_i32_73 = arith.constant 8 : i32
    %323 = arith.muli %c5_i32, %c8_i32_73 : i32
    %324 = tpu.assume_multiple %323, 8 : i32
    %c7_i32_74 = arith.constant 7 : i32
    %325 = arith.subi %c7_i32_74, %c5_i32 : i32
    %c8_i32_75 = arith.constant 8 : i32
    %326 = arith.muli %325, %c8_i32_75 : i32
    %327 = tpu.assume_multiple %326, 8 : i32
    %328 = arith.index_cast %324 : i32 to index
    %c0_76 = arith.constant 0 : index
    %329 = vector.load %arg8[%328, %c0_76] : memref<64x256xf32, #tpu.memory_space<vmem>>, vector<8x128xf32>
    %330 = arith.index_cast %327 : i32 to index
    %c128_77 = arith.constant 128 : index
    %331 = vector.load %arg8[%330, %c128_77] : memref<64x256xf32, #tpu.memory_space<vmem>>, vector<8x128xf32>
    %cst_78 = arith.constant dense<0.000000e+00> : vector<8x128xf32>
    %332 = tpu.matmul %295, %5, %cst_78 {dimension_numbers = #tpu.dot_dimension_numbers<[1], [0], [0], [1], [0, 0, 1, 1], [], []>} : vector<8x32xf32>, vector<32x128xf32>, vector<8x128xf32> -> vector<8x128xf32>
    %333 = arith.addf %329, %332 : vector<8x128xf32>
    %334 = vector.extract_strided_slice %333 {offsets = [0, 0], sizes = [8, 32], strides = [1, 1]} : vector<8x128xf32> to vector<8x32xf32>
    %335 = arith.negf %334 : vector<8x32xf32>
    %336 = math.exp %335 : vector<8x32xf32>
    %cst_79 = arith.constant 1.000000e+00 : f32
    %337 = vector.broadcast %cst_79 : f32 to vector<8x32xf32>
    %338 = arith.addf %337, %336 : vector<8x32xf32>
    %339 = arith.divf %337, %338 : vector<8x32xf32>
    %340 = vector.extract_strided_slice %333 {offsets = [0, 32], sizes = [8, 32], strides = [1, 1]} : vector<8x128xf32> to vector<8x32xf32>
    %341 = arith.negf %340 : vector<8x32xf32>
    %342 = math.exp %341 : vector<8x32xf32>
    %cst_80 = arith.constant 1.000000e+00 : f32
    %343 = vector.broadcast %cst_80 : f32 to vector<8x32xf32>
    %344 = arith.addf %343, %342 : vector<8x32xf32>
    %345 = arith.divf %343, %344 : vector<8x32xf32>
    %346 = vector.extract_strided_slice %333 {offsets = [0, 64], sizes = [8, 32], strides = [1, 1]} : vector<8x128xf32> to vector<8x32xf32>
    %347 = math.tanh %346 : vector<8x32xf32>
    %348 = vector.extract_strided_slice %333 {offsets = [0, 96], sizes = [8, 32], strides = [1, 1]} : vector<8x128xf32> to vector<8x32xf32>
    %349 = arith.negf %348 : vector<8x32xf32>
    %350 = math.exp %349 : vector<8x32xf32>
    %cst_81 = arith.constant 1.000000e+00 : f32
    %351 = vector.broadcast %cst_81 : f32 to vector<8x32xf32>
    %352 = arith.addf %351, %350 : vector<8x32xf32>
    %353 = arith.divf %351, %352 : vector<8x32xf32>
    %354 = arith.mulf %345, %293 : vector<8x32xf32>
    %355 = arith.mulf %339, %347 : vector<8x32xf32>
    %356 = arith.addf %354, %355 : vector<8x32xf32>
    %357 = math.tanh %356 : vector<8x32xf32>
    %358 = arith.mulf %353, %357 : vector<8x32xf32>
    %cst_82 = arith.constant dense<0.000000e+00> : vector<8x128xf32>
    %359 = tpu.matmul %322, %6, %cst_82 {dimension_numbers = #tpu.dot_dimension_numbers<[1], [0], [0], [1], [0, 0, 1, 1], [], []>} : vector<8x32xf32>, vector<32x128xf32>, vector<8x128xf32> -> vector<8x128xf32>
    %360 = arith.addf %331, %359 : vector<8x128xf32>
    %361 = vector.extract_strided_slice %360 {offsets = [0, 0], sizes = [8, 32], strides = [1, 1]} : vector<8x128xf32> to vector<8x32xf32>
    %362 = arith.negf %361 : vector<8x32xf32>
    %363 = math.exp %362 : vector<8x32xf32>
    %cst_83 = arith.constant 1.000000e+00 : f32
    %364 = vector.broadcast %cst_83 : f32 to vector<8x32xf32>
    %365 = arith.addf %364, %363 : vector<8x32xf32>
    %366 = arith.divf %364, %365 : vector<8x32xf32>
    %367 = vector.extract_strided_slice %360 {offsets = [0, 32], sizes = [8, 32], strides = [1, 1]} : vector<8x128xf32> to vector<8x32xf32>
    %368 = arith.negf %367 : vector<8x32xf32>
    %369 = math.exp %368 : vector<8x32xf32>
    %cst_84 = arith.constant 1.000000e+00 : f32
    %370 = vector.broadcast %cst_84 : f32 to vector<8x32xf32>
    %371 = arith.addf %370, %369 : vector<8x32xf32>
    %372 = arith.divf %370, %371 : vector<8x32xf32>
    %373 = vector.extract_strided_slice %360 {offsets = [0, 64], sizes = [8, 32], strides = [1, 1]} : vector<8x128xf32> to vector<8x32xf32>
    %374 = math.tanh %373 : vector<8x32xf32>
    %375 = vector.extract_strided_slice %360 {offsets = [0, 96], sizes = [8, 32], strides = [1, 1]} : vector<8x128xf32> to vector<8x32xf32>
    %376 = arith.negf %375 : vector<8x32xf32>
    %377 = math.exp %376 : vector<8x32xf32>
    %cst_85 = arith.constant 1.000000e+00 : f32
    %378 = vector.broadcast %cst_85 : f32 to vector<8x32xf32>
    %379 = arith.addf %378, %377 : vector<8x32xf32>
    %380 = arith.divf %378, %379 : vector<8x32xf32>
    %381 = arith.mulf %372, %320 : vector<8x32xf32>
    %382 = arith.mulf %366, %374 : vector<8x32xf32>
    %383 = arith.addf %381, %382 : vector<8x32xf32>
    %384 = math.tanh %383 : vector<8x32xf32>
    %385 = arith.mulf %380, %384 : vector<8x32xf32>
    %c6_i32 = arith.constant 6 : i32
    %c8_i32_86 = arith.constant 8 : i32
    %386 = arith.muli %c6_i32, %c8_i32_86 : i32
    %387 = tpu.assume_multiple %386, 8 : i32
    %c7_i32_87 = arith.constant 7 : i32
    %388 = arith.subi %c7_i32_87, %c6_i32 : i32
    %c8_i32_88 = arith.constant 8 : i32
    %389 = arith.muli %388, %c8_i32_88 : i32
    %390 = tpu.assume_multiple %389, 8 : i32
    %391 = arith.index_cast %387 : i32 to index
    %c0_89 = arith.constant 0 : index
    %392 = vector.load %arg8[%391, %c0_89] : memref<64x256xf32, #tpu.memory_space<vmem>>, vector<8x128xf32>
    %393 = arith.index_cast %390 : i32 to index
    %c128_90 = arith.constant 128 : index
    %394 = vector.load %arg8[%393, %c128_90] : memref<64x256xf32, #tpu.memory_space<vmem>>, vector<8x128xf32>
    %cst_91 = arith.constant dense<0.000000e+00> : vector<8x128xf32>
    %395 = tpu.matmul %358, %5, %cst_91 {dimension_numbers = #tpu.dot_dimension_numbers<[1], [0], [0], [1], [0, 0, 1, 1], [], []>} : vector<8x32xf32>, vector<32x128xf32>, vector<8x128xf32> -> vector<8x128xf32>
    %396 = arith.addf %392, %395 : vector<8x128xf32>
    %397 = vector.extract_strided_slice %396 {offsets = [0, 0], sizes = [8, 32], strides = [1, 1]} : vector<8x128xf32> to vector<8x32xf32>
    %398 = arith.negf %397 : vector<8x32xf32>
    %399 = math.exp %398 : vector<8x32xf32>
    %cst_92 = arith.constant 1.000000e+00 : f32
    %400 = vector.broadcast %cst_92 : f32 to vector<8x32xf32>
    %401 = arith.addf %400, %399 : vector<8x32xf32>
    %402 = arith.divf %400, %401 : vector<8x32xf32>
    %403 = vector.extract_strided_slice %396 {offsets = [0, 32], sizes = [8, 32], strides = [1, 1]} : vector<8x128xf32> to vector<8x32xf32>
    %404 = arith.negf %403 : vector<8x32xf32>
    %405 = math.exp %404 : vector<8x32xf32>
    %cst_93 = arith.constant 1.000000e+00 : f32
    %406 = vector.broadcast %cst_93 : f32 to vector<8x32xf32>
    %407 = arith.addf %406, %405 : vector<8x32xf32>
    %408 = arith.divf %406, %407 : vector<8x32xf32>
    %409 = vector.extract_strided_slice %396 {offsets = [0, 64], sizes = [8, 32], strides = [1, 1]} : vector<8x128xf32> to vector<8x32xf32>
    %410 = math.tanh %409 : vector<8x32xf32>
    %411 = vector.extract_strided_slice %396 {offsets = [0, 96], sizes = [8, 32], strides = [1, 1]} : vector<8x128xf32> to vector<8x32xf32>
    %412 = arith.negf %411 : vector<8x32xf32>
    %413 = math.exp %412 : vector<8x32xf32>
    %cst_94 = arith.constant 1.000000e+00 : f32
    %414 = vector.broadcast %cst_94 : f32 to vector<8x32xf32>
    %415 = arith.addf %414, %413 : vector<8x32xf32>
    %416 = arith.divf %414, %415 : vector<8x32xf32>
    %417 = arith.mulf %408, %356 : vector<8x32xf32>
    %418 = arith.mulf %402, %410 : vector<8x32xf32>
    %419 = arith.addf %417, %418 : vector<8x32xf32>
    %420 = math.tanh %419 : vector<8x32xf32>
    %421 = arith.mulf %416, %420 : vector<8x32xf32>
    %cst_95 = arith.constant dense<0.000000e+00> : vector<8x128xf32>
    %422 = tpu.matmul %385, %6, %cst_95 {dimension_numbers = #tpu.dot_dimension_numbers<[1], [0], [0], [1], [0, 0, 1, 1], [], []>} : vector<8x32xf32>, vector<32x128xf32>, vector<8x128xf32> -> vector<8x128xf32>
    %423 = arith.addf %394, %422 : vector<8x128xf32>
    %424 = vector.extract_strided_slice %423 {offsets = [0, 0], sizes = [8, 32], strides = [1, 1]} : vector<8x128xf32> to vector<8x32xf32>
    %425 = arith.negf %424 : vector<8x32xf32>
    %426 = math.exp %425 : vector<8x32xf32>
    %cst_96 = arith.constant 1.000000e+00 : f32
    %427 = vector.broadcast %cst_96 : f32 to vector<8x32xf32>
    %428 = arith.addf %427, %426 : vector<8x32xf32>
    %429 = arith.divf %427, %428 : vector<8x32xf32>
    %430 = vector.extract_strided_slice %423 {offsets = [0, 32], sizes = [8, 32], strides = [1, 1]} : vector<8x128xf32> to vector<8x32xf32>
    %431 = arith.negf %430 : vector<8x32xf32>
    %432 = math.exp %431 : vector<8x32xf32>
    %cst_97 = arith.constant 1.000000e+00 : f32
    %433 = vector.broadcast %cst_97 : f32 to vector<8x32xf32>
    %434 = arith.addf %433, %432 : vector<8x32xf32>
    %435 = arith.divf %433, %434 : vector<8x32xf32>
    %436 = vector.extract_strided_slice %423 {offsets = [0, 64], sizes = [8, 32], strides = [1, 1]} : vector<8x128xf32> to vector<8x32xf32>
    %437 = math.tanh %436 : vector<8x32xf32>
    %438 = vector.extract_strided_slice %423 {offsets = [0, 96], sizes = [8, 32], strides = [1, 1]} : vector<8x128xf32> to vector<8x32xf32>
    %439 = arith.negf %438 : vector<8x32xf32>
    %440 = math.exp %439 : vector<8x32xf32>
    %cst_98 = arith.constant 1.000000e+00 : f32
    %441 = vector.broadcast %cst_98 : f32 to vector<8x32xf32>
    %442 = arith.addf %441, %440 : vector<8x32xf32>
    %443 = arith.divf %441, %442 : vector<8x32xf32>
    %444 = arith.mulf %435, %383 : vector<8x32xf32>
    %445 = arith.mulf %429, %437 : vector<8x32xf32>
    %446 = arith.addf %444, %445 : vector<8x32xf32>
    %447 = math.tanh %446 : vector<8x32xf32>
    %448 = arith.mulf %443, %447 : vector<8x32xf32>
    %c7_i32_99 = arith.constant 7 : i32
    %c8_i32_100 = arith.constant 8 : i32
    %449 = arith.muli %c7_i32_99, %c8_i32_100 : i32
    %450 = tpu.assume_multiple %449, 8 : i32
    %c7_i32_101 = arith.constant 7 : i32
    %451 = arith.subi %c7_i32_101, %c7_i32_99 : i32
    %c8_i32_102 = arith.constant 8 : i32
    %452 = arith.muli %451, %c8_i32_102 : i32
    %453 = tpu.assume_multiple %452, 8 : i32
    %454 = arith.index_cast %450 : i32 to index
    %c0_103 = arith.constant 0 : index
    %455 = vector.load %arg8[%454, %c0_103] : memref<64x256xf32, #tpu.memory_space<vmem>>, vector<8x128xf32>
    %456 = arith.index_cast %453 : i32 to index
    %c128_104 = arith.constant 128 : index
    %457 = vector.load %arg8[%456, %c128_104] : memref<64x256xf32, #tpu.memory_space<vmem>>, vector<8x128xf32>
    %cst_105 = arith.constant dense<0.000000e+00> : vector<8x128xf32>
    %458 = tpu.matmul %421, %5, %cst_105 {dimension_numbers = #tpu.dot_dimension_numbers<[1], [0], [0], [1], [0, 0, 1, 1], [], []>} : vector<8x32xf32>, vector<32x128xf32>, vector<8x128xf32> -> vector<8x128xf32>
    %459 = arith.addf %455, %458 : vector<8x128xf32>
    %460 = vector.extract_strided_slice %459 {offsets = [0, 0], sizes = [8, 32], strides = [1, 1]} : vector<8x128xf32> to vector<8x32xf32>
    %461 = arith.negf %460 : vector<8x32xf32>
    %462 = math.exp %461 : vector<8x32xf32>
    %cst_106 = arith.constant 1.000000e+00 : f32
    %463 = vector.broadcast %cst_106 : f32 to vector<8x32xf32>
    %464 = arith.addf %463, %462 : vector<8x32xf32>
    %465 = arith.divf %463, %464 : vector<8x32xf32>
    %466 = vector.extract_strided_slice %459 {offsets = [0, 32], sizes = [8, 32], strides = [1, 1]} : vector<8x128xf32> to vector<8x32xf32>
    %467 = arith.negf %466 : vector<8x32xf32>
    %468 = math.exp %467 : vector<8x32xf32>
    %cst_107 = arith.constant 1.000000e+00 : f32
    %469 = vector.broadcast %cst_107 : f32 to vector<8x32xf32>
    %470 = arith.addf %469, %468 : vector<8x32xf32>
    %471 = arith.divf %469, %470 : vector<8x32xf32>
    %472 = vector.extract_strided_slice %459 {offsets = [0, 64], sizes = [8, 32], strides = [1, 1]} : vector<8x128xf32> to vector<8x32xf32>
    %473 = math.tanh %472 : vector<8x32xf32>
    %474 = vector.extract_strided_slice %459 {offsets = [0, 96], sizes = [8, 32], strides = [1, 1]} : vector<8x128xf32> to vector<8x32xf32>
    %475 = arith.negf %474 : vector<8x32xf32>
    %476 = math.exp %475 : vector<8x32xf32>
    %cst_108 = arith.constant 1.000000e+00 : f32
    %477 = vector.broadcast %cst_108 : f32 to vector<8x32xf32>
    %478 = arith.addf %477, %476 : vector<8x32xf32>
    %479 = arith.divf %477, %478 : vector<8x32xf32>
    %480 = arith.mulf %471, %419 : vector<8x32xf32>
    %481 = arith.mulf %465, %473 : vector<8x32xf32>
    %482 = arith.addf %480, %481 : vector<8x32xf32>
    %483 = math.tanh %482 : vector<8x32xf32>
    %484 = arith.mulf %479, %483 : vector<8x32xf32>
    %cst_109 = arith.constant dense<0.000000e+00> : vector<8x128xf32>
    %485 = tpu.matmul %448, %6, %cst_109 {dimension_numbers = #tpu.dot_dimension_numbers<[1], [0], [0], [1], [0, 0, 1, 1], [], []>} : vector<8x32xf32>, vector<32x128xf32>, vector<8x128xf32> -> vector<8x128xf32>
    %486 = arith.addf %457, %485 : vector<8x128xf32>
    %487 = vector.extract_strided_slice %486 {offsets = [0, 0], sizes = [8, 32], strides = [1, 1]} : vector<8x128xf32> to vector<8x32xf32>
    %488 = arith.negf %487 : vector<8x32xf32>
    %489 = math.exp %488 : vector<8x32xf32>
    %cst_110 = arith.constant 1.000000e+00 : f32
    %490 = vector.broadcast %cst_110 : f32 to vector<8x32xf32>
    %491 = arith.addf %490, %489 : vector<8x32xf32>
    %492 = arith.divf %490, %491 : vector<8x32xf32>
    %493 = vector.extract_strided_slice %486 {offsets = [0, 32], sizes = [8, 32], strides = [1, 1]} : vector<8x128xf32> to vector<8x32xf32>
    %494 = arith.negf %493 : vector<8x32xf32>
    %495 = math.exp %494 : vector<8x32xf32>
    %cst_111 = arith.constant 1.000000e+00 : f32
    %496 = vector.broadcast %cst_111 : f32 to vector<8x32xf32>
    %497 = arith.addf %496, %495 : vector<8x32xf32>
    %498 = arith.divf %496, %497 : vector<8x32xf32>
    %499 = vector.extract_strided_slice %486 {offsets = [0, 64], sizes = [8, 32], strides = [1, 1]} : vector<8x128xf32> to vector<8x32xf32>
    %500 = math.tanh %499 : vector<8x32xf32>
    %501 = vector.extract_strided_slice %486 {offsets = [0, 96], sizes = [8, 32], strides = [1, 1]} : vector<8x128xf32> to vector<8x32xf32>
    %502 = arith.negf %501 : vector<8x32xf32>
    %503 = math.exp %502 : vector<8x32xf32>
    %cst_112 = arith.constant 1.000000e+00 : f32
    %504 = vector.broadcast %cst_112 : f32 to vector<8x32xf32>
    %505 = arith.addf %504, %503 : vector<8x32xf32>
    %506 = arith.divf %504, %505 : vector<8x32xf32>
    %507 = arith.mulf %498, %446 : vector<8x32xf32>
    %508 = arith.mulf %492, %500 : vector<8x32xf32>
    %509 = arith.addf %507, %508 : vector<8x32xf32>
    %510 = math.tanh %509 : vector<8x32xf32>
    %511 = arith.mulf %506, %510 : vector<8x32xf32>
    %c8_i32_113 = arith.constant 8 : i32
    %c0_114 = arith.constant 0 : index
    %c0_115 = arith.constant 0 : index
    %512 = vector.load %arg5[%c0_114, %c0_115] : memref<64x128xf32, #tpu.memory_space<vmem>>, vector<32x128xf32>
    %cst_116 = arith.constant dense<0.000000e+00> : vector<8x128xf32>
    %513 = tpu.matmul %484, %512, %cst_116 {dimension_numbers = #tpu.dot_dimension_numbers<[1], [0], [0], [1], [0, 0, 1, 1], [], []>} : vector<8x32xf32>, vector<32x128xf32>, vector<8x128xf32> -> vector<8x128xf32>
    %c32 = arith.constant 32 : index
    %c0_117 = arith.constant 0 : index
    %514 = vector.load %arg5[%c32, %c0_117] : memref<64x128xf32, #tpu.memory_space<vmem>>, vector<32x128xf32>
    %cst_118 = arith.constant dense<0.000000e+00> : vector<8x128xf32>
    %515 = tpu.matmul %511, %514, %cst_118 {dimension_numbers = #tpu.dot_dimension_numbers<[1], [0], [0], [1], [0, 0, 1, 1], [], []>} : vector<8x32xf32>, vector<32x128xf32>, vector<8x128xf32> -> vector<8x128xf32>
    %516 = arith.addf %513, %515 : vector<8x128xf32>
    %c0_119 = arith.constant 0 : index
    %c0_120 = arith.constant 0 : index
    %517 = vector.load %arg6[%c0_119, %c0_120] : memref<1x128xf32, #tpu.memory_space<vmem>>, vector<1x128xf32>
    %518 = vector.broadcast %517 : vector<1x128xf32> to vector<8x128xf32>
    %519 = arith.addf %516, %518 : vector<8x128xf32>
    %c0_121 = arith.constant 0 : index
    %c0_122 = arith.constant 0 : index
    %520 = vector.load %arg7[%c0_121, %c0_122] : memref<8x128xf32, #tpu.memory_space<vmem>>, vector<8x128xf32>
    tpu.vector_store %arg7[%c0_121, %c0_122], %519 {strides = array<i32>} : memref<8x128xf32, #tpu.memory_space<vmem>>, vector<8x128xf32>,
    return
  }
  func.func @transform_0(%arg0: i32) -> (i32, i32, i32) {
    %c0_i32 = arith.constant 0 : i32
    %c0_i32_0 = arith.constant 0 : i32
    %c0_i32_1 = arith.constant 0 : i32
    return %arg0, %c0_i32, %c0_i32_0 : i32, i32, i32
  }
  func.func @transform_1(%arg0: i32) -> (i32, i32) {
    %c0_i32 = arith.constant 0 : i32
    %c0_i32_0 = arith.constant 0 : i32
    %c0_i32_1 = arith.constant 0 : i32
    return %c0_i32, %c0_i32_0 : i32, i32
  }
  func.func @transform_2(%arg0: i32) -> (i32, i32) {
    %c0_i32 = arith.constant 0 : i32
    %c0_i32_0 = arith.constant 0 : i32
    %c0_i32_1 = arith.constant 0 : i32
    return %c0_i32, %c0_i32_0 : i32, i32
  }
  func.func @transform_3(%arg0: i32) -> (i32, i32) {
    %c0_i32 = arith.constant 0 : i32
    %c0_i32_0 = arith.constant 0 : i32
    %c0_i32_1 = arith.constant 0 : i32
    return %c0_i32, %c0_i32_0 : i32, i32
  }
  func.func @transform_4(%arg0: i32) -> (i32, i32) {
    %c0_i32 = arith.constant 0 : i32
    %c0_i32_0 = arith.constant 0 : i32
    %c0_i32_1 = arith.constant 0 : i32
    return %c0_i32, %c0_i32_0 : i32, i32
  }
  func.func @transform_5(%arg0: i32) -> (i32, i32) {
    %c0_i32 = arith.constant 0 : i32
    %c0_i32_0 = arith.constant 0 : i32
    %c0_i32_1 = arith.constant 0 : i32
    return %c0_i32, %c0_i32_0 : i32, i32
  }
  func.func @transform_6(%arg0: i32) -> (i32, i32) {
    %c0_i32 = arith.constant 0 : i32
    %c0_i32_0 = arith.constant 0 : i32
    return %arg0, %c0_i32 : i32, i32
  }
}

</mosaic_0001>

<llo_original>
// kernel: tpu_custom_call.1
$region0: #{tpu_custom_call.1}
  #allocation0 [shape = 'u32[]', space=smem, size = 0x4, offset = 0x4, fixed_abs, tag = 'smem constant byte address 0x4 - core index']
  #allocation1 [shape = 'u32[144,128]{1,0:T(1,128)}', space=vmem, size = 0x12000, scoped, tag = 'internal scratch']
  #allocation2 [shape = 'f32[64,256]{1,0:T(8,128)}', space=vmem, size = 0x10000, scoped, tag = 'scratch operand']
  %s0 = inlined_call_operand.vmem [shape: f32[1,64,17], index: 0, kind: input, shape index: {}]
  %s1 = inlined_call_operand.hbm [shape: f32[17,256], index: 1, kind: input, shape index: {}]
  %s2 = inlined_call_operand.vmem [shape: f32[32,128], index: 2, kind: input, shape index: {}]
  %s3 = inlined_call_operand.hbm [shape: f32[32,128], index: 3, kind: input, shape index: {}]
  %s4 = inlined_call_operand.vmem [shape: f32[64,128], index: 4, kind: input, shape index: {}]
  %s5 = inlined_call_operand.vmem [shape: f32[1,128], index: 5, kind: input, shape index: {}]
  %s6 = inlined_call_operand.hbm [shape: f32[8,128], index: 6, kind: output, shape index: {}]
  %s7 = sld [smem:[#allocation0]]
  $region42: #{tpu_custom_call.1} parent=0
    _
  %s9 = ssub.s32 1, %s7
  %s10 = scalar_select 0, %s9, %s7
  $region1: #{tpu_custom_call.1} parent=0
    #allocation3 [shape = 'u8[24576]{0}', space=vmem, size = 0x6000, scoped, tag = 'input window, operand 1, single buffered']
    #allocation4 [shape = 's32[1]{0}', space=sflag, size = 0x4, scoped, tag = 'scoped memory for tpu_custom_call.1']
    #allocation5 [shape = 's32[1]{0}', space=sflag, size = 0x4, scoped, tag = 'scoped memory for tpu_custom_call.1']
    #allocation6 [shape = 'u8[16384]{0}', space=vmem, size = 0x4000, scoped, tag = 'input window, operand 3, single buffered']
    #allocation7 [shape = 's32[1]{0}', space=sflag, size = 0x4, scoped, tag = 'scoped memory for tpu_custom_call.1']
    #allocation8 [shape = 'u8[4096]{0}', space=vmem, size = 0x1000, scoped, tag = 'output window, operand 0, single buffered']
    %11 = vsyncpa [#allocation4], 0
    %12 = vsyncpa [#allocation7], 0
    %13 = vsyncpa [#allocation5], 0
    // Predicated region
    $region2: #{tpu_custom_call.1} parent=1 // pred_check
      _
    $region3: #{tpu_custom_call.1} parent=1 // pred_check_branch
      %15 = sbr.rel (0) target = $region5
    $region4: #{tpu_custom_call.1} parent=1 // pred_region
      _
    $region5: #{tpu_custom_call.1} parent=1 // pred_fallthru
      _
    // Predicated region
    $region6: #{tpu_custom_call.1} parent=1 // pred_check
      _
    $region7: #{tpu_custom_call.1} parent=1 // pred_check_branch
      %17 = sbr.rel (0) target = $region9
    $region8: #{tpu_custom_call.1} parent=1 // pred_region
      %s19 = ssub.s32 768, 768
      %20 = vsyncadd [#allocation4], %s19
      %s21 = sshll.u32 [#allocation3], 4
      %s22 = int_to_ptr.vmem [resolvable:$true] %s21
      %27 = dma.hbm_to_vmem [thread:$0]  %s1, 768, %s22, [#allocation4], 256, 256, 16
    $region9: #{tpu_custom_call.1} parent=1 // pred_fallthru
      _
    // Predicated region
    $region10: #{tpu_custom_call.1} parent=1 // pred_check
      _
    $region11: #{tpu_custom_call.1} parent=1 // pred_check_branch
      %29 = sbr.rel (0) target = $region13
    $region12: #{tpu_custom_call.1} parent=1 // pred_region
      _
    $region13: #{tpu_custom_call.1} parent=1 // pred_fallthru
      _
    // Predicated region
    $region14: #{tpu_custom_call.1} parent=1 // pred_check
      _
    $region15: #{tpu_custom_call.1} parent=1 // pred_check_branch
      %31 = sbr.rel (0) target = $region17
    $region16: #{tpu_custom_call.1} parent=1 // pred_region
      %s33 = ssub.s32 512, 512
      %34 = vsyncadd [#allocation7], %s33
      %s35 = sshll.u32 [#allocation6], 4
      %s36 = int_to_ptr.vmem [resolvable:$true] %s35
      %41 = dma.hbm_to_vmem [thread:$0]  %s3, 512, %s36, [#allocation7], 128, 128, 8
    $region17: #{tpu_custom_call.1} parent=1 // pred_fallthru
      _
    // Predicated region
    $region18: #{tpu_custom_call.1} parent=1 // pred_check
      _
    $region19: #{tpu_custom_call.1} parent=1 // pred_check_branch
      %43 = sbr.rel (0) target = $region21
    $region20: #{tpu_custom_call.1} parent=1 // pred_region
      _
    $region21: #{tpu_custom_call.1} parent=1 // pred_fallthru
      _
    // Predicated region
    $region22: #{tpu_custom_call.1} parent=1 // pred_check
      _
    $region23: #{tpu_custom_call.1} parent=1 // pred_check_branch
      %45 = sbr.rel (0) target = $region25
    $region24: #{tpu_custom_call.1} parent=1 // pred_region
      _
    $region25: #{tpu_custom_call.1} parent=1 // pred_fallthru
      _
    // Predicated region
    $region26: #{tpu_custom_call.1} parent=1 // pred_check
      _
    $region27: #{tpu_custom_call.1} parent=1 // pred_check_branch
      %47 = sbr.rel (0) target = $region29
    $region28: #{tpu_custom_call.1} parent=1 // pred_region
      %48 = dma.done [#allocation4], 768
    $region29: #{tpu_custom_call.1} parent=1 // pred_fallthru
      _
    // Predicated region
    $region30: #{tpu_custom_call.1} parent=1 // pred_check
      _
    $region31: #{tpu_custom_call.1} parent=1 // pred_check_branch
      %50 = sbr.rel (0) target = $region33
    $region32: #{tpu_custom_call.1} parent=1 // pred_region
      %51 = dma.done [#allocation7], 512
    $region33: #{tpu_custom_call.1} parent=1 // pred_fallthru
      _
    %v52 = vld [vmem:[%s0] sm:$0xff]
    %v53 = vld [vmem:[%s0 + $0x8] sm:$0xff]
    %v54 = vld [vmem:[%s0 + $0x10] sm:$0xff]
    %v55 = vld [vmem:[%s0 + $0x18] sm:$0xff]
    %v56 = vld [vmem:[%s0 + $0x20] sm:$0xff]
    %v57 = vld [vmem:[%s0 + $0x28] sm:$0xff]
    %v58 = vld [vmem:[%s0 + $0x30] sm:$0xff]
    %v59 = vld [vmem:[%s0 + $0x38] sm:$0xff]
    %v60 = vld [vmem:[#allocation3] sm:$0xff]
    %v61 = vld [vmem:[#allocation3 + $0x8] sm:$0xff]
    %v62 = vld [vmem:[#allocation3 + $0x10] sm:$0xff]
    %v63 = vld [vmem:[#allocation3 + $0x18] sm:$0xff]
    %v64 = vld [vmem:[#allocation3 + $0x20] sm:$0x1]
    %v65 = vld [vmem:[#allocation3 + $0x28] sm:$0x1]
    %vm66 = vcmask 138240
    %v68 = vsel %vm66, %v52, 0
    %v71 = vsel %vm66, %v53, 0
    %v74 = vsel %vm66, %v54, 0
    %v77 = vsel %vm66, %v55, 0
    %v80 = vsel %vm66, %v56, 0
    %v83 = vsel %vm66, %v57, 0
    %v86 = vsel %vm66, %v58, 0
    %v89 = vsel %vm66, %v59, 0
    %vm91 = vcmask 1040384
    %v93 = vsel %vm91, %v64, 0
    %v96 = vsel %vm91, %v65, 0
    %98 = vmatprep.subr.mxu0 %v61
    %99 = vmatpush1.msra.mxu0 %v60
    %100 = vmatprep.subr.mxu0 %v63
    %101 = vmatpush1.msra.mxu0 %v62
    %102 = vmatprep.subr.mxu0 %v96
    %103 = vmatpush1.msra.mxu0 %v93
    %104 = vmatprep.subr.mxu0 0.0
    %105 = vmatpush1.msra.mxu0 0.0
    %106 = vmatprep.subr.mxu0 0.0
    %107 = vmatpush1.msra.mxu0 0.0
    %108 = vmatprep.subr.mxu0 0.0
    %109 = vmatpush1.msra.mxu0 0.0
    %110 = vmatprep.subr.mxu0 0.0
    %111 = vmatpush1.msra.mxu0 0.0
    %112 = vmatprep.subr.mxu0 0.0
    %113 = vmatpush1.msra.mxu0 0.0
    %114 = vmatprep.subr.mxu0 0.0
    %115 = vmatpush1.msra.mxu0 0.0
    %116 = vmatprep.subr.mxu0 0.0
    %117 = vmatpush1.msra.mxu0 0.0
    %118 = vmatprep.subr.mxu0 0.0
    %119 = vmatpush1.msra.mxu0 0.0
    %120 = vmatprep.subr.mxu0 0.0
    %121 = vmatpush1.msra.mxu0 0.0
    %122 = vmatprep.subr.mxu0 0.0
    %123 = vmatpush1.msra.mxu0 0.0
    %124 = vmatprep.subr.mxu0 0.0
    %125 = vmatpush1.msra.mxu0 0.0
    %126 = vmatprep.subr.mxu0 0.0
    %127 = vmatpush1.msra.mxu0 0.0
    %128 = vmatprep.subr.mxu0 0.0
    %129 = vmatpush1.msra.mxu0 0.0
    %130 = vmatprep.subr.mxu0 0.0
    %131 = vmatpush1.msra.mxu0 0.0
    %132 = vmatprep.subr.mxu0 0.0
    %133 = vmatpush1.msra.mxu0 0.0
    %134 = vmatprep.subr.mxu0 0.0
    %135 = vmatpush1.msra.mxu0 0.0
    %136 = vmatprep.subr.mxu0 0.0
    %137 = vmatpush1.msra.mxu0 0.0
    %138 = vmatprep.subr.mxu0 0.0
    %139 = vmatpush1.msra.mxu0 0.0
    %140 = vmatprep.subr.mxu0 0.0
    %141 = vmatpush1.msra.mxu0 0.0
    %142 = vmatprep.subr.mxu0 0.0
    %143 = vmatpush1.msra.mxu0 0.0
    %144 = vmatprep.subr.mxu0 0.0
    %145 = vmatpush1.msra.mxu0 0.0
    %146 = vmatprep.subr.mxu0 0.0
    %147 = vmatpush1.msra.mxu0 0.0
    %148 = vmatprep.subr.mxu0 0.0
    %149 = vmatpush1.msra.mxu0 0.0
    %150 = vmatprep.subr.mxu0 0.0
    %151 = vmatpush1.msra.mxu0 0.0
    %152 = vmatprep.subr.mxu0 0.0
    %153 = vmatpush1.msra.mxu0 0.0
    %154 = vmatprep.subr.mxu0 0.0
    %155 = vmatpush1.msra.mxu0 0.0
    %156 = vmatprep.subr.mxu0 0.0
    %157 = vmatpush1.msra.mxu0 0.0
    %158 = vmatprep.subr.mxu0 0.0
    %159 = vmatpush1.msra.mxu0 0.0
    %160 = vmatprep.subr.mxu0 0.0
    %161 = vmatpush1.msra.mxu0 0.0
    %162 = vmatprep.mubr.f32.mxu0 0.0
    %163 = vmatmul.mubr.f32.gmra.mrb[0].mxu0 %v68
    %v164 = vpop.f32.mrb[0].mxu0
    %v165 = vadd.f32 0.0, %v164
    %v166 = vpop.f32.mrb[0].mxu0
    %v167 = vadd.f32 0.0, %v166
    %168 = vmatprep.mubr.f32.mxu0 0.0
    %169 = vmatmul.mubr.f32.gmra.mrb[0].mxu0 %v71
    %v170 = vpop.f32.mrb[0].mxu0
    %v171 = vadd.f32 0.0, %v170
    %v172 = vpop.f32.mrb[0].mxu0
    %v173 = vadd.f32 0.0, %v172
    %174 = vmatprep.mubr.f32.mxu0 0.0
    %175 = vmatmul.mubr.f32.gmra.mrb[0].mxu0 %v74
    %v176 = vpop.f32.mrb[0].mxu0
    %v177 = vadd.f32 0.0, %v176
    %v178 = vpop.f32.mrb[0].mxu0
    %v179 = vadd.f32 0.0, %v178
    %180 = vmatprep.mubr.f32.mxu0 0.0
    %181 = vmatmul.mubr.f32.gmra.mrb[0].mxu0 %v77
    %v182 = vpop.f32.mrb[0].mxu0
    %v183 = vadd.f32 0.0, %v182
    %v184 = vpop.f32.mrb[0].mxu0
    %v185 = vadd.f32 0.0, %v184
    %186 = vmatprep.mubr.f32.mxu0 0.0
    %187 = vmatmul.mubr.f32.gmra.mrb[0].mxu0 %v80
    %v188 = vpop.f32.mrb[0].mxu0
    %v189 = vadd.f32 0.0, %v188
    %v190 = vpop.f32.mrb[0].mxu0
    %v191 = vadd.f32 0.0, %v190
    %192 = vmatprep.mubr.f32.mxu0 0.0
    %193 = vmatmul.mubr.f32.gmra.mrb[0].mxu0 %v83
    %v194 = vpop.f32.mrb[0].mxu0
    %v195 = vadd.f32 0.0, %v194
    %v196 = vpop.f32.mrb[0].mxu0
    %v197 = vadd.f32 0.0, %v196
    %198 = vmatprep.mubr.f32.mxu0 0.0
    %199 = vmatmul.mubr.f32.gmra.mrb[0].mxu0 %v86
    %v200 = vpop.f32.mrb[0].mxu0
    %v201 = vadd.f32 0.0, %v200
    %v202 = vpop.f32.mrb[0].mxu0
    %v203 = vadd.f32 0.0, %v202
    %204 = vmatprep.mubr.f32.mxu0 0.0
    %205 = vmatmul.mubr.f32.gmra.mrb[0].mxu0 %v89
    %v206 = vpop.f32.mrb[0].mxu0
    %v207 = vadd.f32 0.0, %v206
    %v208 = vpop.f32.mrb[0].mxu0
    %v209 = vadd.f32 0.0, %v208
    %210 = vdwg.mxu0
    %211 = vst [vmem:[#allocation2] sm:$0xff] %v165
    %212 = vst [vmem:[#allocation2 + $0x8] sm:$0xff] %v167
    %213 = vst [vmem:[#allocation2 + $0x10] sm:$0xff] %v171
    %214 = vst [vmem:[#allocation2 + $0x18] sm:$0xff] %v173
    %215 = vst [vmem:[#allocation2 + $0x20] sm:$0xff] %v177
    %216 = vst [vmem:[#allocation2 + $0x28] sm:$0xff] %v179
    %217 = vst [vmem:[#allocation2 + $0x30] sm:$0xff] %v183
    %218 = vst [vmem:[#allocation2 + $0x38] sm:$0xff] %v185
    %219 = vst [vmem:[#allocation2 + $0x40] sm:$0xff] %v189
    %220 = vst [vmem:[#allocation2 + $0x48] sm:$0xff] %v191
    %221 = vst [vmem:[#allocation2 + $0x50] sm:$0xff] %v195
    %222 = vst [vmem:[#allocation2 + $0x58] sm:$0xff] %v197
    %223 = vst [vmem:[#allocation2 + $0x60] sm:$0xff] %v201
    %224 = vst [vmem:[#allocation2 + $0x68] sm:$0xff] %v203
    %225 = vst [vmem:[#allocation2 + $0x70] sm:$0xff] %v207
    %226 = vst [vmem:[#allocation2 + $0x78] sm:$0xff] %v209
    %v227 = vld [vmem:[%s2] sm:$0xff]
    %v228 = vld [vmem:[%s2 + $0x8] sm:$0xff]
    %v229 = vld [vmem:[%s2 + $0x10] sm:$0xff]
    %v230 = vld [vmem:[%s2 + $0x18] sm:$0xff]
    %v231 = vld [vmem:[#allocation6] sm:$0xff]
    %v232 = vld [vmem:[#allocation6 + $0x8] sm:$0xff]
    %v233 = vld [vmem:[#allocation6 + $0x10] sm:$0xff]
    %v234 = vld [vmem:[#allocation6 + $0x18] sm:$0xff]
    %s235 = smul.u32 0, 2
    %s236 = smul.addr %s235, 8
    %s237 = scalar_lea.vmem [#allocation2], %s236
    %v238 = vld [vmem:[%s237] sm:$0xff]
    %s239 = smul.u32 7, 2
    %s240 = smul.addr %s239, 8
    %s241 = scalar_lea.vmem [#allocation2], %s240
    %v242 = vld [vmem:[%s241 + $0x8] sm:$0xff]
    %vm243 = vcmask 261120
    %v245 = vsel %vm243, 0.0, 0
    %247 = vmatprep.subr.mxu0 0.0
    %248 = vmatpush1.msra.mxu0 %v227
    %249 = vmatprep.subr.mxu0 0.0
    %250 = vmatpush1.msra.mxu0 %v228
    %251 = vmatprep.subr.mxu0 0.0
    %252 = vmatpush1.msra.mxu0 %v229
    %253 = vmatprep.subr.mxu0 0.0
    %254 = vmatpush1.msra.mxu0 %v230
    %255 = vmatprep.subr.mxu0 0.0
    %256 = vmatpush1.msra.mxu0 0.0
    %257 = vmatprep.subr.mxu0 0.0
    %258 = vmatpush1.msra.mxu0 0.0
    %259 = vmatprep.subr.mxu0 0.0
    %260 = vmatpush1.msra.mxu0 0.0
    %261 = vmatprep.subr.mxu0 0.0
    %262 = vmatpush1.msra.mxu0 0.0
    %263 = vmatprep.subr.mxu0 0.0
    %264 = vmatpush1.msra.mxu0 0.0
    %265 = vmatprep.subr.mxu0 0.0
    %266 = vmatpush1.msra.mxu0 0.0
    %267 = vmatprep.subr.mxu0 0.0
    %268 = vmatpush1.msra.mxu0 0.0
    %269 = vmatprep.subr.mxu0 0.0
    %270 = vmatpush1.msra.mxu0 0.0
    %271 = vmatprep.subr.mxu0 0.0
    %272 = vmatpush1.msra.mxu0 0.0
    %273 = vmatprep.subr.mxu0 0.0
    %274 = vmatpush1.msra.mxu0 0.0
    %275 = vmatprep.subr.mxu0 0.0
    %276 = vmatpush1.msra.mxu0 0.0
    %277 = vmatprep.subr.mxu0 0.0
    %278 = vmatpush1.msra.mxu0 0.0
    %279 = vmatprep.subr.mxu0 0.0
    %280 = vmatpush1.msra.mxu0 0.0
    %281 = vmatprep.subr.mxu0 0.0
    %282 = vmatpush1.msra.mxu0 0.0
    %283 = vmatprep.subr.mxu0 0.0
    %284 = vmatpush1.msra.mxu0 0.0
    %285 = vmatprep.subr.mxu0 0.0
    %286 = vmatpush1.msra.mxu0 0.0
    %287 = vmatprep.subr.mxu0 0.0
    %288 = vmatpush1.msra.mxu0 0.0
    %289 = vmatprep.subr.mxu0 0.0
    %290 = vmatpush1.msra.mxu0 0.0
    %291 = vmatprep.subr.mxu0 0.0
    %292 = vmatpush1.msra.mxu0 0.0
    %293 = vmatprep.subr.mxu0 0.0
    %294 = vmatpush1.msra.mxu0 0.0
    %295 = vmatprep.subr.mxu0 0.0
    %296 = vmatpush1.msra.mxu0 0.0
    %297 = vmatprep.subr.mxu0 0.0
    %298 = vmatpush1.msra.mxu0 0.0
    %299 = vmatprep.subr.mxu0 0.0
    %300 = vmatpush1.msra.mxu0 0.0
    %301 = vmatprep.subr.mxu0 0.0
    %302 = vmatpush1.msra.mxu0 0.0
    %303 = vmatprep.subr.mxu0 0.0
    %304 = vmatpush1.msra.mxu0 0.0
    %305 = vmatprep.subr.mxu0 0.0
    %306 = vmatpush1.msra.mxu0 0.0
    %307 = vmatprep.subr.mxu0 0.0
    %308 = vmatpush1.msra.mxu0 0.0
    %309 = vmatprep.subr.mxu0 0.0
    %310 = vmatpush1.msra.mxu0 0.0
    %311 = vmatprep.mubr.f32.mxu0 0.0
    %312 = vmatmul.mubr.f32.gmra.mrb[0].mxu0 %v245
    %v313 = vpop.f32.mrb[0].mxu0
    %v314 = vadd.f32 0.0, %v313
    %v315 = vpop.f32.mrb[0].mxu0
    %316 = vdwg.mxu0
    %v317 = vadd.f32 %v238, %v314
    %v318 = vxor.u32 %v317, 2147483648
    %v319 = vmul.f32 %v318, 1.442695
    %v320 = vpow.pop %v319
    %v321 = vadd.f32 %v320, 1.0
    %v322 = vrcp.pop %v321
    %v323 = vmul.f32 1.0, %v322
    %v324 = vtanh.pop %v317
    %v325 = vmul.f32 %v323, 0.0
    %327 = vrot.lane.b32.xlu0 %v324, 64
    %v328 = vpop.permute.xlu0 %327
    %v330 = vmul.f32 %v323, %v328
    %332 = vrot.lane.b32.xlu0 %v330, 32
    %v333 = vpop.permute.xlu0 %332
    %v335 = vadd.f32 %v325, %v333
    %v336 = vtanh.pop %v335
    %338 = vrot.lane.b32.xlu0 %v336, 64
    %v339 = vpop.permute.xlu0 %338
    %v341 = vmul.f32 %v323, %v339
    %342 = vmatprep.subr.mxu0 0.0
    %343 = vmatpush1.msra.mxu0 %v231
    %344 = vmatprep.subr.mxu0 0.0
    %345 = vmatpush1.msra.mxu0 %v232
    %346 = vmatprep.subr.mxu0 0.0
    %347 = vmatpush1.msra.mxu0 %v233
    %348 = vmatprep.subr.mxu0 0.0
    %349 = vmatpush1.msra.mxu0 %v234
    %350 = vmatprep.subr.mxu0 0.0
    %351 = vmatpush1.msra.mxu0 0.0
    %352 = vmatprep.subr.mxu0 0.0
    %353 = vmatpush1.msra.mxu0 0.0
    %354 = vmatprep.subr.mxu0 0.0
    %355 = vmatpush1.msra.mxu0 0.0
    %356 = vmatprep.subr.mxu0 0.0
    %357 = vmatpush1.msra.mxu0 0.0
    %358 = vmatprep.subr.mxu0 0.0
    %359 = vmatpush1.msra.mxu0 0.0
    %360 = vmatprep.subr.mxu0 0.0
    %361 = vmatpush1.msra.mxu0 0.0
    %362 = vmatprep.subr.mxu0 0.0
    %363 = vmatpush1.msra.mxu0 0.0
    %364 = vmatprep.subr.mxu0 0.0
    %365 = vmatpush1.msra.mxu0 0.0
    %366 = vmatprep.subr.mxu0 0.0
    %367 = vmatpush1.msra.mxu0 0.0
    %368 = vmatprep.subr.mxu0 0.0
    %369 = vmatpush1.msra.mxu0 0.0
    %370 = vmatprep.subr.mxu0 0.0
    %371 = vmatpush1.msra.mxu0 0.0
    %372 = vmatprep.subr.mxu0 0.0
    %373 = vmatpush1.msra.mxu0 0.0
    %374 = vmatprep.subr.mxu0 0.0
    %375 = vmatpush1.msra.mxu0 0.0
    %376 = vmatprep.subr.mxu0 0.0
    %377 = vmatpush1.msra.mxu0 0.0
    %378 = vmatprep.subr.mxu0 0.0
    %379 = vmatpush1.msra.mxu0 0.0
    %380 = vmatprep.subr.mxu0 0.0
    %381 = vmatpush1.msra.mxu0 0.0
    %382 = vmatprep.subr.mxu0 0.0
    %383 = vmatpush1.msra.mxu0 0.0
    %384 = vmatprep.subr.mxu0 0.0
    %385 = vmatpush1.msra.mxu0 0.0
    %386 = vmatprep.subr.mxu0 0.0
    %387 = vmatpush1.msra.mxu0 0.0
    %388 = vmatprep.subr.mxu0 0.0
    %389 = vmatpush1.msra.mxu0 0.0
    %390 = vmatprep.subr.mxu0 0.0
    %391 = vmatpush1.msra.mxu0 0.0
    %392 = vmatprep.subr.mxu0 0.0
    %393 = vmatpush1.msra.mxu0 0.0
    %394 = vmatprep.subr.mxu0 0.0
    %395 = vmatpush1.msra.mxu0 0.0
    %396 = vmatprep.subr.mxu0 0.0
    %397 = vmatpush1.msra.mxu0 0.0
    %398 = vmatprep.subr.mxu0 0.0
    %399 = vmatpush1.msra.mxu0 0.0
    %400 = vmatprep.subr.mxu0 0.0
    %401 = vmatpush1.msra.mxu0 0.0
    %402 = vmatprep.subr.mxu0 0.0
    %403 = vmatpush1.msra.mxu0 0.0
    %404 = vmatprep.subr.mxu0 0.0
    %405 = vmatpush1.msra.mxu0 0.0
    %406 = vmatprep.mubr.f32.mxu0 0.0
    %407 = vmatmul.mubr.f32.gmra.mrb[0].mxu0 %v245
    %v408 = vpop.f32.mrb[0].mxu0
    %v409 = vadd.f32 0.0, %v408
    %v410 = vpop.f32.mrb[0].mxu0
    %411 = vdwg.mxu0
    %v412 = vadd.f32 %v242, %v409
    %v413 = vxor.u32 %v412, 2147483648
    %v414 = vmul.f32 %v413, 1.442695
    %v415 = vpow.pop %v414
    %v416 = vadd.f32 %v415, 1.0
    %v417 = vrcp.pop %v416
    %v418 = vmul.f32 1.0, %v417
    %v419 = vtanh.pop %v412
    %v420 = vmul.f32 %v418, 0.0
    %422 = vrot.lane.b32.xlu0 %v419, 64
    %v423 = vpop.permute.xlu0 %422
    %v425 = vmul.f32 %v418, %v423
    %427 = vrot.lane.b32.xlu0 %v425, 32
    %v428 = vpop.permute.xlu0 %427
    %v430 = vadd.f32 %v420, %v428
    %v431 = vtanh.pop %v430
    %433 = vrot.lane.b32.xlu0 %v431, 64
    %v434 = vpop.permute.xlu0 %433
    %v436 = vmul.f32 %v418, %v434
    %s437 = smul.u32 1, 2
    %s438 = smul.addr %s437, 8
    %s439 = scalar_lea.vmem [#allocation2], %s438
    %v440 = vld [vmem:[%s439] sm:$0xff]
    %s441 = smul.u32 6, 2
    %s442 = smul.addr %s441, 8
    %s443 = scalar_lea.vmem [#allocation2], %s442
    %v444 = vld [vmem:[%s443 + $0x8] sm:$0xff]
    %446 = vrot.lane.b32.xlu0 %v341, 32
    %v447 = vpop.permute.xlu0 %446
    %v448 = vsel %vm243, %v447, 0
    %450 = vmatprep.subr.mxu0 0.0
    %451 = vmatpush1.msra.mxu0 %v227
    %452 = vmatprep.subr.mxu0 0.0
    %453 = vmatpush1.msra.mxu0 %v228
    %454 = vmatprep.subr.mxu0 0.0
    %455 = vmatpush1.msra.mxu0 %v229
    %456 = vmatprep.subr.mxu0 0.0
    %457 = vmatpush1.msra.mxu0 %v230
    %458 = vmatprep.subr.mxu0 0.0
    %459 = vmatpush1.msra.mxu0 0.0
    %460 = vmatprep.subr.mxu0 0.0
    %461 = vmatpush1.msra.mxu0 0.0
    %462 = vmatprep.subr.mxu0 0.0
    %463 = vmatpush1.msra.mxu0 0.0
    %464 = vmatprep.subr.mxu0 0.0
    %465 = vmatpush1.msra.mxu0 0.0
    %466 = vmatprep.subr.mxu0 0.0
    %467 = vmatpush1.msra.mxu0 0.0
    %468 = vmatprep.subr.mxu0 0.0
    %469 = vmatpush1.msra.mxu0 0.0
    %470 = vmatprep.subr.mxu0 0.0
    %471 = vmatpush1.msra.mxu0 0.0
    %472 = vmatprep.subr.mxu0 0.0
    %473 = vmatpush1.msra.mxu0 0.0
    %474 = vmatprep.subr.mxu0 0.0
    %475 = vmatpush1.msra.mxu0 0.0
    %476 = vmatprep.subr.mxu0 0.0
    %477 = vmatpush1.msra.mxu0 0.0
    %478 = vmatprep.subr.mxu0 0.0
    %479 = vmatpush1.msra.mxu0 0.0
    %480 = vmatprep.subr.mxu0 0.0
    %481 = vmatpush1.msra.mxu0 0.0
    %482 = vmatprep.subr.mxu0 0.0
    %483 = vmatpush1.msra.mxu0 0.0
    %484 = vmatprep.subr.mxu0 0.0
    %485 = vmatpush1.msra.mxu0 0.0
    %486 = vmatprep.subr.mxu0 0.0
    %487 = vmatpush1.msra.mxu0 0.0
    %488 = vmatprep.subr.mxu0 0.0
    %489 = vmatpush1.msra.mxu0 0.0
    %490 = vmatprep.subr.mxu0 0.0
    %491 = vmatpush1.msra.mxu0 0.0
    %492 = vmatprep.subr.mxu0 0.0
    %493 = vmatpush1.msra.mxu0 0.0
    %494 = vmatprep.subr.mxu0 0.0
    %495 = vmatpush1.msra.mxu0 0.0
    %496 = vmatprep.subr.mxu0 0.0
    %497 = vmatpush1.msra.mxu0 0.0
    %498 = vmatprep.subr.mxu0 0.0
    %499 = vmatpush1.msra.mxu0 0.0
    %500 = vmatprep.subr.mxu0 0.0
    %501 = vmatpush1.msra.mxu0 0.0
    %502 = vmatprep.subr.mxu0 0.0
    %503 = vmatpush1.msra.mxu0 0.0
    %504 = vmatprep.subr.mxu0 0.0
    %505 = vmatpush1.msra.mxu0 0.0
    %506 = vmatprep.subr.mxu0 0.0
    %507 = vmatpush1.msra.mxu0 0.0
    %508 = vmatprep.subr.mxu0 0.0
    %509 = vmatpush1.msra.mxu0 0.0
    %510 = vmatprep.subr.mxu0 0.0
    %511 = vmatpush1.msra.mxu0 0.0
    %512 = vmatprep.subr.mxu0 0.0
    %513 = vmatpush1.msra.mxu0 0.0
    %514 = vmatprep.mubr.f32.mxu0 0.0
    %515 = vmatmul.mubr.f32.gmra.mrb[0].mxu0 %v448
    %v516 = vpop.f32.mrb[0].mxu0
    %v517 = vadd.f32 0.0, %v516
    %v518 = vpop.f32.mrb[0].mxu0
    %519 = vdwg.mxu0
    %v520 = vadd.f32 %v440, %v517
    %v521 = vxor.u32 %v520, 2147483648
    %v522 = vmul.f32 %v521, 1.442695
    %v523 = vpow.pop %v522
    %v524 = vadd.f32 %v523, 1.0
    %v525 = vrcp.pop %v524
    %v526 = vmul.f32 1.0, %v525
    %v527 = vtanh.pop %v520
    %v528 = vmul.f32 %v526, %v335
    %530 = vrot.lane.b32.xlu0 %v527, 64
    %v531 = vpop.permute.xlu0 %530
    %v533 = vmul.f32 %v526, %v531
    %535 = vrot.lane.b32.xlu0 %v533, 32
    %v536 = vpop.permute.xlu0 %535
    %v538 = vadd.f32 %v528, %v536
    %v539 = vtanh.pop %v538
    %541 = vrot.lane.b32.xlu0 %v539, 64
    %v542 = vpop.permute.xlu0 %541
    %v544 = vmul.f32 %v526, %v542
    %546 = vrot.lane.b32.xlu0 %v436, 32
    %v547 = vpop.permute.xlu0 %546
    %v548 = vsel %vm243, %v547, 0
    %550 = vmatprep.subr.mxu0 0.0
    %551 = vmatpush1.msra.mxu0 %v231
    %552 = vmatprep.subr.mxu0 0.0
    %553 = vmatpush1.msra.mxu0 %v232
    %554 = vmatprep.subr.mxu0 0.0
    %555 = vmatpush1.msra.mxu0 %v233
    %556 = vmatprep.subr.mxu0 0.0
    %557 = vmatpush1.msra.mxu0 %v234
    %558 = vmatprep.subr.mxu0 0.0
    %559 = vmatpush1.msra.mxu0 0.0
    %560 = vmatprep.subr.mxu0 0.0
    %561 = vmatpush1.msra.mxu0 0.0
    %562 = vmatprep.subr.mxu0 0.0
    %563 = vmatpush1.msra.mxu0 0.0
    %564 = vmatprep.subr.mxu0 0.0
    %565 = vmatpush1.msra.mxu0 0.0
    %566 = vmatprep.subr.mxu0 0.0
    %567 = vmatpush1.msra.mxu0 0.0
    %568 = vmatprep.subr.mxu0 0.0
    %569 = vmatpush1.msra.mxu0 0.0
    %570 = vmatprep.subr.mxu0 0.0
    %571 = vmatpush1.msra.mxu0 0.0
    %572 = vmatprep.subr.mxu0 0.0
    %573 = vmatpush1.msra.mxu0 0.0
    %574 = vmatprep.subr.mxu0 0.0
    %575 = vmatpush1.msra.mxu0 0.0
    %576 = vmatprep.subr.mxu0 0.0
    %577 = vmatpush1.msra.mxu0 0.0
    %578 = vmatprep.subr.mxu0 0.0
    %579 = vmatpush1.msra.mxu0 0.0
    %580 = vmatprep.subr.mxu0 0.0
    %581 = vmatpush1.msra.mxu0 0.0
    %582 = vmatprep.subr.mxu0 0.0
    %583 = vmatpush1.msra.mxu0 0.0
    %584 = vmatprep.subr.mxu0 0.0
    %585 = vmatpush1.msra.mxu0 0.0
    %586 = vmatprep.subr.mxu0 0.0
    %587 = vmatpush1.msra.mxu0 0.0
    %588 = vmatprep.subr.mxu0 0.0
    %589 = vmatpush1.msra.mxu0 0.0
    %590 = vmatprep.subr.mxu0 0.0
    %591 = vmatpush1.msra.mxu0 0.0
    %592 = vmatprep.subr.mxu0 0.0
    %593 = vmatpush1.msra.mxu0 0.0
    %594 = vmatprep.subr.mxu0 0.0
    %595 = vmatpush1.msra.mxu0 0.0
    %596 = vmatprep.subr.mxu0 0.0
    %597 = vmatpush1.msra.mxu0 0.0
    %598 = vmatprep.subr.mxu0 0.0
    %599 = vmatpush1.msra.mxu0 0.0
    %600 = vmatprep.subr.mxu0 0.0
    %601 = vmatpush1.msra.mxu0 0.0
    %602 = vmatprep.subr.mxu0 0.0
    %603 = vmatpush1.msra.mxu0 0.0
    %604 = vmatprep.subr.mxu0 0.0
    %605 = vmatpush1.msra.mxu0 0.0
    %606 = vmatprep.subr.mxu0 0.0
    %607 = vmatpush1.msra.mxu0 0.0
    %608 = vmatprep.subr.mxu0 0.0
    %609 = vmatpush1.msra.mxu0 0.0
    %610 = vmatprep.subr.mxu0 0.0
    %611 = vmatpush1.msra.mxu0 0.0
    %612 = vmatprep.subr.mxu0 0.0
    %613 = vmatpush1.msra.mxu0 0.0
    %614 = vmatprep.mubr.f32.mxu0 0.0
    %615 = vmatmul.mubr.f32.gmra.mrb[0].mxu0 %v548
    %v616 = vpop.f32.mrb[0].mxu0
    %v617 = vadd.f32 0.0, %v616
    %v618 = vpop.f32.mrb[0].mxu0
    %619 = vdwg.mxu0
    %v620 = vadd.f32 %v444, %v617
    %v621 = vxor.u32 %v620, 2147483648
    %v622 = vmul.f32 %v621, 1.442695
    %v623 = vpow.pop %v622
    %v624 = vadd.f32 %v623, 1.0
    %v625 = vrcp.pop %v624
    %v626 = vmul.f32 1.0, %v625
    %v627 = vtanh.pop %v620
    %v628 = vmul.f32 %v626, %v430
    %630 = vrot.lane.b32.xlu0 %v627, 64
    %v631 = vpop.permute.xlu0 %630
    %v633 = vmul.f32 %v626, %v631
    %635 = vrot.lane.b32.xlu0 %v633, 32
    %v636 = vpop.permute.xlu0 %635
    %v638 = vadd.f32 %v628, %v636
    %v639 = vtanh.pop %v638
    %641 = vrot.lane.b32.xlu0 %v639, 64
    %v642 = vpop.permute.xlu0 %641
    %v644 = vmul.f32 %v626, %v642
    %s645 = smul.u32 2, 2
    %s646 = smul.addr %s645, 8
    %s647 = scalar_lea.vmem [#allocation2], %s646
    %v648 = vld [vmem:[%s647] sm:$0xff]
    %s649 = smul.u32 5, 2
    %s650 = smul.addr %s649, 8
    %s651 = scalar_lea.vmem [#allocation2], %s650
    %v652 = vld [vmem:[%s651 + $0x8] sm:$0xff]
    %654 = vrot.lane.b32.xlu0 %v544, 32
    %v655 = vpop.permute.xlu0 %654
    %v656 = vsel %vm243, %v655, 0
    %658 = vmatprep.subr.mxu0 0.0
    %659 = vmatpush1.msra.mxu0 %v227
    %660 = vmatprep.subr.mxu0 0.0
    %661 = vmatpush1.msra.mxu0 %v228
    %662 = vmatprep.subr.mxu0 0.0
    %663 = vmatpush1.msra.mxu0 %v229
    %664 = vmatprep.subr.mxu0 0.0
    %665 = vmatpush1.msra.mxu0 %v230
    %666 = vmatprep.subr.mxu0 0.0
    %667 = vmatpush1.msra.mxu0 0.0
    %668 = vmatprep.subr.mxu0 0.0
    %669 = vmatpush1.msra.mxu0 0.0
    %670 = vmatprep.subr.mxu0 0.0
    %671 = vmatpush1.msra.mxu0 0.0
    %672 = vmatprep.subr.mxu0 0.0
    %673 = vmatpush1.msra.mxu0 0.0
    %674 = vmatprep.subr.mxu0 0.0
    %675 = vmatpush1.msra.mxu0 0.0
    %676 = vmatprep.subr.mxu0 0.0
    %677 = vmatpush1.msra.mxu0 0.0
    %678 = vmatprep.subr.mxu0 0.0
    %679 = vmatpush1.msra.mxu0 0.0
    %680 = vmatprep.subr.mxu0 0.0
    %681 = vmatpush1.msra.mxu0 0.0
    %682 = vmatprep.subr.mxu0 0.0
    %683 = vmatpush1.msra.mxu0 0.0
    %684 = vmatprep.subr.mxu0 0.0
    %685 = vmatpush1.msra.mxu0 0.0
    %686 = vmatprep.subr.mxu0 0.0
    %687 = vmatpush1.msra.mxu0 0.0
    %688 = vmatprep.subr.mxu0 0.0
    %689 = vmatpush1.msra.mxu0 0.0
    %690 = vmatprep.subr.mxu0 0.0
    %691 = vmatpush1.msra.mxu0 0.0
    %692 = vmatprep.subr.mxu0 0.0
    %693 = vmatpush1.msra.mxu0 0.0
    %694 = vmatprep.subr.mxu0 0.0
    %695 = vmatpush1.msra.mxu0 0.0
    %696 = vmatprep.subr.mxu0 0.0
    %697 = vmatpush1.msra.mxu0 0.0
    %698 = vmatprep.subr.mxu0 0.0
    %699 = vmatpush1.msra.mxu0 0.0
    %700 = vmatprep.subr.mxu0 0.0
    %701 = vmatpush1.msra.mxu0 0.0
    %702 = vmatprep.subr.mxu0 0.0
    %703 = vmatpush1.msra.mxu0 0.0
    %704 = vmatprep.subr.mxu0 0.0
    %705 = vmatpush1.msra.mxu0 0.0
    %706 = vmatprep.subr.mxu0 0.0
    %707 = vmatpush1.msra.mxu0 0.0
    %708 = vmatprep.subr.mxu0 0.0
    %709 = vmatpush1.msra.mxu0 0.0
    %710 = vmatprep.subr.mxu0 0.0
    %711 = vmatpush1.msra.mxu0 0.0
    %712 = vmatprep.subr.mxu0 0.0
    %713 = vmatpush1.msra.mxu0 0.0
    %714 = vmatprep.subr.mxu0 0.0
    %715 = vmatpush1.msra.mxu0 0.0
    %716 = vmatprep.subr.mxu0 0.0
    %717 = vmatpush1.msra.mxu0 0.0
    %718 = vmatprep.subr.mxu0 0.0
    %719 = vmatpush1.msra.mxu0 0.0
    %720 = vmatprep.subr.mxu0 0.0
    %721 = vmatpush1.msra.mxu0 0.0
    %722 = vmatprep.mubr.f32.mxu0 0.0
    %723 = vmatmul.mubr.f32.gmra.mrb[0].mxu0 %v656
    %v724 = vpop.f32.mrb[0].mxu0
    %v725 = vadd.f32 0.0, %v724
    %v726 = vpop.f32.mrb[0].mxu0
    %727 = vdwg.mxu0
    %v728 = vadd.f32 %v648, %v725
    %v729 = vxor.u32 %v728, 2147483648
    %v730 = vmul.f32 %v729, 1.442695
    %v731 = vpow.pop %v730
    %v732 = vadd.f32 %v731, 1.0
    %v733 = vrcp.pop %v732
    %v734 = vmul.f32 1.0, %v733
    %v735 = vtanh.pop %v728
    %v736 = vmul.f32 %v734, %v538
    %738 = vrot.lane.b32.xlu0 %v735, 64
    %v739 = vpop.permute.xlu0 %738
    %v741 = vmul.f32 %v734, %v739
    %743 = vrot.lane.b32.xlu0 %v741, 32
    %v744 = vpop.permute.xlu0 %743
    %v746 = vadd.f32 %v736, %v744
    %v747 = vtanh.pop %v746
    %749 = vrot.lane.b32.xlu0 %v747, 64
    %v750 = vpop.permute.xlu0 %749
    %v752 = vmul.f32 %v734, %v750
    %754 = vrot.lane.b32.xlu0 %v644, 32
    %v755 = vpop.permute.xlu0 %754
    %v756 = vsel %vm243, %v755, 0
    %758 = vmatprep.subr.mxu0 0.0
    %759 = vmatpush1.msra.mxu0 %v231
    %760 = vmatprep.subr.mxu0 0.0
    %761 = vmatpush1.msra.mxu0 %v232
    %762 = vmatprep.subr.mxu0 0.0
    %763 = vmatpush1.msra.mxu0 %v233
    %764 = vmatprep.subr.mxu0 0.0
    %765 = vmatpush1.msra.mxu0 %v234
    %766 = vmatprep.subr.mxu0 0.0
    %767 = vmatpush1.msra.mxu0 0.0
    %768 = vmatprep.subr.mxu0 0.0
    %769 = vmatpush1.msra.mxu0 0.0
    %770 = vmatprep.subr.mxu0 0.0
    %771 = vmatpush1.msra.mxu0 0.0
    %772 = vmatprep.subr.mxu0 0.0
    %773 = vmatpush1.msra.mxu0 0.0
    %774 = vmatprep.subr.mxu0 0.0
    %775 = vmatpush1.msra.mxu0 0.0
    %776 = vmatprep.subr.mxu0 0.0
    %777 = vmatpush1.msra.mxu0 0.0
    %778 = vmatprep.subr.mxu0 0.0
    %779 = vmatpush1.msra.mxu0 0.0
    %780 = vmatprep.subr.mxu0 0.0
    %781 = vmatpush1.msra.mxu0 0.0
    %782 = vmatprep.subr.mxu0 0.0
    %783 = vmatpush1.msra.mxu0 0.0
    %784 = vmatprep.subr.mxu0 0.0
    %785 = vmatpush1.msra.mxu0 0.0
    %786 = vmatprep.subr.mxu0 0.0
    %787 = vmatpush1.msra.mxu0 0.0
    %788 = vmatprep.subr.mxu0 0.0
    %789 = vmatpush1.msra.mxu0 0.0
    %790 = vmatprep.subr.mxu0 0.0
    %791 = vmatpush1.msra.mxu0 0.0
    %792 = vmatprep.subr.mxu0 0.0
    %793 = vmatpush1.msra.mxu0 0.0
    %794 = vmatprep.subr.mxu0 0.0
    %795 = vmatpush1.msra.mxu0 0.0
    %796 = vmatprep.subr.mxu0 0.0
    %797 = vmatpush1.msra.mxu0 0.0
    %798 = vmatprep.subr.mxu0 0.0
    %799 = vmatpush1.msra.mxu0 0.0
    %800 = vmatprep.subr.mxu0 0.0
    %801 = vmatpush1.msra.mxu0 0.0
    %802 = vmatprep.subr.mxu0 0.0
    %803 = vmatpush1.msra.mxu0 0.0
    %804 = vmatprep.subr.mxu0 0.0
    %805 = vmatpush1.msra.mxu0 0.0
    %806 = vmatprep.subr.mxu0 0.0
    %807 = vmatpush1.msra.mxu0 0.0
    %808 = vmatprep.subr.mxu0 0.0
    %809 = vmatpush1.msra.mxu0 0.0
    %810 = vmatprep.subr.mxu0 0.0
    %811 = vmatpush1.msra.mxu0 0.0
    %812 = vmatprep.subr.mxu0 0.0
    %813 = vmatpush1.msra.mxu0 0.0
    %814 = vmatprep.subr.mxu0 0.0
    %815 = vmatpush1.msra.mxu0 0.0
    %816 = vmatprep.subr.mxu0 0.0
    %817 = vmatpush1.msra.mxu0 0.0
    %818 = vmatprep.subr.mxu0 0.0
    %819 = vmatpush1.msra.mxu0 0.0
    %820 = vmatprep.subr.mxu0 0.0
    %821 = vmatpush1.msra.mxu0 0.0
    %822 = vmatprep.mubr.f32.mxu0 0.0
    %823 = vmatmul.mubr.f32.gmra.mrb[0].mxu0 %v756
    %v824 = vpop.f32.mrb[0].mxu0
    %v825 = vadd.f32 0.0, %v824
    %v826 = vpop.f32.mrb[0].mxu0
    %827 = vdwg.mxu0
    %v828 = vadd.f32 %v652, %v825
    %v829 = vxor.u32 %v828, 2147483648
    %v830 = vmul.f32 %v829, 1.442695
    %v831 = vpow.pop %v830
    %v832 = vadd.f32 %v831, 1.0
    %v833 = vrcp.pop %v832
    %v834 = vmul.f32 1.0, %v833
    %v835 = vtanh.pop %v828
    %v836 = vmul.f32 %v834, %v638
    %838 = vrot.lane.b32.xlu0 %v835, 64
    %v839 = vpop.permute.xlu0 %838
    %v841 = vmul.f32 %v834, %v839
    %843 = vrot.lane.b32.xlu0 %v841, 32
    %v844 = vpop.permute.xlu0 %843
    %v846 = vadd.f32 %v836, %v844
    %v847 = vtanh.pop %v846
    %849 = vrot.lane.b32.xlu0 %v847, 64
    %v850 = vpop.permute.xlu0 %849
    %v852 = vmul.f32 %v834, %v850
    %s853 = smul.u32 3, 2
    %s854 = smul.addr %s853, 8
    %s855 = scalar_lea.vmem [#allocation2], %s854
    %v856 = vld [vmem:[%s855] sm:$0xff]
    %s857 = smul.u32 4, 2
    %s858 = smul.addr %s857, 8
    %s859 = scalar_lea.vmem [#allocation2], %s858
    %v860 = vld [vmem:[%s859 + $0x8] sm:$0xff]
    %862 = vrot.lane.b32.xlu0 %v752, 32
    %v863 = vpop.permute.xlu0 %862
    %v864 = vsel %vm243, %v863, 0
    %866 = vmatprep.subr.mxu0 0.0
    %867 = vmatpush1.msra.mxu0 %v227
    %868 = vmatprep.subr.mxu0 0.0
    %869 = vmatpush1.msra.mxu0 %v228
    %870 = vmatprep.subr.mxu0 0.0
    %871 = vmatpush1.msra.mxu0 %v229
    %872 = vmatprep.subr.mxu0 0.0
    %873 = vmatpush1.msra.mxu0 %v230
    %874 = vmatprep.subr.mxu0 0.0
    %875 = vmatpush1.msra.mxu0 0.0
    %876 = vmatprep.subr.mxu0 0.0
    %877 = vmatpush1.msra.mxu0 0.0
    %878 = vmatprep.subr.mxu0 0.0
    %879 = vmatpush1.msra.mxu0 0.0
    %880 = vmatprep.subr.mxu0 0.0
    %881 = vmatpush1.msra.mxu0 0.0
    %882 = vmatprep.subr.mxu0 0.0
    %883 = vmatpush1.msra.mxu0 0.0
    %884 = vmatprep.subr.mxu0 0.0
    %885 = vmatpush1.msra.mxu0 0.0
    %886 = vmatprep.subr.mxu0 0.0
    %887 = vmatpush1.msra.mxu0 0.0
    %888 = vmatprep.subr.mxu0 0.0
    %889 = vmatpush1.msra.mxu0 0.0
    %890 = vmatprep.subr.mxu0 0.0
    %891 = vmatpush1.msra.mxu0 0.0
    %892 = vmatprep.subr.mxu0 0.0
    %893 = vmatpush1.msra.mxu0 0.0
    %894 = vmatprep.subr.mxu0 0.0
    %895 = vmatpush1.msra.mxu0 0.0
    %896 = vmatprep.subr.mxu0 0.0
    %897 = vmatpush1.msra.mxu0 0.0
    %898 = vmatprep.subr.mxu0 0.0
    %899 = vmatpush1.msra.mxu0 0.0
    %900 = vmatprep.subr.mxu0 0.0
    %901 = vmatpush1.msra.mxu0 0.0
    %902 = vmatprep.subr.mxu0 0.0
    %903 = vmatpush1.msra.mxu0 0.0
    %904 = vmatprep.subr.mxu0 0.0
    %905 = vmatpush1.msra.mxu0 0.0
    %906 = vmatprep.subr.mxu0 0.0
    %907 = vmatpush1.msra.mxu0 0.0
    %908 = vmatprep.subr.mxu0 0.0
    %909 = vmatpush1.msra.mxu0 0.0
    %910 = vmatprep.subr.mxu0 0.0
    %911 = vmatpush1.msra.mxu0 0.0
    %912 = vmatprep.subr.mxu0 0.0
    %913 = vmatpush1.msra.mxu0 0.0
    %914 = vmatprep.subr.mxu0 0.0
    %915 = vmatpush1.msra.mxu0 0.0
    %916 = vmatprep.subr.mxu0 0.0
    %917 = vmatpush1.msra.mxu0 0.0
    %918 = vmatprep.subr.mxu0 0.0
    %919 = vmatpush1.msra.mxu0 0.0
    %920 = vmatprep.subr.mxu0 0.0
    %921 = vmatpush1.msra.mxu0 0.0
    %922 = vmatprep.subr.mxu0 0.0
    %923 = vmatpush1.msra.mxu0 0.0
    %924 = vmatprep.subr.mxu0 0.0
    %925 = vmatpush1.msra.mxu0 0.0
    %926 = vmatprep.subr.mxu0 0.0
    %927 = vmatpush1.msra.mxu0 0.0
    %928 = vmatprep.subr.mxu0 0.0
    %929 = vmatpush1.msra.mxu0 0.0
    %930 = vmatprep.mubr.f32.mxu0 0.0
    %931 = vmatmul.mubr.f32.gmra.mrb[0].mxu0 %v864
    %v932 = vpop.f32.mrb[0].mxu0
    %v933 = vadd.f32 0.0, %v932
    %v934 = vpop.f32.mrb[0].mxu0
    %935 = vdwg.mxu0
    %v936 = vadd.f32 %v856, %v933
    %v937 = vxor.u32 %v936, 2147483648
    %v938 = vmul.f32 %v937, 1.442695
    %v939 = vpow.pop %v938
    %v940 = vadd.f32 %v939, 1.0
    %v941 = vrcp.pop %v940
    %v942 = vmul.f32 1.0, %v941
    %v943 = vtanh.pop %v936
    %v944 = vmul.f32 %v942, %v746
    %946 = vrot.lane.b32.xlu0 %v943, 64
    %v947 = vpop.permute.xlu0 %946
    %v949 = vmul.f32 %v942, %v947
    %951 = vrot.lane.b32.xlu0 %v949, 32
    %v952 = vpop.permute.xlu0 %951
    %v954 = vadd.f32 %v944, %v952
    %v955 = vtanh.pop %v954
    %957 = vrot.lane.b32.xlu0 %v955, 64
    %v958 = vpop.permute.xlu0 %957
    %v960 = vmul.f32 %v942, %v958
    %962 = vrot.lane.b32.xlu0 %v852, 32
    %v963 = vpop.permute.xlu0 %962
    %v964 = vsel %vm243, %v963, 0
    %966 = vmatprep.subr.mxu0 0.0
    %967 = vmatpush1.msra.mxu0 %v231
    %968 = vmatprep.subr.mxu0 0.0
    %969 = vmatpush1.msra.mxu0 %v232
    %970 = vmatprep.subr.mxu0 0.0
    %971 = vmatpush1.msra.mxu0 %v233
    %972 = vmatprep.subr.mxu0 0.0
    %973 = vmatpush1.msra.mxu0 %v234
    %974 = vmatprep.subr.mxu0 0.0
    %975 = vmatpush1.msra.mxu0 0.0
    %976 = vmatprep.subr.mxu0 0.0
    %977 = vmatpush1.msra.mxu0 0.0
    %978 = vmatprep.subr.mxu0 0.0
    %979 = vmatpush1.msra.mxu0 0.0
    %980 = vmatprep.subr.mxu0 0.0
    %981 = vmatpush1.msra.mxu0 0.0
    %982 = vmatprep.subr.mxu0 0.0
    %983 = vmatpush1.msra.mxu0 0.0
    %984 = vmatprep.subr.mxu0 0.0
    %985 = vmatpush1.msra.mxu0 0.0
    %986 = vmatprep.subr.mxu0 0.0
    %987 = vmatpush1.msra.mxu0 0.0
    %988 = vmatprep.subr.mxu0 0.0
    %989 = vmatpush1.msra.mxu0 0.0
    %990 = vmatprep.subr.mxu0 0.0
    %991 = vmatpush1.msra.mxu0 0.0
    %992 = vmatprep.subr.mxu0 0.0
    %993 = vmatpush1.msra.mxu0 0.0
    %994 = vmatprep.subr.mxu0 0.0
    %995 = vmatpush1.msra.mxu0 0.0
    %996 = vmatprep.subr.mxu0 0.0
    %997 = vmatpush1.msra.mxu0 0.0
    %998 = vmatprep.subr.mxu0 0.0
    %999 = vmatpush1.msra.mxu0 0.0
    %1000 = vmatprep.subr.mxu0 0.0
    %1001 = vmatpush1.msra.mxu0 0.0
    %1002 = vmatprep.subr.mxu0 0.0
    %1003 = vmatpush1.msra.mxu0 0.0
    %1004 = vmatprep.subr.mxu0 0.0
    %1005 = vmatpush1.msra.mxu0 0.0
    %1006 = vmatprep.subr.mxu0 0.0
    %1007 = vmatpush1.msra.mxu0 0.0
    %1008 = vmatprep.subr.mxu0 0.0
    %1009 = vmatpush1.msra.mxu0 0.0
    %1010 = vmatprep.subr.mxu0 0.0
    %1011 = vmatpush1.msra.mxu0 0.0
    %1012 = vmatprep.subr.mxu0 0.0
    %1013 = vmatpush1.msra.mxu0 0.0
    %1014 = vmatprep.subr.mxu0 0.0
    %1015 = vmatpush1.msra.mxu0 0.0
    %1016 = vmatprep.subr.mxu0 0.0
    %1017 = vmatpush1.msra.mxu0 0.0
    %1018 = vmatprep.subr.mxu0 0.0
    %1019 = vmatpush1.msra.mxu0 0.0
    %1020 = vmatprep.subr.mxu0 0.0
    %1021 = vmatpush1.msra.mxu0 0.0
    %1022 = vmatprep.subr.mxu0 0.0
    %1023 = vmatpush1.msra.mxu0 0.0
    %1024 = vmatprep.subr.mxu0 0.0
    %1025 = vmatpush1.msra.mxu0 0.0
    %1026 = vmatprep.subr.mxu0 0.0
    %1027 = vmatpush1.msra.mxu0 0.0
    %1028 = vmatprep.subr.mxu0 0.0
    %1029 = vmatpush1.msra.mxu0 0.0
    %1030 = vmatprep.mubr.f32.mxu0 0.0
    %1031 = vmatmul.mubr.f32.gmra.mrb[0].mxu0 %v964
    %v1032 = vpop.f32.mrb[0].mxu0
    %v1033 = vadd.f32 0.0, %v1032
    %v1034 = vpop.f32.mrb[0].mxu0
    %1035 = vdwg.mxu0
    %v1036 = vadd.f32 %v860, %v1033
    %v1037 = vxor.u32 %v1036, 2147483648
    %v1038 = vmul.f32 %v1037, 1.442695
    %v1039 = vpow.pop %v1038
    %v1040 = vadd.f32 %v1039, 1.0
    %v1041 = vrcp.pop %v1040
    %v1042 = vmul.f32 1.0, %v1041
    %v1043 = vtanh.pop %v1036
    %v1044 = vmul.f32 %v1042, %v846
    %1046 = vrot.lane.b32.xlu0 %v1043, 64
    %v1047 = vpop.permute.xlu0 %1046
    %v1049 = vmul.f32 %v1042, %v1047
    %1051 = vrot.lane.b32.xlu0 %v1049, 32
    %v1052 = vpop.permute.xlu0 %1051
    %v1054 = vadd.f32 %v1044, %v1052
    %v1055 = vtanh.pop %v1054
    %1057 = vrot.lane.b32.xlu0 %v1055, 64
    %v1058 = vpop.permute.xlu0 %1057
    %v1060 = vmul.f32 %v1042, %v1058
    %v1061 = vld [vmem:[%s859] sm:$0xff]
    %v1062 = vld [vmem:[%s855 + $0x8] sm:$0xff]
    %1064 = vrot.lane.b32.xlu0 %v960, 32
    %v1065 = vpop.permute.xlu0 %1064
    %v1066 = vsel %vm243, %v1065, 0
    %1068 = vmatprep.subr.mxu0 0.0
    %1069 = vmatpush1.msra.mxu0 %v227
    %1070 = vmatprep.subr.mxu0 0.0
    %1071 = vmatpush1.msra.mxu0 %v228
    %1072 = vmatprep.subr.mxu0 0.0
    %1073 = vmatpush1.msra.mxu0 %v229
    %1074 = vmatprep.subr.mxu0 0.0
    %1075 = vmatpush1.msra.mxu0 %v230
    %1076 = vmatprep.subr.mxu0 0.0
    %1077 = vmatpush1.msra.mxu0 0.0
    %1078 = vmatprep.subr.mxu0 0.0
    %1079 = vmatpush1.msra.mxu0 0.0
    %1080 = vmatprep.subr.mxu0 0.0
    %1081 = vmatpush1.msra.mxu0 0.0
    %1082 = vmatprep.subr.mxu0 0.0
    %1083 = vmatpush1.msra.mxu0 0.0
    %1084 = vmatprep.subr.mxu0 0.0
    %1085 = vmatpush1.msra.mxu0 0.0
    %1086 = vmatprep.subr.mxu0 0.0
    %1087 = vmatpush1.msra.mxu0 0.0
    %1088 = vmatprep.subr.mxu0 0.0
    %1089 = vmatpush1.msra.mxu0 0.0
    %1090 = vmatprep.subr.mxu0 0.0
    %1091 = vmatpush1.msra.mxu0 0.0
    %1092 = vmatprep.subr.mxu0 0.0
    %1093 = vmatpush1.msra.mxu0 0.0
    %1094 = vmatprep.subr.mxu0 0.0
    %1095 = vmatpush1.msra.mxu0 0.0
    %1096 = vmatprep.subr.mxu0 0.0
    %1097 = vmatpush1.msra.mxu0 0.0
    %1098 = vmatprep.subr.mxu0 0.0
    %1099 = vmatpush1.msra.mxu0 0.0
    %1100 = vmatprep.subr.mxu0 0.0
    %1101 = vmatpush1.msra.mxu0 0.0
    %1102 = vmatprep.subr.mxu0 0.0
    %1103 = vmatpush1.msra.mxu0 0.0
    %1104 = vmatprep.subr.mxu0 0.0
    %1105 = vmatpush1.msra.mxu0 0.0
    %1106 = vmatprep.subr.mxu0 0.0
    %1107 = vmatpush1.msra.mxu0 0.0
    %1108 = vmatprep.subr.mxu0 0.0
    %1109 = vmatpush1.msra.mxu0 0.0
    %1110 = vmatprep.subr.mxu0 0.0
    %1111 = vmatpush1.msra.mxu0 0.0
    %1112 = vmatprep.subr.mxu0 0.0
    %1113 = vmatpush1.msra.mxu0 0.0
    %1114 = vmatprep.subr.mxu0 0.0
    %1115 = vmatpush1.msra.mxu0 0.0
    %1116 = vmatprep.subr.mxu0 0.0
    %1117 = vmatpush1.msra.mxu0 0.0
    %1118 = vmatprep.subr.mxu0 0.0
    %1119 = vmatpush1.msra.mxu0 0.0
    %1120 = vmatprep.subr.mxu0 0.0
    %1121 = vmatpush1.msra.mxu0 0.0
    %1122 = vmatprep.subr.mxu0 0.0
    %1123 = vmatpush1.msra.mxu0 0.0
    %1124 = vmatprep.subr.mxu0 0.0
    %1125 = vmatpush1.msra.mxu0 0.0
    %1126 = vmatprep.subr.mxu0 0.0
    %1127 = vmatpush1.msra.mxu0 0.0
    %1128 = vmatprep.subr.mxu0 0.0
    %1129 = vmatpush1.msra.mxu0 0.0
    %1130 = vmatprep.subr.mxu0 0.0
    %1131 = vmatpush1.msra.mxu0 0.0
    %1132 = vmatprep.mubr.f32.mxu0 0.0
    %1133 = vmatmul.mubr.f32.gmra.mrb[0].mxu0 %v1066
    %v1134 = vpop.f32.mrb[0].mxu0
    %v1135 = vadd.f32 0.0, %v1134
    %v1136 = vpop.f32.mrb[0].mxu0
    %1137 = vdwg.mxu0
    %v1138 = vadd.f32 %v1061, %v1135
    %v1139 = vxor.u32 %v1138, 2147483648
    %v1140 = vmul.f32 %v1139, 1.442695
    %v1141 = vpow.pop %v1140
    %v1142 = vadd.f32 %v1141, 1.0
    %v1143 = vrcp.pop %v1142
    %v1144 = vmul.f32 1.0, %v1143
    %v1145 = vtanh.pop %v1138
    %v1146 = vmul.f32 %v1144, %v954
    %1148 = vrot.lane.b32.xlu0 %v1145, 64
    %v1149 = vpop.permute.xlu0 %1148
    %v1151 = vmul.f32 %v1144, %v1149
    %1153 = vrot.lane.b32.xlu0 %v1151, 32
    %v1154 = vpop.permute.xlu0 %1153
    %v1156 = vadd.f32 %v1146, %v1154
    %v1157 = vtanh.pop %v1156
    %1159 = vrot.lane.b32.xlu0 %v1157, 64
    %v1160 = vpop.permute.xlu0 %1159
    %v1162 = vmul.f32 %v1144, %v1160
    %1164 = vrot.lane.b32.xlu0 %v1060, 32
    %v1165 = vpop.permute.xlu0 %1164
    %v1166 = vsel %vm243, %v1165, 0
    %1168 = vmatprep.subr.mxu0 0.0
    %1169 = vmatpush1.msra.mxu0 %v231
    %1170 = vmatprep.subr.mxu0 0.0
    %1171 = vmatpush1.msra.mxu0 %v232
    %1172 = vmatprep.subr.mxu0 0.0
    %1173 = vmatpush1.msra.mxu0 %v233
    %1174 = vmatprep.subr.mxu0 0.0
    %1175 = vmatpush1.msra.mxu0 %v234
    %1176 = vmatprep.subr.mxu0 0.0
    %1177 = vmatpush1.msra.mxu0 0.0
    %1178 = vmatprep.subr.mxu0 0.0
    %1179 = vmatpush1.msra.mxu0 0.0
    %1180 = vmatprep.subr.mxu0 0.0
    %1181 = vmatpush1.msra.mxu0 0.0
    %1182 = vmatprep.subr.mxu0 0.0
    %1183 = vmatpush1.msra.mxu0 0.0
    %1184 = vmatprep.subr.mxu0 0.0
    %1185 = vmatpush1.msra.mxu0 0.0
    %1186 = vmatprep.subr.mxu0 0.0
    %1187 = vmatpush1.msra.mxu0 0.0
    %1188 = vmatprep.subr.mxu0 0.0
    %1189 = vmatpush1.msra.mxu0 0.0
    %1190 = vmatprep.subr.mxu0 0.0
    %1191 = vmatpush1.msra.mxu0 0.0
    %1192 = vmatprep.subr.mxu0 0.0
    %1193 = vmatpush1.msra.mxu0 0.0
    %1194 = vmatprep.subr.mxu0 0.0
    %1195 = vmatpush1.msra.mxu0 0.0
    %1196 = vmatprep.subr.mxu0 0.0
    %1197 = vmatpush1.msra.mxu0 0.0
    %1198 = vmatprep.subr.mxu0 0.0
    %1199 = vmatpush1.msra.mxu0 0.0
    %1200 = vmatprep.subr.mxu0 0.0
    %1201 = vmatpush1.msra.mxu0 0.0
    %1202 = vmatprep.subr.mxu0 0.0
    %1203 = vmatpush1.msra.mxu0 0.0
    %1204 = vmatprep.subr.mxu0 0.0
    %1205 = vmatpush1.msra.mxu0 0.0
    %1206 = vmatprep.subr.mxu0 0.0
    %1207 = vmatpush1.msra.mxu0 0.0
    %1208 = vmatprep.subr.mxu0 0.0
    %1209 = vmatpush1.msra.mxu0 0.0
    %1210 = vmatprep.subr.mxu0 0.0
    %1211 = vmatpush1.msra.mxu0 0.0
    %1212 = vmatprep.subr.mxu0 0.0
    %1213 = vmatpush1.msra.mxu0 0.0
    %1214 = vmatprep.subr.mxu0 0.0
    %1215 = vmatpush1.msra.mxu0 0.0
    %1216 = vmatprep.subr.mxu0 0.0
    %1217 = vmatpush1.msra.mxu0 0.0
    %1218 = vmatprep.subr.mxu0 0.0
    %1219 = vmatpush1.msra.mxu0 0.0
    %1220 = vmatprep.subr.mxu0 0.0
    %1221 = vmatpush1.msra.mxu0 0.0
    %1222 = vmatprep.subr.mxu0 0.0
    %1223 = vmatpush1.msra.mxu0 0.0
    %1224 = vmatprep.subr.mxu0 0.0
    %1225 = vmatpush1.msra.mxu0 0.0
    %1226 = vmatprep.subr.mxu0 0.0
    %1227 = vmatpush1.msra.mxu0 0.0
    %1228 = vmatprep.subr.mxu0 0.0
    %1229 = vmatpush1.msra.mxu0 0.0
    %1230 = vmatprep.subr.mxu0 0.0
    %1231 = vmatpush1.msra.mxu0 0.0
    %1232 = vmatprep.mubr.f32.mxu0 0.0
    %1233 = vmatmul.mubr.f32.gmra.mrb[0].mxu0 %v1166
    %v1234 = vpop.f32.mrb[0].mxu0
    %v1235 = vadd.f32 0.0, %v1234
    %v1236 = vpop.f32.mrb[0].mxu0
    %1237 = vdwg.mxu0
    %v1238 = vadd.f32 %v1062, %v1235
    %v1239 = vxor.u32 %v1238, 2147483648
    %v1240 = vmul.f32 %v1239, 1.442695
    %v1241 = vpow.pop %v1240
    %v1242 = vadd.f32 %v1241, 1.0
    %v1243 = vrcp.pop %v1242
    %v1244 = vmul.f32 1.0, %v1243
    %v1245 = vtanh.pop %v1238
    %v1246 = vmul.f32 %v1244, %v1054
    %1248 = vrot.lane.b32.xlu0 %v1245, 64
    %v1249 = vpop.permute.xlu0 %1248
    %v1251 = vmul.f32 %v1244, %v1249
    %1253 = vrot.lane.b32.xlu0 %v1251, 32
    %v1254 = vpop.permute.xlu0 %1253
    %v1256 = vadd.f32 %v1246, %v1254
    %v1257 = vtanh.pop %v1256
    %1259 = vrot.lane.b32.xlu0 %v1257, 64
    %v1260 = vpop.permute.xlu0 %1259
    %v1262 = vmul.f32 %v1244, %v1260
    %v1263 = vld [vmem:[%s651] sm:$0xff]
    %v1264 = vld [vmem:[%s647 + $0x8] sm:$0xff]
    %1266 = vrot.lane.b32.xlu0 %v1162, 32
    %v1267 = vpop.permute.xlu0 %1266
    %v1268 = vsel %vm243, %v1267, 0
    %1270 = vmatprep.subr.mxu0 0.0
    %1271 = vmatpush1.msra.mxu0 %v227
    %1272 = vmatprep.subr.mxu0 0.0
    %1273 = vmatpush1.msra.mxu0 %v228
    %1274 = vmatprep.subr.mxu0 0.0
    %1275 = vmatpush1.msra.mxu0 %v229
    %1276 = vmatprep.subr.mxu0 0.0
    %1277 = vmatpush1.msra.mxu0 %v230
    %1278 = vmatprep.subr.mxu0 0.0
    %1279 = vmatpush1.msra.mxu0 0.0
    %1280 = vmatprep.subr.mxu0 0.0
    %1281 = vmatpush1.msra.mxu0 0.0
    %1282 = vmatprep.subr.mxu0 0.0
    %1283 = vmatpush1.msra.mxu0 0.0
    %1284 = vmatprep.subr.mxu0 0.0
    %1285 = vmatpush1.msra.mxu0 0.0
    %1286 = vmatprep.subr.mxu0 0.0
    %1287 = vmatpush1.msra.mxu0 0.0
    %1288 = vmatprep.subr.mxu0 0.0
    %1289 = vmatpush1.msra.mxu0 0.0
    %1290 = vmatprep.subr.mxu0 0.0
    %1291 = vmatpush1.msra.mxu0 0.0
    %1292 = vmatprep.subr.mxu0 0.0
    %1293 = vmatpush1.msra.mxu0 0.0
    %1294 = vmatprep.subr.mxu0 0.0
    %1295 = vmatpush1.msra.mxu0 0.0
    %1296 = vmatprep.subr.mxu0 0.0
    %1297 = vmatpush1.msra.mxu0 0.0
    %1298 = vmatprep.subr.mxu0 0.0
    %1299 = vmatpush1.msra.mxu0 0.0
    %1300 = vmatprep.subr.mxu0 0.0
    %1301 = vmatpush1.msra.mxu0 0.0
    %1302 = vmatprep.subr.mxu0 0.0
    %1303 = vmatpush1.msra.mxu0 0.0
    %1304 = vmatprep.subr.mxu0 0.0
    %1305 = vmatpush1.msra.mxu0 0.0
    %1306 = vmatprep.subr.mxu0 0.0
    %1307 = vmatpush1.msra.mxu0 0.0
    %1308 = vmatprep.subr.mxu0 0.0
    %1309 = vmatpush1.msra.mxu0 0.0
    %1310 = vmatprep.subr.mxu0 0.0
    %1311 = vmatpush1.msra.mxu0 0.0
    %1312 = vmatprep.subr.mxu0 0.0
    %1313 = vmatpush1.msra.mxu0 0.0
    %1314 = vmatprep.subr.mxu0 0.0
    %1315 = vmatpush1.msra.mxu0 0.0
    %1316 = vmatprep.subr.mxu0 0.0
    %1317 = vmatpush1.msra.mxu0 0.0
    %1318 = vmatprep.subr.mxu0 0.0
    %1319 = vmatpush1.msra.mxu0 0.0
    %1320 = vmatprep.subr.mxu0 0.0
    %1321 = vmatpush1.msra.mxu0 0.0
    %1322 = vmatprep.subr.mxu0 0.0
    %1323 = vmatpush1.msra.mxu0 0.0
    %1324 = vmatprep.subr.mxu0 0.0
    %1325 = vmatpush1.msra.mxu0 0.0
    %1326 = vmatprep.subr.mxu0 0.0
    %1327 = vmatpush1.msra.mxu0 0.0
    %1328 = vmatprep.subr.mxu0 0.0
    %1329 = vmatpush1.msra.mxu0 0.0
    %1330 = vmatprep.subr.mxu0 0.0
    %1331 = vmatpush1.msra.mxu0 0.0
    %1332 = vmatprep.subr.mxu0 0.0
    %1333 = vmatpush1.msra.mxu0 0.0
    %1334 = vmatprep.mubr.f32.mxu0 0.0
    %1335 = vmatmul.mubr.f32.gmra.mrb[0].mxu0 %v1268
    %v1336 = vpop.f32.mrb[0].mxu0
    %v1337 = vadd.f32 0.0, %v1336
    %v1338 = vpop.f32.mrb[0].mxu0
    %1339 = vdwg.mxu0
    %v1340 = vadd.f32 %v1263, %v1337
    %v1341 = vxor.u32 %v1340, 2147483648
    %v1342 = vmul.f32 %v1341, 1.442695
    %v1343 = vpow.pop %v1342
    %v1344 = vadd.f32 %v1343, 1.0
    %v1345 = vrcp.pop %v1344
    %v1346 = vmul.f32 1.0, %v1345
    %v1347 = vtanh.pop %v1340
    %v1348 = vmul.f32 %v1346, %v1156
    %1350 = vrot.lane.b32.xlu0 %v1347, 64
    %v1351 = vpop.permute.xlu0 %1350
    %v1353 = vmul.f32 %v1346, %v1351
    %1355 = vrot.lane.b32.xlu0 %v1353, 32
    %v1356 = vpop.permute.xlu0 %1355
    %v1358 = vadd.f32 %v1348, %v1356
    %v1359 = vtanh.pop %v1358
    %1361 = vrot.lane.b32.xlu0 %v1359, 64
    %v1362 = vpop.permute.xlu0 %1361
    %v1364 = vmul.f32 %v1346, %v1362
    %1366 = vrot.lane.b32.xlu0 %v1262, 32
    %v1367 = vpop.permute.xlu0 %1366
    %v1368 = vsel %vm243, %v1367, 0
    %1370 = vmatprep.subr.mxu0 0.0
    %1371 = vmatpush1.msra.mxu0 %v231
    %1372 = vmatprep.subr.mxu0 0.0
    %1373 = vmatpush1.msra.mxu0 %v232
    %1374 = vmatprep.subr.mxu0 0.0
    %1375 = vmatpush1.msra.mxu0 %v233
    %1376 = vmatprep.subr.mxu0 0.0
    %1377 = vmatpush1.msra.mxu0 %v234
    %1378 = vmatprep.subr.mxu0 0.0
    %1379 = vmatpush1.msra.mxu0 0.0
    %1380 = vmatprep.subr.mxu0 0.0
    %1381 = vmatpush1.msra.mxu0 0.0
    %1382 = vmatprep.subr.mxu0 0.0
    %1383 = vmatpush1.msra.mxu0 0.0
    %1384 = vmatprep.subr.mxu0 0.0
    %1385 = vmatpush1.msra.mxu0 0.0
    %1386 = vmatprep.subr.mxu0 0.0
    %1387 = vmatpush1.msra.mxu0 0.0
    %1388 = vmatprep.subr.mxu0 0.0
    %1389 = vmatpush1.msra.mxu0 0.0
    %1390 = vmatprep.subr.mxu0 0.0
    %1391 = vmatpush1.msra.mxu0 0.0
    %1392 = vmatprep.subr.mxu0 0.0
    %1393 = vmatpush1.msra.mxu0 0.0
    %1394 = vmatprep.subr.mxu0 0.0
    %1395 = vmatpush1.msra.mxu0 0.0
    %1396 = vmatprep.subr.mxu0 0.0
    %1397 = vmatpush1.msra.mxu0 0.0
    %1398 = vmatprep.subr.mxu0 0.0
    %1399 = vmatpush1.msra.mxu0 0.0
    %1400 = vmatprep.subr.mxu0 0.0
    %1401 = vmatpush1.msra.mxu0 0.0
    %1402 = vmatprep.subr.mxu0 0.0
    %1403 = vmatpush1.msra.mxu0 0.0
    %1404 = vmatprep.subr.mxu0 0.0
    %1405 = vmatpush1.msra.mxu0 0.0
    %1406 = vmatprep.subr.mxu0 0.0
    %1407 = vmatpush1.msra.mxu0 0.0
    %1408 = vmatprep.subr.mxu0 0.0
    %1409 = vmatpush1.msra.mxu0 0.0
    %1410 = vmatprep.subr.mxu0 0.0
    %1411 = vmatpush1.msra.mxu0 0.0
    %1412 = vmatprep.subr.mxu0 0.0
    %1413 = vmatpush1.msra.mxu0 0.0
    %1414 = vmatprep.subr.mxu0 0.0
    %1415 = vmatpush1.msra.mxu0 0.0
    %1416 = vmatprep.subr.mxu0 0.0
    %1417 = vmatpush1.msra.mxu0 0.0
    %1418 = vmatprep.subr.mxu0 0.0
    %1419 = vmatpush1.msra.mxu0 0.0
    %1420 = vmatprep.subr.mxu0 0.0
    %1421 = vmatpush1.msra.mxu0 0.0
    %1422 = vmatprep.subr.mxu0 0.0
    %1423 = vmatpush1.msra.mxu0 0.0
    %1424 = vmatprep.subr.mxu0 0.0
    %1425 = vmatpush1.msra.mxu0 0.0
    %1426 = vmatprep.subr.mxu0 0.0
    %1427 = vmatpush1.msra.mxu0 0.0
    %1428 = vmatprep.subr.mxu0 0.0
    %1429 = vmatpush1.msra.mxu0 0.0
    %1430 = vmatprep.subr.mxu0 0.0
    %1431 = vmatpush1.msra.mxu0 0.0
    %1432 = vmatprep.subr.mxu0 0.0
    %1433 = vmatpush1.msra.mxu0 0.0
    %1434 = vmatprep.mubr.f32.mxu0 0.0
    %1435 = vmatmul.mubr.f32.gmra.mrb[0].mxu0 %v1368
    %v1436 = vpop.f32.mrb[0].mxu0
    %v1437 = vadd.f32 0.0, %v1436
    %v1438 = vpop.f32.mrb[0].mxu0
    %1439 = vdwg.mxu0
    %v1440 = vadd.f32 %v1264, %v1437
    %v1441 = vxor.u32 %v1440, 2147483648
    %v1442 = vmul.f32 %v1441, 1.442695
    %v1443 = vpow.pop %v1442
    %v1444 = vadd.f32 %v1443, 1.0
    %v1445 = vrcp.pop %v1444
    %v1446 = vmul.f32 1.0, %v1445
    %v1447 = vtanh.pop %v1440
    %v1448 = vmul.f32 %v1446, %v1256
    %1450 = vrot.lane.b32.xlu0 %v1447, 64
    %v1451 = vpop.permute.xlu0 %1450
    %v1453 = vmul.f32 %v1446, %v1451
    %1455 = vrot.lane.b32.xlu0 %v1453, 32
    %v1456 = vpop.permute.xlu0 %1455
    %v1458 = vadd.f32 %v1448, %v1456
    %v1459 = vtanh.pop %v1458
    %1461 = vrot.lane.b32.xlu0 %v1459, 64
    %v1462 = vpop.permute.xlu0 %1461
    %v1464 = vmul.f32 %v1446, %v1462
    %v1465 = vld [vmem:[%s443] sm:$0xff]
    %v1466 = vld [vmem:[%s439 + $0x8] sm:$0xff]
    %1468 = vrot.lane.b32.xlu0 %v1364, 32
    %v1469 = vpop.permute.xlu0 %1468
    %v1470 = vsel %vm243, %v1469, 0
    %1472 = vmatprep.subr.mxu0 0.0
    %1473 = vmatpush1.msra.mxu0 %v227
    %1474 = vmatprep.subr.mxu0 0.0
    %1475 = vmatpush1.msra.mxu0 %v228
    %1476 = vmatprep.subr.mxu0 0.0
    %1477 = vmatpush1.msra.mxu0 %v229
    %1478 = vmatprep.subr.mxu0 0.0
    %1479 = vmatpush1.msra.mxu0 %v230
    %1480 = vmatprep.subr.mxu0 0.0
    %1481 = vmatpush1.msra.mxu0 0.0
    %1482 = vmatprep.subr.mxu0 0.0
    %1483 = vmatpush1.msra.mxu0 0.0
    %1484 = vmatprep.subr.mxu0 0.0
    %1485 = vmatpush1.msra.mxu0 0.0
    %1486 = vmatprep.subr.mxu0 0.0
    %1487 = vmatpush1.msra.mxu0 0.0
    %1488 = vmatprep.subr.mxu0 0.0
    %1489 = vmatpush1.msra.mxu0 0.0
    %1490 = vmatprep.subr.mxu0 0.0
    %1491 = vmatpush1.msra.mxu0 0.0
    %1492 = vmatprep.subr.mxu0 0.0
    %1493 = vmatpush1.msra.mxu0 0.0
    %1494 = vmatprep.subr.mxu0 0.0
    %1495 = vmatpush1.msra.mxu0 0.0
    %1496 = vmatprep.subr.mxu0 0.0
    %1497 = vmatpush1.msra.mxu0 0.0
    %1498 = vmatprep.subr.mxu0 0.0
    %1499 = vmatpush1.msra.mxu0 0.0
    %1500 = vmatprep.subr.mxu0 0.0
    %1501 = vmatpush1.msra.mxu0 0.0
    %1502 = vmatprep.subr.mxu0 0.0
    %1503 = vmatpush1.msra.mxu0 0.0
    %1504 = vmatprep.subr.mxu0 0.0
    %1505 = vmatpush1.msra.mxu0 0.0
    %1506 = vmatprep.subr.mxu0 0.0
    %1507 = vmatpush1.msra.mxu0 0.0
    %1508 = vmatprep.subr.mxu0 0.0
    %1509 = vmatpush1.msra.mxu0 0.0
    %1510 = vmatprep.subr.mxu0 0.0
    %1511 = vmatpush1.msra.mxu0 0.0
    %1512 = vmatprep.subr.mxu0 0.0
    %1513 = vmatpush1.msra.mxu0 0.0
    %1514 = vmatprep.subr.mxu0 0.0
    %1515 = vmatpush1.msra.mxu0 0.0
    %1516 = vmatprep.subr.mxu0 0.0
    %1517 = vmatpush1.msra.mxu0 0.0
    %1518 = vmatprep.subr.mxu0 0.0
    %1519 = vmatpush1.msra.mxu0 0.0
    %1520 = vmatprep.subr.mxu0 0.0
    %1521 = vmatpush1.msra.mxu0 0.0
    %1522 = vmatprep.subr.mxu0 0.0
    %1523 = vmatpush1.msra.mxu0 0.0
    %1524 = vmatprep.subr.mxu0 0.0
    %1525 = vmatpush1.msra.mxu0 0.0
    %1526 = vmatprep.subr.mxu0 0.0
    %1527 = vmatpush1.msra.mxu0 0.0
    %1528 = vmatprep.subr.mxu0 0.0
    %1529 = vmatpush1.msra.mxu0 0.0
    %1530 = vmatprep.subr.mxu0 0.0
    %1531 = vmatpush1.msra.mxu0 0.0
    %1532 = vmatprep.subr.mxu0 0.0
    %1533 = vmatpush1.msra.mxu0 0.0
    %1534 = vmatprep.subr.mxu0 0.0
    %1535 = vmatpush1.msra.mxu0 0.0
    %1536 = vmatprep.mubr.f32.mxu0 0.0
    %1537 = vmatmul.mubr.f32.gmra.mrb[0].mxu0 %v1470
    %v1538 = vpop.f32.mrb[0].mxu0
    %v1539 = vadd.f32 0.0, %v1538
    %v1540 = vpop.f32.mrb[0].mxu0
    %1541 = vdwg.mxu0
    %v1542 = vadd.f32 %v1465, %v1539
    %v1543 = vxor.u32 %v1542, 2147483648
    %v1544 = vmul.f32 %v1543, 1.442695
    %v1545 = vpow.pop %v1544
    %v1546 = vadd.f32 %v1545, 1.0
    %v1547 = vrcp.pop %v1546
    %v1548 = vmul.f32 1.0, %v1547
    %v1549 = vtanh.pop %v1542
    %v1550 = vmul.f32 %v1548, %v1358
    %1552 = vrot.lane.b32.xlu0 %v1549, 64
    %v1553 = vpop.permute.xlu0 %1552
    %v1555 = vmul.f32 %v1548, %v1553
    %1557 = vrot.lane.b32.xlu0 %v1555, 32
    %v1558 = vpop.permute.xlu0 %1557
    %v1560 = vadd.f32 %v1550, %v1558
    %v1561 = vtanh.pop %v1560
    %1563 = vrot.lane.b32.xlu0 %v1561, 64
    %v1564 = vpop.permute.xlu0 %1563
    %v1566 = vmul.f32 %v1548, %v1564
    %1568 = vrot.lane.b32.xlu0 %v1464, 32
    %v1569 = vpop.permute.xlu0 %1568
    %v1570 = vsel %vm243, %v1569, 0
    %1572 = vmatprep.subr.mxu0 0.0
    %1573 = vmatpush1.msra.mxu0 %v231
    %1574 = vmatprep.subr.mxu0 0.0
    %1575 = vmatpush1.msra.mxu0 %v232
    %1576 = vmatprep.subr.mxu0 0.0
    %1577 = vmatpush1.msra.mxu0 %v233
    %1578 = vmatprep.subr.mxu0 0.0
    %1579 = vmatpush1.msra.mxu0 %v234
    %1580 = vmatprep.subr.mxu0 0.0
    %1581 = vmatpush1.msra.mxu0 0.0
    %1582 = vmatprep.subr.mxu0 0.0
    %1583 = vmatpush1.msra.mxu0 0.0
    %1584 = vmatprep.subr.mxu0 0.0
    %1585 = vmatpush1.msra.mxu0 0.0
    %1586 = vmatprep.subr.mxu0 0.0
    %1587 = vmatpush1.msra.mxu0 0.0
    %1588 = vmatprep.subr.mxu0 0.0
    %1589 = vmatpush1.msra.mxu0 0.0
    %1590 = vmatprep.subr.mxu0 0.0
    %1591 = vmatpush1.msra.mxu0 0.0
    %1592 = vmatprep.subr.mxu0 0.0
    %1593 = vmatpush1.msra.mxu0 0.0
    %1594 = vmatprep.subr.mxu0 0.0
    %1595 = vmatpush1.msra.mxu0 0.0
    %1596 = vmatprep.subr.mxu0 0.0
    %1597 = vmatpush1.msra.mxu0 0.0
    %1598 = vmatprep.subr.mxu0 0.0
    %1599 = vmatpush1.msra.mxu0 0.0
    %1600 = vmatprep.subr.mxu0 0.0
    %1601 = vmatpush1.msra.mxu0 0.0
    %1602 = vmatprep.subr.mxu0 0.0
    %1603 = vmatpush1.msra.mxu0 0.0
    %1604 = vmatprep.subr.mxu0 0.0
    %1605 = vmatpush1.msra.mxu0 0.0
    %1606 = vmatprep.subr.mxu0 0.0
    %1607 = vmatpush1.msra.mxu0 0.0
    %1608 = vmatprep.subr.mxu0 0.0
    %1609 = vmatpush1.msra.mxu0 0.0
    %1610 = vmatprep.subr.mxu0 0.0
    %1611 = vmatpush1.msra.mxu0 0.0
    %1612 = vmatprep.subr.mxu0 0.0
    %1613 = vmatpush1.msra.mxu0 0.0
    %1614 = vmatprep.subr.mxu0 0.0
    %1615 = vmatpush1.msra.mxu0 0.0
    %1616 = vmatprep.subr.mxu0 0.0
    %1617 = vmatpush1.msra.mxu0 0.0
    %1618 = vmatprep.subr.mxu0 0.0
    %1619 = vmatpush1.msra.mxu0 0.0
    %1620 = vmatprep.subr.mxu0 0.0
    %1621 = vmatpush1.msra.mxu0 0.0
    %1622 = vmatprep.subr.mxu0 0.0
    %1623 = vmatpush1.msra.mxu0 0.0
    %1624 = vmatprep.subr.mxu0 0.0
    %1625 = vmatpush1.msra.mxu0 0.0
    %1626 = vmatprep.subr.mxu0 0.0
    %1627 = vmatpush1.msra.mxu0 0.0
    %1628 = vmatprep.subr.mxu0 0.0
    %1629 = vmatpush1.msra.mxu0 0.0
    %1630 = vmatprep.subr.mxu0 0.0
    %1631 = vmatpush1.msra.mxu0 0.0
    %1632 = vmatprep.subr.mxu0 0.0
    %1633 = vmatpush1.msra.mxu0 0.0
    %1634 = vmatprep.subr.mxu0 0.0
    %1635 = vmatpush1.msra.mxu0 0.0
    %1636 = vmatprep.mubr.f32.mxu0 0.0
    %1637 = vmatmul.mubr.f32.gmra.mrb[0].mxu0 %v1570
    %v1638 = vpop.f32.mrb[0].mxu0
    %v1639 = vadd.f32 0.0, %v1638
    %v1640 = vpop.f32.mrb[0].mxu0
    %1641 = vdwg.mxu0
    %v1642 = vadd.f32 %v1466, %v1639
    %v1643 = vxor.u32 %v1642, 2147483648
    %v1644 = vmul.f32 %v1643, 1.442695
    %v1645 = vpow.pop %v1644
    %v1646 = vadd.f32 %v1645, 1.0
    %v1647 = vrcp.pop %v1646
    %v1648 = vmul.f32 1.0, %v1647
    %v1649 = vtanh.pop %v1642
    %v1650 = vmul.f32 %v1648, %v1458
    %1652 = vrot.lane.b32.xlu0 %v1649, 64
    %v1653 = vpop.permute.xlu0 %1652
    %v1655 = vmul.f32 %v1648, %v1653
    %1657 = vrot.lane.b32.xlu0 %v1655, 32
    %v1658 = vpop.permute.xlu0 %1657
    %v1660 = vadd.f32 %v1650, %v1658
    %v1661 = vtanh.pop %v1660
    %1663 = vrot.lane.b32.xlu0 %v1661, 64
    %v1664 = vpop.permute.xlu0 %1663
    %v1666 = vmul.f32 %v1648, %v1664
    %v1667 = vld [vmem:[%s241] sm:$0xff]
    %v1668 = vld [vmem:[%s237 + $0x8] sm:$0xff]
    %1670 = vrot.lane.b32.xlu0 %v1566, 32
    %v1671 = vpop.permute.xlu0 %1670
    %v1672 = vsel %vm243, %v1671, 0
    %1674 = vmatprep.subr.mxu0 0.0
    %1675 = vmatpush1.msra.mxu0 %v227
    %1676 = vmatprep.subr.mxu0 0.0
    %1677 = vmatpush1.msra.mxu0 %v228
    %1678 = vmatprep.subr.mxu0 0.0
    %1679 = vmatpush1.msra.mxu0 %v229
    %1680 = vmatprep.subr.mxu0 0.0
    %1681 = vmatpush1.msra.mxu0 %v230
    %1682 = vmatprep.subr.mxu0 0.0
    %1683 = vmatpush1.msra.mxu0 0.0
    %1684 = vmatprep.subr.mxu0 0.0
    %1685 = vmatpush1.msra.mxu0 0.0
    %1686 = vmatprep.subr.mxu0 0.0
    %1687 = vmatpush1.msra.mxu0 0.0
    %1688 = vmatprep.subr.mxu0 0.0
    %1689 = vmatpush1.msra.mxu0 0.0
    %1690 = vmatprep.subr.mxu0 0.0
    %1691 = vmatpush1.msra.mxu0 0.0
    %1692 = vmatprep.subr.mxu0 0.0
    %1693 = vmatpush1.msra.mxu0 0.0
    %1694 = vmatprep.subr.mxu0 0.0
    %1695 = vmatpush1.msra.mxu0 0.0
    %1696 = vmatprep.subr.mxu0 0.0
    %1697 = vmatpush1.msra.mxu0 0.0
    %1698 = vmatprep.subr.mxu0 0.0
    %1699 = vmatpush1.msra.mxu0 0.0
    %1700 = vmatprep.subr.mxu0 0.0
    %1701 = vmatpush1.msra.mxu0 0.0
    %1702 = vmatprep.subr.mxu0 0.0
    %1703 = vmatpush1.msra.mxu0 0.0
    %1704 = vmatprep.subr.mxu0 0.0
    %1705 = vmatpush1.msra.mxu0 0.0
    %1706 = vmatprep.subr.mxu0 0.0
    %1707 = vmatpush1.msra.mxu0 0.0
    %1708 = vmatprep.subr.mxu0 0.0
    %1709 = vmatpush1.msra.mxu0 0.0
    %1710 = vmatprep.subr.mxu0 0.0
    %1711 = vmatpush1.msra.mxu0 0.0
    %1712 = vmatprep.subr.mxu0 0.0
    %1713 = vmatpush1.msra.mxu0 0.0
    %1714 = vmatprep.subr.mxu0 0.0
    %1715 = vmatpush1.msra.mxu0 0.0
    %1716 = vmatprep.subr.mxu0 0.0
    %1717 = vmatpush1.msra.mxu0 0.0
    %1718 = vmatprep.subr.mxu0 0.0
    %1719 = vmatpush1.msra.mxu0 0.0
    %1720 = vmatprep.subr.mxu0 0.0
    %1721 = vmatpush1.msra.mxu0 0.0
    %1722 = vmatprep.subr.mxu0 0.0
    %1723 = vmatpush1.msra.mxu0 0.0
    %1724 = vmatprep.subr.mxu0 0.0
    %1725 = vmatpush1.msra.mxu0 0.0
    %1726 = vmatprep.subr.mxu0 0.0
    %1727 = vmatpush1.msra.mxu0 0.0
    %1728 = vmatprep.subr.mxu0 0.0
    %1729 = vmatpush1.msra.mxu0 0.0
    %1730 = vmatprep.subr.mxu0 0.0
    %1731 = vmatpush1.msra.mxu0 0.0
    %1732 = vmatprep.subr.mxu0 0.0
    %1733 = vmatpush1.msra.mxu0 0.0
    %1734 = vmatprep.subr.mxu0 0.0
    %1735 = vmatpush1.msra.mxu0 0.0
    %1736 = vmatprep.subr.mxu0 0.0
    %1737 = vmatpush1.msra.mxu0 0.0
    %1738 = vmatprep.mubr.f32.mxu0 0.0
    %1739 = vmatmul.mubr.f32.gmra.mrb[0].mxu0 %v1672
    %v1740 = vpop.f32.mrb[0].mxu0
    %v1741 = vadd.f32 0.0, %v1740
    %v1742 = vpop.f32.mrb[0].mxu0
    %1743 = vdwg.mxu0
    %v1744 = vadd.f32 %v1667, %v1741
    %v1745 = vxor.u32 %v1744, 2147483648
    %v1746 = vmul.f32 %v1745, 1.442695
    %v1747 = vpow.pop %v1746
    %v1748 = vadd.f32 %v1747, 1.0
    %v1749 = vrcp.pop %v1748
    %v1750 = vmul.f32 1.0, %v1749
    %v1751 = vtanh.pop %v1744
    %v1752 = vmul.f32 %v1750, %v1560
    %1754 = vrot.lane.b32.xlu0 %v1751, 64
    %v1755 = vpop.permute.xlu0 %1754
    %v1757 = vmul.f32 %v1750, %v1755
    %1759 = vrot.lane.b32.xlu0 %v1757, 32
    %v1760 = vpop.permute.xlu0 %1759
    %v1762 = vadd.f32 %v1752, %v1760
    %v1763 = vtanh.pop %v1762
    %1765 = vrot.lane.b32.xlu0 %v1763, 64
    %v1766 = vpop.permute.xlu0 %1765
    %v1768 = vmul.f32 %v1750, %v1766
    %1770 = vrot.lane.b32.xlu0 %v1666, 32
    %v1771 = vpop.permute.xlu0 %1770
    %v1772 = vsel %vm243, %v1771, 0
    %1774 = vmatprep.subr.mxu0 0.0
    %1775 = vmatpush1.msra.mxu0 %v231
    %1776 = vmatprep.subr.mxu0 0.0
    %1777 = vmatpush1.msra.mxu0 %v232
    %1778 = vmatprep.subr.mxu0 0.0
    %1779 = vmatpush1.msra.mxu0 %v233
    %1780 = vmatprep.subr.mxu0 0.0
    %1781 = vmatpush1.msra.mxu0 %v234
    %1782 = vmatprep.subr.mxu0 0.0
    %1783 = vmatpush1.msra.mxu0 0.0
    %1784 = vmatprep.subr.mxu0 0.0
    %1785 = vmatpush1.msra.mxu0 0.0
    %1786 = vmatprep.subr.mxu0 0.0
    %1787 = vmatpush1.msra.mxu0 0.0
    %1788 = vmatprep.subr.mxu0 0.0
    %1789 = vmatpush1.msra.mxu0 0.0
    %1790 = vmatprep.subr.mxu0 0.0
    %1791 = vmatpush1.msra.mxu0 0.0
    %1792 = vmatprep.subr.mxu0 0.0
    %1793 = vmatpush1.msra.mxu0 0.0
    %1794 = vmatprep.subr.mxu0 0.0
    %1795 = vmatpush1.msra.mxu0 0.0
    %1796 = vmatprep.subr.mxu0 0.0
    %1797 = vmatpush1.msra.mxu0 0.0
    %1798 = vmatprep.subr.mxu0 0.0
    %1799 = vmatpush1.msra.mxu0 0.0
    %1800 = vmatprep.subr.mxu0 0.0
    %1801 = vmatpush1.msra.mxu0 0.0
    %1802 = vmatprep.subr.mxu0 0.0
    %1803 = vmatpush1.msra.mxu0 0.0
    %1804 = vmatprep.subr.mxu0 0.0
    %1805 = vmatpush1.msra.mxu0 0.0
    %1806 = vmatprep.subr.mxu0 0.0
    %1807 = vmatpush1.msra.mxu0 0.0
    %1808 = vmatprep.subr.mxu0 0.0
    %1809 = vmatpush1.msra.mxu0 0.0
    %1810 = vmatprep.subr.mxu0 0.0
    %1811 = vmatpush1.msra.mxu0 0.0
    %1812 = vmatprep.subr.mxu0 0.0
    %1813 = vmatpush1.msra.mxu0 0.0
    %1814 = vmatprep.subr.mxu0 0.0
    %1815 = vmatpush1.msra.mxu0 0.0
    %1816 = vmatprep.subr.mxu0 0.0
    %1817 = vmatpush1.msra.mxu0 0.0
    %1818 = vmatprep.subr.mxu0 0.0
    %1819 = vmatpush1.msra.mxu0 0.0
    %1820 = vmatprep.subr.mxu0 0.0
    %1821 = vmatpush1.msra.mxu0 0.0
    %1822 = vmatprep.subr.mxu0 0.0
    %1823 = vmatpush1.msra.mxu0 0.0
    %1824 = vmatprep.subr.mxu0 0.0
    %1825 = vmatpush1.msra.mxu0 0.0
    %1826 = vmatprep.subr.mxu0 0.0
    %1827 = vmatpush1.msra.mxu0 0.0
    %1828 = vmatprep.subr.mxu0 0.0
    %1829 = vmatpush1.msra.mxu0 0.0
    %1830 = vmatprep.subr.mxu0 0.0
    %1831 = vmatpush1.msra.mxu0 0.0
    %1832 = vmatprep.subr.mxu0 0.0
    %1833 = vmatpush1.msra.mxu0 0.0
    %1834 = vmatprep.subr.mxu0 0.0
    %1835 = vmatpush1.msra.mxu0 0.0
    %1836 = vmatprep.subr.mxu0 0.0
    %1837 = vmatpush1.msra.mxu0 0.0
    %1838 = vmatprep.mubr.f32.mxu0 0.0
    %1839 = vmatmul.mubr.f32.gmra.mrb[0].mxu0 %v1772
    %v1840 = vpop.f32.mrb[0].mxu0
    %v1841 = vadd.f32 0.0, %v1840
    %v1842 = vpop.f32.mrb[0].mxu0
    %1843 = vdwg.mxu0
    %v1844 = vadd.f32 %v1668, %v1841
    %v1845 = vxor.u32 %v1844, 2147483648
    %v1846 = vmul.f32 %v1845, 1.442695
    %v1847 = vpow.pop %v1846
    %v1848 = vadd.f32 %v1847, 1.0
    %v1849 = vrcp.pop %v1848
    %v1850 = vmul.f32 1.0, %v1849
    %v1851 = vtanh.pop %v1844
    %v1852 = vmul.f32 %v1850, %v1660
    %1854 = vrot.lane.b32.xlu0 %v1851, 64
    %v1855 = vpop.permute.xlu0 %1854
    %v1857 = vmul.f32 %v1850, %v1855
    %1859 = vrot.lane.b32.xlu0 %v1857, 32
    %v1860 = vpop.permute.xlu0 %1859
    %v1862 = vadd.f32 %v1852, %v1860
    %v1863 = vtanh.pop %v1862
    %1865 = vrot.lane.b32.xlu0 %v1863, 64
    %v1866 = vpop.permute.xlu0 %1865
    %v1868 = vmul.f32 %v1850, %v1866
    %v1869 = vld [vmem:[%s4] sm:$0xff]
    %v1870 = vld [vmem:[%s4 + $0x8] sm:$0xff]
    %v1871 = vld [vmem:[%s4 + $0x10] sm:$0xff]
    %v1872 = vld [vmem:[%s4 + $0x18] sm:$0xff]
    %v1873 = vld [vmem:[%s4 + $0x20] sm:$0xff]
    %v1874 = vld [vmem:[%s4 + $0x28] sm:$0xff]
    %v1875 = vld [vmem:[%s4 + $0x30] sm:$0xff]
    %v1876 = vld [vmem:[%s4 + $0x38] sm:$0xff]
    %1878 = vrot.lane.b32.xlu0 %v1868, 32
    %v1879 = vpop.permute.xlu0 %1878
    %v1880 = vsel %vm243, %v1879, 0
    %1882 = vmatprep.subr.mxu0 0.0
    %1883 = vmatpush1.msra.mxu0 %v1873
    %1884 = vmatprep.subr.mxu0 0.0
    %1885 = vmatpush1.msra.mxu0 %v1874
    %1886 = vmatprep.subr.mxu0 0.0
    %1887 = vmatpush1.msra.mxu0 %v1875
    %1888 = vmatprep.subr.mxu0 0.0
    %1889 = vmatpush1.msra.mxu0 %v1876
    %1890 = vmatprep.subr.mxu0 0.0
    %1891 = vmatpush1.msra.mxu0 0.0
    %1892 = vmatprep.subr.mxu0 0.0
    %1893 = vmatpush1.msra.mxu0 0.0
    %1894 = vmatprep.subr.mxu0 0.0
    %1895 = vmatpush1.msra.mxu0 0.0
    %1896 = vmatprep.subr.mxu0 0.0
    %1897 = vmatpush1.msra.mxu0 0.0
    %1898 = vmatprep.subr.mxu0 0.0
    %1899 = vmatpush1.msra.mxu0 0.0
    %1900 = vmatprep.subr.mxu0 0.0
    %1901 = vmatpush1.msra.mxu0 0.0
    %1902 = vmatprep.subr.mxu0 0.0
    %1903 = vmatpush1.msra.mxu0 0.0
    %1904 = vmatprep.subr.mxu0 0.0
    %1905 = vmatpush1.msra.mxu0 0.0
    %1906 = vmatprep.subr.mxu0 0.0
    %1907 = vmatpush1.msra.mxu0 0.0
    %1908 = vmatprep.subr.mxu0 0.0
    %1909 = vmatpush1.msra.mxu0 0.0
    %1910 = vmatprep.subr.mxu0 0.0
    %1911 = vmatpush1.msra.mxu0 0.0
    %1912 = vmatprep.subr.mxu0 0.0
    %1913 = vmatpush1.msra.mxu0 0.0
    %1914 = vmatprep.subr.mxu0 0.0
    %1915 = vmatpush1.msra.mxu0 0.0
    %1916 = vmatprep.subr.mxu0 0.0
    %1917 = vmatpush1.msra.mxu0 0.0
    %1918 = vmatprep.subr.mxu0 0.0
    %1919 = vmatpush1.msra.mxu0 0.0
    %1920 = vmatprep.subr.mxu0 0.0
    %1921 = vmatpush1.msra.mxu0 0.0
    %1922 = vmatprep.subr.mxu0 0.0
    %1923 = vmatpush1.msra.mxu0 0.0
    %1924 = vmatprep.subr.mxu0 0.0
    %1925 = vmatpush1.msra.mxu0 0.0
    %1926 = vmatprep.subr.mxu0 0.0
    %1927 = vmatpush1.msra.mxu0 0.0
    %1928 = vmatprep.subr.mxu0 0.0
    %1929 = vmatpush1.msra.mxu0 0.0
    %1930 = vmatprep.subr.mxu0 0.0
    %1931 = vmatpush1.msra.mxu0 0.0
    %1932 = vmatprep.subr.mxu0 0.0
    %1933 = vmatpush1.msra.mxu0 0.0
    %1934 = vmatprep.subr.mxu0 0.0
    %1935 = vmatpush1.msra.mxu0 0.0
    %1936 = vmatprep.subr.mxu0 0.0
    %1937 = vmatpush1.msra.mxu0 0.0
    %1938 = vmatprep.subr.mxu0 0.0
    %1939 = vmatpush1.msra.mxu0 0.0
    %1940 = vmatprep.subr.mxu0 0.0
    %1941 = vmatpush1.msra.mxu0 0.0
    %1942 = vmatprep.subr.mxu0 0.0
    %1943 = vmatpush1.msra.mxu0 0.0
    %1944 = vmatprep.subr.mxu0 0.0
    %1945 = vmatpush1.msra.mxu0 0.0
    %1946 = vmatprep.mubr.f32.mxu0 0.0
    %1947 = vmatmul.mubr.f32.gmra.mrb[0].mxu0 %v1880
    %v1948 = vpop.f32.mrb[0].mxu0
    %v1949 = vadd.f32 0.0, %v1948
    %v1950 = vpop.f32.mrb[0].mxu0
    %1951 = vdwg.mxu0
    %1953 = vrot.lane.b32.xlu0 %v1768, 32
    %v1954 = vpop.permute.xlu0 %1953
    %v1955 = vsel %vm243, %v1954, 0
    %1957 = vmatprep.subr.mxu0 0.0
    %1958 = vmatpush1.msra.mxu0 %v1869
    %1959 = vmatprep.subr.mxu0 0.0
    %1960 = vmatpush1.msra.mxu0 %v1870
    %1961 = vmatprep.subr.mxu0 0.0
    %1962 = vmatpush1.msra.mxu0 %v1871
    %1963 = vmatprep.subr.mxu0 0.0
    %1964 = vmatpush1.msra.mxu0 %v1872
    %1965 = vmatprep.subr.mxu0 0.0
    %1966 = vmatpush1.msra.mxu0 0.0
    %1967 = vmatprep.subr.mxu0 0.0
    %1968 = vmatpush1.msra.mxu0 0.0
    %1969 = vmatprep.subr.mxu0 0.0
    %1970 = vmatpush1.msra.mxu0 0.0
    %1971 = vmatprep.subr.mxu0 0.0
    %1972 = vmatpush1.msra.mxu0 0.0
    %1973 = vmatprep.subr.mxu0 0.0
    %1974 = vmatpush1.msra.mxu0 0.0
    %1975 = vmatprep.subr.mxu0 0.0
    %1976 = vmatpush1.msra.mxu0 0.0
    %1977 = vmatprep.subr.mxu0 0.0
    %1978 = vmatpush1.msra.mxu0 0.0
    %1979 = vmatprep.subr.mxu0 0.0
    %1980 = vmatpush1.msra.mxu0 0.0
    %1981 = vmatprep.subr.mxu0 0.0
    %1982 = vmatpush1.msra.mxu0 0.0
    %1983 = vmatprep.subr.mxu0 0.0
    %1984 = vmatpush1.msra.mxu0 0.0
    %1985 = vmatprep.subr.mxu0 0.0
    %1986 = vmatpush1.msra.mxu0 0.0
    %1987 = vmatprep.subr.mxu0 0.0
    %1988 = vmatpush1.msra.mxu0 0.0
    %1989 = vmatprep.subr.mxu0 0.0
    %1990 = vmatpush1.msra.mxu0 0.0
    %1991 = vmatprep.subr.mxu0 0.0
    %1992 = vmatpush1.msra.mxu0 0.0
    %1993 = vmatprep.subr.mxu0 0.0
    %1994 = vmatpush1.msra.mxu0 0.0
    %1995 = vmatprep.subr.mxu0 0.0
    %1996 = vmatpush1.msra.mxu0 0.0
    %1997 = vmatprep.subr.mxu0 0.0
    %1998 = vmatpush1.msra.mxu0 0.0
    %1999 = vmatprep.subr.mxu0 0.0
    %2000 = vmatpush1.msra.mxu0 0.0
    %2001 = vmatprep.subr.mxu0 0.0
    %2002 = vmatpush1.msra.mxu0 0.0
    %2003 = vmatprep.subr.mxu0 0.0
    %2004 = vmatpush1.msra.mxu0 0.0
    %2005 = vmatprep.subr.mxu0 0.0
    %2006 = vmatpush1.msra.mxu0 0.0
    %2007 = vmatprep.subr.mxu0 0.0
    %2008 = vmatpush1.msra.mxu0 0.0
    %2009 = vmatprep.subr.mxu0 0.0
    %2010 = vmatpush1.msra.mxu0 0.0
    %2011 = vmatprep.subr.mxu0 0.0
    %2012 = vmatpush1.msra.mxu0 0.0
    %2013 = vmatprep.subr.mxu0 0.0
    %2014 = vmatpush1.msra.mxu0 0.0
    %2015 = vmatprep.subr.mxu0 0.0
    %2016 = vmatpush1.msra.mxu0 0.0
    %2017 = vmatprep.subr.mxu0 0.0
    %2018 = vmatpush1.msra.mxu0 0.0
    %2019 = vmatprep.subr.mxu0 0.0
    %2020 = vmatpush1.msra.mxu0 0.0
    %2021 = vmatprep.mubr.f32.mxu0 0.0
    %2022 = vmatmul.mubr.f32.gmra.mrb[0].mxu0 %v1955
    %v2023 = vpop.f32.mrb[0].mxu0
    %v2024 = vadd.f32 %v1949, %v2023
    %v2025 = vpop.f32.mrb[0].mxu0
    %2026 = vdwg.mxu0
    %v2027 = vld [vmem:[%s5] sm:$0x1]
    %v2029 = vlaneseq
    %v2030 = vshrl.u32 %v2029, 7
    %v2031 = vsub.s32 0, %v2030
    %v2032 = vrot.slane %v2027, %v2031
    %v2034 = vadd.f32 %v2024, %v2032
    %2035 = vst [vmem:[#allocation8] sm:$0xff] %v2034
    // Predicated region
    $region34: #{tpu_custom_call.1} parent=1 // pred_check
      _
    $region35: #{tpu_custom_call.1} parent=1 // pred_check_branch
      %2037 = sbr.rel (0) target = $region37
    $region36: #{tpu_custom_call.1} parent=1 // pred_region
      %s2039 = ssub.s32 128, 128
      %2040 = vsyncadd [#allocation5], %s2039
      %s2042 = sshll.u32 [#allocation8], 4
      %s2043 = int_to_ptr.vmem [resolvable:$true] %s2042
      %2045 = dma.vmem_to_hbm [thread:$0]  %s2043, 128, %s6, [#allocation5]
    $region37: #{tpu_custom_call.1} parent=1 // pred_fallthru
      _
    // Predicated region
    $region38: #{tpu_custom_call.1} parent=1 // pred_check
      _
    $region39: #{tpu_custom_call.1} parent=1 // pred_check_branch
      %2047 = sbr.rel (0) target = $region41
    $region40: #{tpu_custom_call.1} parent=1 // pred_region
      %2048 = dma.done [#allocation5], 128
    $region41: #{tpu_custom_call.1} parent=1 // pred_fallthru
      _
    %2049 = vsyncpa [#allocation4], 1
    %2050 = vsyncpa [#allocation7], 1
    %2051 = vsyncpa [#allocation5], 1

// kernel: tpu_custom_call.1
$region0: #{tpu_custom_call.1}
  #allocation0 [shape = 'u32[]', space=smem, size = 0x4, offset = 0x4, fixed_abs, tag = 'smem constant byte address 0x4 - core index']
  #allocation1 [shape = 'u32[144,128]{1,0:T(1,128)}', space=vmem, size = 0x12000, scoped, tag = 'internal scratch']
  #allocation2 [shape = 'f32[64,256]{1,0:T(8,128)}', space=vmem, size = 0x10000, scoped, tag = 'scratch operand']
  %s0 = inlined_call_operand.vmem [shape: f32[1,64,17], index: 0, kind: input, shape index: {}]
  %s1 = inlined_call_operand.hbm [shape: f32[17,256], index: 1, kind: input, shape index: {}]
  %s2 = inlined_call_operand.vmem [shape: f32[32,128], index: 2, kind: input, shape index: {}]
  %s3 = inlined_call_operand.hbm [shape: f32[32,128], index: 3, kind: input, shape index: {}]
  %s4 = inlined_call_operand.vmem [shape: f32[64,128], index: 4, kind: input, shape index: {}]
  %s5 = inlined_call_operand.vmem [shape: f32[1,128], index: 5, kind: input, shape index: {}]
  %s6 = inlined_call_operand.hbm [shape: f32[8,128], index: 6, kind: output, shape index: {}]
  %s7 = sld [smem:[#allocation0]]
  $region42: #{tpu_custom_call.1} parent=0
    _
  %s9 = ssub.s32 1, %s7
  %s10 = scalar_select 0, %s9, %s7
  $region1: #{tpu_custom_call.1} parent=0
    #allocation3 [shape = 'u8[24576]{0}', space=vmem, size = 0x6000, scoped, tag = 'input window, operand 1, single buffered']
    #allocation4 [shape = 's32[1]{0}', space=sflag, size = 0x4, scoped, tag = 'scoped memory for tpu_custom_call.1']
    #allocation5 [shape = 's32[1]{0}', space=sflag, size = 0x4, scoped, tag = 'scoped memory for tpu_custom_call.1']
    #allocation6 [shape = 'u8[16384]{0}', space=vmem, size = 0x4000, scoped, tag = 'input window, operand 3, single buffered']
    #allocation7 [shape = 's32[1]{0}', space=sflag, size = 0x4, scoped, tag = 'scoped memory for tpu_custom_call.1']
    #allocation8 [shape = 'u8[4096]{0}', space=vmem, size = 0x1000, scoped, tag = 'output window, operand 0, single buffered']
    %11 = vsyncpa [#allocation4], 0
    %12 = vsyncpa [#allocation7], 0
    %13 = vsyncpa [#allocation5], 0
    // Predicated region
    $region2: #{tpu_custom_call.1} parent=1 // pred_check
      _
    $region3: #{tpu_custom_call.1} parent=1 // pred_check_branch
      %15 = sbr.rel (0) target = $region5
    $region4: #{tpu_custom_call.1} parent=1 // pred_region
      _
    $region5: #{tpu_custom_call.1} parent=1 // pred_fallthru
      _
    // Predicated region
    $region6: #{tpu_custom_call.1} parent=1 // pred_check
      _
    $region7: #{tpu_custom_call.1} parent=1 // pred_check_branch
      %17 = sbr.rel (0) target = $region9
    $region8: #{tpu_custom_call.1} parent=1 // pred_region
      %s19 = ssub.s32 768, 768
      %20 = vsyncadd [#allocation4], %s19
      %s21 = sshll.u32 [#allocation3], 4
      %s22 = int_to_ptr.vmem [resolvable:$true] %s21
      %27 = dma.hbm_to_vmem [thread:$0]  %s1, 768, %s22, [#allocation4], 256, 256, 16
    $region9: #{tpu_custom_call.1} parent=1 // pred_fallthru
      _
    // Predicated region
    $region10: #{tpu_custom_call.1} parent=1 // pred_check
      _
    $region11: #{tpu_custom_call.1} parent=1 // pred_check_branch
      %29 = sbr.rel (0) target = $region13
    $region12: #{tpu_custom_call.1} parent=1 // pred_region
      _
    $region13: #{tpu_custom_call.1} parent=1 // pred_fallthru
      _
    // Predicated region
    $region14: #{tpu_custom_call.1} parent=1 // pred_check
      _
    $region15: #{tpu_custom_call.1} parent=1 // pred_check_branch
      %31 = sbr.rel (0) target = $region17
    $region16: #{tpu_custom_call.1} parent=1 // pred_region
      %s33 = ssub.s32 512, 512
      %34 = vsyncadd [#allocation7], %s33
      %s35 = sshll.u32 [#allocation6], 4
      %s36 = int_to_ptr.vmem [resolvable:$true] %s35
      %41 = dma.hbm_to_vmem [thread:$0]  %s3, 512, %s36, [#allocation7], 128, 128, 8
    $region17: #{tpu_custom_call.1} parent=1 // pred_fallthru
      _
    // Predicated region
    $region18: #{tpu_custom_call.1} parent=1 // pred_check
      _
    $region19: #{tpu_custom_call.1} parent=1 // pred_check_branch
      %43 = sbr.rel (0) target = $region21
    $region20: #{tpu_custom_call.1} parent=1 // pred_region
      _
    $region21: #{tpu_custom_call.1} parent=1 // pred_fallthru
      _
    // Predicated region
    $region22: #{tpu_custom_call.1} parent=1 // pred_check
      _
    $region23: #{tpu_custom_call.1} parent=1 // pred_check_branch
      %45 = sbr.rel (0) target = $region25
    $region24: #{tpu_custom_call.1} parent=1 // pred_region
      _
    $region25: #{tpu_custom_call.1} parent=1 // pred_fallthru
      _
    // Predicated region
    $region26: #{tpu_custom_call.1} parent=1 // pred_check
      _
    $region27: #{tpu_custom_call.1} parent=1 // pred_check_branch
      %47 = sbr.rel (0) target = $region29
    $region28: #{tpu_custom_call.1} parent=1 // pred_region
      %48 = dma.done [#allocation4], 768
    $region29: #{tpu_custom_call.1} parent=1 // pred_fallthru
      _
    // Predicated region
    $region30: #{tpu_custom_call.1} parent=1 // pred_check
      _
    $region31: #{tpu_custom_call.1} parent=1 // pred_check_branch
      %50 = sbr.rel (0) target = $region33
    $region32: #{tpu_custom_call.1} parent=1 // pred_region
      %51 = dma.done [#allocation7], 512
    $region33: #{tpu_custom_call.1} parent=1 // pred_fallthru
      _
    %v52 = vld [vmem:[%s0] sm:$0xff]
    %v53 = vld [vmem:[%s0 + $0x8] sm:$0xff]
    %v54 = vld [vmem:[%s0 + $0x10] sm:$0xff]
    %v55 = vld [vmem:[%s0 + $0x18] sm:$0xff]
    %v56 = vld [vmem:[%s0 + $0x20] sm:$0xff]
    %v57 = vld [vmem:[%s0 + $0x28] sm:$0xff]
    %v58 = vld [vmem:[%s0 + $0x30] sm:$0xff]
    %v59 = vld [vmem:[%s0 + $0x38] sm:$0xff]
    %v60 = vld [vmem:[#allocation3] sm:$0xff]
    %v61 = vld [vmem:[#allocation3 + $0x8] sm:$0xff]
    %v62 = vld [vmem:[#allocation3 + $0x10] sm:$0xff]
    %v63 = vld [vmem:[#allocation3 + $0x18] sm:$0xff]
    %v64 = vld [vmem:[#allocation3 + $0x20] sm:$0x1]
    %v65 = vld [vmem:[#allocation3 + $0x28] sm:$0x1]
    %vm66 = vcmask 138240
    %v68 = vsel %vm66, %v52, 0
    %v71 = vsel %vm66, %v53, 0
    %v74 = vsel %vm66, %v54, 0
    %v77 = vsel %vm66, %v55, 0
    %v80 = vsel %vm66, %v56, 0
    %v83 = vsel %vm66, %v57, 0
    %v86 = vsel %vm66, %v58, 0
    %v89 = vsel %vm66, %v59, 0
    %vm91 = vcmask 1040384
    %v93 = vsel %vm91, %v64, 0
    %v96 = vsel %vm91, %v65, 0
    %98 = vmatprep.subr.mxu0 %v61
    %99 = vmatpush1.msra.mxu0 %v60
    %100 = vmatprep.subr.mxu0 %v63
    %101 = vmatpush1.msra.mxu0 %v62
    %102 = vmatprep.subr.mxu0 %v96
    %103 = vmatpush1.msra.mxu0 %v93
    %104 = vmatprep.subr.mxu0 0.0
    %105 = vmatpush1.msra.mxu0 0.0
    %106 = vmatprep.subr.mxu0 0.0
    %107 = vmatpush1.msra.mxu0 0.0
    %108 = vmatprep.subr.mxu0 0.0
    %109 = vmatpush1.msra.mxu0 0.0
    %110 = vmatprep.subr.mxu0 0.0
    %111 = vmatpush1.msra.mxu0 0.0
    %112 = vmatprep.subr.mxu0 0.0
    %113 = vmatpush1.msra.mxu0 0.0
    %114 = vmatprep.subr.mxu0 0.0
    %115 = vmatpush1.msra.mxu0 0.0
    %116 = vmatprep.subr.mxu0 0.0
    %117 = vmatpush1.msra.mxu0 0.0
    %118 = vmatprep.subr.mxu0 0.0
    %119 = vmatpush1.msra.mxu0 0.0
    %120 = vmatprep.subr.mxu0 0.0
    %121 = vmatpush1.msra.mxu0 0.0
    %122 = vmatprep.subr.mxu0 0.0
    %123 = vmatpush1.msra.mxu0 0.0
    %124 = vmatprep.subr.mxu0 0.0
    %125 = vmatpush1.msra.mxu0 0.0
    %126 = vmatprep.subr.mxu0 0.0
    %127 = vmatpush1.msra.mxu0 0.0
    %128 = vmatprep.subr.mxu0 0.0
    %129 = vmatpush1.msra.mxu0 0.0
    %130 = vmatprep.subr.mxu0 0.0
    %131 = vmatpush1.msra.mxu0 0.0
    %132 = vmatprep.subr.mxu0 0.0
    %133 = vmatpush1.msra.mxu0 0.0
    %134 = vmatprep.subr.mxu0 0.0
    %135 = vmatpush1.msra.mxu0 0.0
    %136 = vmatprep.subr.mxu0 0.0
    %137 = vmatpush1.msra.mxu0 0.0
    %138 = vmatprep.subr.mxu0 0.0
    %139 = vmatpush1.msra.mxu0 0.0
    %140 = vmatprep.subr.mxu0 0.0
    %141 = vmatpush1.msra.mxu0 0.0
    %142 = vmatprep.subr.mxu0 0.0
    %143 = vmatpush1.msra.mxu0 0.0
    %144 = vmatprep.subr.mxu0 0.0
    %145 = vmatpush1.msra.mxu0 0.0
    %146 = vmatprep.subr.mxu0 0.0
    %147 = vmatpush1.msra.mxu0 0.0
    %148 = vmatprep.subr.mxu0 0.0
    %149 = vmatpush1.msra.mxu0 0.0
    %150 = vmatprep.subr.mxu0 0.0
    %151 = vmatpush1.msra.mxu0 0.0
    %152 = vmatprep.subr.mxu0 0.0
    %153 = vmatpush1.msra.mxu0 0.0
    %154 = vmatprep.subr.mxu0 0.0
    %155 = vmatpush1.msra.mxu0 0.0
    %156 = vmatprep.subr.mxu0 0.0
    %157 = vmatpush1.msra.mxu0 0.0
    %158 = vmatprep.subr.mxu0 0.0
    %159 = vmatpush1.msra.mxu0 0.0
    %160 = vmatprep.subr.mxu0 0.0
    %161 = vmatpush1.msra.mxu0 0.0
    %162 = vmatprep.mubr.f32.mxu0 0.0
    %163 = vmatmul.mubr.f32.gmra.mrb[0].mxu0 %v68
    %v164 = vpop.f32.mrb[0].mxu0
    %v165 = vadd.f32 0.0, %v164
    %v166 = vpop.f32.mrb[0].mxu0
    %v167 = vadd.f32 0.0, %v166
    %168 = vmatprep.mubr.f32.mxu0 0.0
    %169 = vmatmul.mubr.f32.gmra.mrb[0].mxu0 %v71
    %v170 = vpop.f32.mrb[0].mxu0
    %v171 = vadd.f32 0.0, %v170
    %v172 = vpop.f32.mrb[0].mxu0
    %v173 = vadd.f32 0.0, %v172
    %174 = vmatprep.mubr.f32.mxu0 0.0
    %175 = vmatmul.mubr.f32.gmra.mrb[0].mxu0 %v74
    %v176 = vpop.f32.mrb[0].mxu0
    %v177 = vadd.f32 0.0, %v176
    %v178 = vpop.f32.mrb[0].mxu0
    %v179 = vadd.f32 0.0, %v178
    %180 = vmatprep.mubr.f32.mxu0 0.0
    %181 = vmatmul.mubr.f32.gmra.mrb[0].mxu0 %v77
    %v182 = vpop.f32.mrb[0].mxu0
    %v183 = vadd.f32 0.0, %v182
    %v184 = vpop.f32.mrb[0].mxu0
    %v185 = vadd.f32 0.0, %v184
    %186 = vmatprep.mubr.f32.mxu0 0.0
    %187 = vmatmul.mubr.f32.gmra.mrb[0].mxu0 %v80
    %v188 = vpop.f32.mrb[0].mxu0
    %v189 = vadd.f32 0.0, %v188
    %v190 = vpop.f32.mrb[0].mxu0
    %v191 = vadd.f32 0.0, %v190
    %192 = vmatprep.mubr.f32.mxu0 0.0
    %193 = vmatmul.mubr.f32.gmra.mrb[0].mxu0 %v83
    %v194 = vpop.f32.mrb[0].mxu0
    %v195 = vadd.f32 0.0, %v194
    %v196 = vpop.f32.mrb[0].mxu0
    %v197 = vadd.f32 0.0, %v196
    %198 = vmatprep.mubr.f32.mxu0 0.0
    %199 = vmatmul.mubr.f32.gmra.mrb[0].mxu0 %v86
    %v200 = vpop.f32.mrb[0].mxu0
    %v201 = vadd.f32 0.0, %v200
    %v202 = vpop.f32.mrb[0].mxu0
    %v203 = vadd.f32 0.0, %v202
    %204 = vmatprep.mubr.f32.mxu0 0.0
    %205 = vmatmul.mubr.f32.gmra.mrb[0].mxu0 %v89
    %v206 = vpop.f32.mrb[0].mxu0
    %v207 = vadd.f32 0.0, %v206
    %v208 = vpop.f32.mrb[0].mxu0
    %v209 = vadd.f32 0.0, %v208
    %210 = vdwg.mxu0
    %211 = vst [vmem:[#allocation2] sm:$0xff] %v165
    %212 = vst [vmem:[#allocation2 + $0x8] sm:$0xff] %v167
    %213 = vst [vmem:[#allocation2 + $0x10] sm:$0xff] %v171
    %214 = vst [vmem:[#allocation2 + $0x18] sm:$0xff] %v173
    %215 = vst [vmem:[#allocation2 + $0x20] sm:$0xff] %v177
    %216 = vst [vmem:[#allocation2 + $0x28] sm:$0xff] %v179
    %217 = vst [vmem:[#allocation2 + $0x30] sm:$0xff] %v183
    %218 = vst [vmem:[#allocation2 + $0x38] sm:$0xff] %v185
    %219 = vst [vmem:[#allocation2 + $0x40] sm:$0xff] %v189
    %220 = vst [vmem:[#allocation2 + $0x48] sm:$0xff] %v191
    %221 = vst [vmem:[#allocation2 + $0x50] sm:$0xff] %v195
    %222 = vst [vmem:[#allocation2 + $0x58] sm:$0xff] %v197
    %223 = vst [vmem:[#allocation2 + $0x60] sm:$0xff] %v201
    %224 = vst [vmem:[#allocation2 + $0x68] sm:$0xff] %v203
    %225 = vst [vmem:[#allocation2 + $0x70] sm:$0xff] %v207
    %226 = vst [vmem:[#allocation2 + $0x78] sm:$0xff] %v209
    %v227 = vld [vmem:[%s2] sm:$0xff]
    %v228 = vld [vmem:[%s2 + $0x8] sm:$0xff]
    %v229 = vld [vmem:[%s2 + $0x10] sm:$0xff]
    %v230 = vld [vmem:[%s2 + $0x18] sm:$0xff]
    %v231 = vld [vmem:[#allocation6] sm:$0xff]
    %v232 = vld [vmem:[#allocation6 + $0x8] sm:$0xff]
    %v233 = vld [vmem:[#allocation6 + $0x10] sm:$0xff]
    %v234 = vld [vmem:[#allocation6 + $0x18] sm:$0xff]
    %s235 = smul.u32 0, 2
    %s236 = smul.addr %s235, 8
    %s237 = scalar_lea.vmem [#allocation2], %s236
    %v238 = vld [vmem:[%s237] sm:$0xff]
    %s239 = smul.u32 7, 2
    %s240 = smul.addr %s239, 8
    %s241 = scalar_lea.vmem [#allocation2], %s240
    %v242 = vld [vmem:[%s241 + $0x8] sm:$0xff]
    %vm243 = vcmask 261120
    %v245 = vsel %vm243, 0.0, 0
    %247 = vmatprep.subr.mxu0 0.0
    %248 = vmatpush1.msra.mxu0 %v227
    %249 = vmatprep.subr.mxu0 0.0
    %250 = vmatpush1.msra.mxu0 %v228
    %251 = vmatprep.subr.mxu0 0.0
    %252 = vmatpush1.msra.mxu0 %v229
    %253 = vmatprep.subr.mxu0 0.0
    %254 = vmatpush1.msra.mxu0 %v230
    %255 = vmatprep.subr.mxu0 0.0
    %256 = vmatpush1.msra.mxu0 0.0
    %257 = vmatprep.subr.mxu0 0.0
    %258 = vmatpush1.msra.mxu0 0.0
    %259 = vmatprep.subr.mxu0 0.0
    %260 = vmatpush1.msra.mxu0 0.0
    %261 = vmatprep.subr.mxu0 0.0
    %262 = vmatpush1.msra.mxu0 0.0
    %263 = vmatprep.subr.mxu0 0.0
    %264 = vmatpush1.msra.mxu0 0.0
    %265 = vmatprep.subr.mxu0 0.0
    %266 = vmatpush1.msra.mxu0 0.0
    %267 = vmatprep.subr.mxu0 0.0
    %268 = vmatpush1.msra.mxu0 0.0
    %269 = vmatprep.subr.mxu0 0.0
    %270 = vmatpush1.msra.mxu0 0.0
    %271 = vmatprep.subr.mxu0 0.0
    %272 = vmatpush1.msra.mxu0 0.0
    %273 = vmatprep.subr.mxu0 0.0
    %274 = vmatpush1.msra.mxu0 0.0
    %275 = vmatprep.subr.mxu0 0.0
    %276 = vmatpush1.msra.mxu0 0.0
    %277 = vmatprep.subr.mxu0 0.0
    %278 = vmatpush1.msra.mxu0 0.0
    %279 = vmatprep.subr.mxu0 0.0
    %280 = vmatpush1.msra.mxu0 0.0
    %281 = vmatprep.subr.mxu0 0.0
    %282 = vmatpush1.msra.mxu0 0.0
    %283 = vmatprep.subr.mxu0 0.0
    %284 = vmatpush1.msra.mxu0 0.0
    %285 = vmatprep.subr.mxu0 0.0
    %286 = vmatpush1.msra.mxu0 0.0
    %287 = vmatprep.subr.mxu0 0.0
    %288 = vmatpush1.msra.mxu0 0.0
    %289 = vmatprep.subr.mxu0 0.0
    %290 = vmatpush1.msra.mxu0 0.0
    %291 = vmatprep.subr.mxu0 0.0
    %292 = vmatpush1.msra.mxu0 0.0
    %293 = vmatprep.subr.mxu0 0.0
    %294 = vmatpush1.msra.mxu0 0.0
    %295 = vmatprep.subr.mxu0 0.0
    %296 = vmatpush1.msra.mxu0 0.0
    %297 = vmatprep.subr.mxu0 0.0
    %298 = vmatpush1.msra.mxu0 0.0
    %299 = vmatprep.subr.mxu0 0.0
    %300 = vmatpush1.msra.mxu0 0.0
    %301 = vmatprep.subr.mxu0 0.0
    %302 = vmatpush1.msra.mxu0 0.0
    %303 = vmatprep.subr.mxu0 0.0
    %304 = vmatpush1.msra.mxu0 0.0
    %305 = vmatprep.subr.mxu0 0.0
    %306 = vmatpush1.msra.mxu0 0.0
    %307 = vmatprep.subr.mxu0 0.0
    %308 = vmatpush1.msra.mxu0 0.0
    %309 = vmatprep.subr.mxu0 0.0
    %310 = vmatpush1.msra.mxu0 0.0
    %311 = vmatprep.mubr.f32.mxu0 0.0
    %312 = vmatmul.mubr.f32.gmra.mrb[0].mxu0 %v245
    %v313 = vpop.f32.mrb[0].mxu0
    %v314 = vadd.f32 0.0, %v313
    %v315 = vpop.f32.mrb[0].mxu0
    %316 = vdwg.mxu0
    %v317 = vadd.f32 %v238, %v314
    %v318 = vxor.u32 %v317, 2147483648
    %v319 = vmul.f32 %v318, 1.442695
    %v320 = vpow.pop %v319
    %v321 = vadd.f32 %v320, 1.0
    %v322 = vrcp.pop %v321
    %v323 = vmul.f32 1.0, %v322
    %v324 = vtanh.pop %v317
    %v325 = vmul.f32 %v323, 0.0
    %327 = vrot.lane.b32.xlu0 %v324, 64
    %v328 = vpop.permute.xlu0 %327
    %v330 = vmul.f32 %v323, %v328
    %332 = vrot.lane.b32.xlu0 %v330, 32
    %v333 = vpop.permute.xlu0 %332
    %v335 = vadd.f32 %v325, %v333
    %v336 = vtanh.pop %v335
    %338 = vrot.lane.b32.xlu0 %v336, 64
    %v339 = vpop.permute.xlu0 %338
    %v341 = vmul.f32 %v323, %v339
    %342 = vmatprep.subr.mxu0 0.0
    %343 = vmatpush1.msra.mxu0 %v231
    %344 = vmatprep.subr.mxu0 0.0
    %345 = vmatpush1.msra.mxu0 %v232
    %346 = vmatprep.subr.mxu0 0.0
    %347 = vmatpush1.msra.mxu0 %v233
    %348 = vmatprep.subr.mxu0 0.0
    %349 = vmatpush1.msra.mxu0 %v234
    %350 = vmatprep.subr.mxu0 0.0
    %351 = vmatpush1.msra.mxu0 0.0
    %352 = vmatprep.subr.mxu0 0.0
    %353 = vmatpush1.msra.mxu0 0.0
    %354 = vmatprep.subr.mxu0 0.0
    %355 = vmatpush1.msra.mxu0 0.0
    %356 = vmatprep.subr.mxu0 0.0
    %357 = vmatpush1.msra.mxu0 0.0
    %358 = vmatprep.subr.mxu0 0.0
    %359 = vmatpush1.msra.mxu0 0.0
    %360 = vmatprep.subr.mxu0 0.0
    %361 = vmatpush1.msra.mxu0 0.0
    %362 = vmatprep.subr.mxu0 0.0
    %363 = vmatpush1.msra.mxu0 0.0
    %364 = vmatprep.subr.mxu0 0.0
    %365 = vmatpush1.msra.mxu0 0.0
    %366 = vmatprep.subr.mxu0 0.0
    %367 = vmatpush1.msra.mxu0 0.0
    %368 = vmatprep.subr.mxu0 0.0
    %369 = vmatpush1.msra.mxu0 0.0
    %370 = vmatprep.subr.mxu0 0.0
    %371 = vmatpush1.msra.mxu0 0.0
    %372 = vmatprep.subr.mxu0 0.0
    %373 = vmatpush1.msra.mxu0 0.0
    %374 = vmatprep.subr.mxu0 0.0
    %375 = vmatpush1.msra.mxu0 0.0
    %376 = vmatprep.subr.mxu0 0.0
    %377 = vmatpush1.msra.mxu0 0.0
    %378 = vmatprep.subr.mxu0 0.0
    %379 = vmatpush1.msra.mxu0 0.0
    %380 = vmatprep.subr.mxu0 0.0
    %381 = vmatpush1.msra.mxu0 0.0
    %382 = vmatprep.subr.mxu0 0.0
    %383 = vmatpush1.msra.mxu0 0.0
    %384 = vmatprep.subr.mxu0 0.0
    %385 = vmatpush1.msra.mxu0 0.0
    %386 = vmatprep.subr.mxu0 0.0
    %387 = vmatpush1.msra.mxu0 0.0
    %388 = vmatprep.subr.mxu0 0.0
    %389 = vmatpush1.msra.mxu0 0.0
    %390 = vmatprep.subr.mxu0 0.0
    %391 = vmatpush1.msra.mxu0 0.0
    %392 = vmatprep.subr.mxu0 0.0
    %393 = vmatpush1.msra.mxu0 0.0
    %394 = vmatprep.subr.mxu0 0.0
    %395 = vmatpush1.msra.mxu0 0.0
    %396 = vmatprep.subr.mxu0 0.0
    %397 = vmatpush1.msra.mxu0 0.0
    %398 = vmatprep.subr.mxu0 0.0
    %399 = vmatpush1.msra.mxu0 0.0
    %400 = vmatprep.subr.mxu0 0.0
    %401 = vmatpush1.msra.mxu0 0.0
    %402 = vmatprep.subr.mxu0 0.0
    %403 = vmatpush1.msra.mxu0 0.0
    %404 = vmatprep.subr.mxu0 0.0
    %405 = vmatpush1.msra.mxu0 0.0
    %406 = vmatprep.mubr.f32.mxu0 0.0
    %407 = vmatmul.mubr.f32.gmra.mrb[0].mxu0 %v245
    %v408 = vpop.f32.mrb[0].mxu0
    %v409 = vadd.f32 0.0, %v408
    %v410 = vpop.f32.mrb[0].mxu0
    %411 = vdwg.mxu0
    %v412 = vadd.f32 %v242, %v409
    %v413 = vxor.u32 %v412, 2147483648
    %v414 = vmul.f32 %v413, 1.442695
    %v415 = vpow.pop %v414
    %v416 = vadd.f32 %v415, 1.0
    %v417 = vrcp.pop %v416
    %v418 = vmul.f32 1.0, %v417
    %v419 = vtanh.pop %v412
    %v420 = vmul.f32 %v418, 0.0
    %422 = vrot.lane.b32.xlu0 %v419, 64
    %v423 = vpop.permute.xlu0 %422
    %v425 = vmul.f32 %v418, %v423
    %427 = vrot.lane.b32.xlu0 %v425, 32
    %v428 = vpop.permute.xlu0 %427
    %v430 = vadd.f32 %v420, %v428
    %v431 = vtanh.pop %v430
    %433 = vrot.lane.b32.xlu0 %v431, 64
    %v434 = vpop.permute.xlu0 %433
    %v436 = vmul.f32 %v418, %v434
    %s437 = smul.u32 1, 2
    %s438 = smul.addr %s437, 8
    %s439 = scalar_lea.vmem [#allocation2], %s438
    %v440 = vld [vmem:[%s439] sm:$0xff]
    %s441 = smul.u32 6, 2
    %s442 = smul.addr %s441, 8
    %s443 = scalar_lea.vmem [#allocation2], %s442
    %v444 = vld [vmem:[%s443 + $0x8] sm:$0xff]
    %446 = vrot.lane.b32.xlu0 %v341, 32
    %v447 = vpop.permute.xlu0 %446
    %v448 = vsel %vm243, %v447, 0
    %450 = vmatprep.subr.mxu0 0.0
    %451 = vmatpush1.msra.mxu0 %v227
    %452 = vmatprep.subr.mxu0 0.0
    %453 = vmatpush1.msra.mxu0 %v228
    %454 = vmatprep.subr.mxu0 0.0
    %455 = vmatpush1.msra.mxu0 %v229
    %456 = vmatprep.subr.mxu0 0.0
    %457 = vmatpush1.msra.mxu0 %v230
    %458 = vmatprep.subr.mxu0 0.0
    %459 = vmatpush1.msra.mxu0 0.0
    %460 = vmatprep.subr.mxu0 0.0
    %461 = vmatpush1.msra.mxu0 0.0
    %462 = vmatprep.subr.mxu0 0.0
    %463 = vmatpush1.msra.mxu0 0.0
    %464 = vmatprep.subr.mxu0 0.0
    %465 = vmatpush1.msra.mxu0 0.0
    %466 = vmatprep.subr.mxu0 0.0
    %467 = vmatpush1.msra.mxu0 0.0
    %468 = vmatprep.subr.mxu0 0.0
    %469 = vmatpush1.msra.mxu0 0.0
    %470 = vmatprep.subr.mxu0 0.0
    %471 = vmatpush1.msra.mxu0 0.0
    %472 = vmatprep.subr.mxu0 0.0
    %473 = vmatpush1.msra.mxu0 0.0
    %474 = vmatprep.subr.mxu0 0.0
    %475 = vmatpush1.msra.mxu0 0.0
    %476 = vmatprep.subr.mxu0 0.0
    %477 = vmatpush1.msra.mxu0 0.0
    %478 = vmatprep.subr.mxu0 0.0
    %479 = vmatpush1.msra.mxu0 0.0
    %480 = vmatprep.subr.mxu0 0.0
    %481 = vmatpush1.msra.mxu0 0.0
    %482 = vmatprep.subr.mxu0 0.0
    %483 = vmatpush1.msra.mxu0 0.0
    %484 = vmatprep.subr.mxu0 0.0
    %485 = vmatpush1.msra.mxu0 0.0
    %486 = vmatprep.subr.mxu0 0.0
    %487 = vmatpush1.msra.mxu0 0.0
    %488 = vmatprep.subr.mxu0 0.0
    %489 = vmatpush1.msra.mxu0 0.0
    %490 = vmatprep.subr.mxu0 0.0
    %491 = vmatpush1.msra.mxu0 0.0
    %492 = vmatprep.subr.mxu0 0.0
    %493 = vmatpush1.msra.mxu0 0.0
    %494 = vmatprep.subr.mxu0 0.0
    %495 = vmatpush1.msra.mxu0 0.0
    %496 = vmatprep.subr.mxu0 0.0
    %497 = vmatpush1.msra.mxu0 0.0
    %498 = vmatprep.subr.mxu0 0.0
    %499 = vmatpush1.msra.mxu0 0.0
    %500 = vmatprep.subr.mxu0 0.0
    %501 = vmatpush1.msra.mxu0 0.0
    %502 = vmatprep.subr.mxu0 0.0
    %503 = vmatpush1.msra.mxu0 0.0
    %504 = vmatprep.subr.mxu0 0.0
    %505 = vmatpush1.msra.mxu0 0.0
    %506 = vmatprep.subr.mxu0 0.0
    %507 = vmatpush1.msra.mxu0 0.0
    %508 = vmatprep.subr.mxu0 0.0
    %509 = vmatpush1.msra.mxu0 0.0
    %510 = vmatprep.subr.mxu0 0.0
    %511 = vmatpush1.msra.mxu0 0.0
    %512 = vmatprep.subr.mxu0 0.0
    %513 = vmatpush1.msra.mxu0 0.0
    %514 = vmatprep.mubr.f32.mxu0 0.0
    %515 = vmatmul.mubr.f32.gmra.mrb[0].mxu0 %v448
    %v516 = vpop.f32.mrb[0].mxu0
    %v517 = vadd.f32 0.0, %v516
    %v518 = vpop.f32.mrb[0].mxu0
    %519 = vdwg.mxu0
    %v520 = vadd.f32 %v440, %v517
    %v521 = vxor.u32 %v520, 2147483648
    %v522 = vmul.f32 %v521, 1.442695
    %v523 = vpow.pop %v522
    %v524 = vadd.f32 %v523, 1.0
    %v525 = vrcp.pop %v524
    %v526 = vmul.f32 1.0, %v525
    %v527 = vtanh.pop %v520
    %v528 = vmul.f32 %v526, %v335
    %530 = vrot.lane.b32.xlu0 %v527, 64
    %v531 = vpop.permute.xlu0 %530
    %v533 = vmul.f32 %v526, %v531
    %535 = vrot.lane.b32.xlu0 %v533, 32
    %v536 = vpop.permute.xlu0 %535
    %v538 = vadd.f32 %v528, %v536
    %v539 = vtanh.pop %v538
    %541 = vrot.lane.b32.xlu0 %v539, 64
    %v542 = vpop.permute.xlu0 %541
    %v544 = vmul.f32 %v526, %v542
    %546 = vrot.lane.b32.xlu0 %v436, 32
    %v547 = vpop.permute.xlu0 %546
    %v548 = vsel %vm243, %v547, 0
    %550 = vmatprep.subr.mxu0 0.0
    %551 = vmatpush1.msra.mxu0 %v231
    %552 = vmatprep.subr.mxu0 0.0
    %553 = vmatpush1.msra.mxu0 %v232
    %554 = vmatprep.subr.mxu0 0.0
    %555 = vmatpush1.msra.mxu0 %v233
    %556 = vmatprep.subr.mxu0 0.0
    %557 = vmatpush1.msra.mxu0 %v234
    %558 = vmatprep.subr.mxu0 0.0
    %559 = vmatpush1.msra.mxu0 0.0
    %560 = vmatprep.subr.mxu0 0.0
    %561 = vmatpush1.msra.mxu0 0.0
    %562 = vmatprep.subr.mxu0 0.0
    %563 = vmatpush1.msra.mxu0 0.0
    %564 = vmatprep.subr.mxu0 0.0
    %565 = vmatpush1.msra.mxu0 0.0
    %566 = vmatprep.subr.mxu0 0.0
    %567 = vmatpush1.msra.mxu0 0.0
    %568 = vmatprep.subr.mxu0 0.0
    %569 = vmatpush1.msra.mxu0 0.0
    %570 = vmatprep.subr.mxu0 0.0
    %571 = vmatpush1.msra.mxu0 0.0
    %572 = vmatprep.subr.mxu0 0.0
    %573 = vmatpush1.msra.mxu0 0.0
    %574 = vmatprep.subr.mxu0 0.0
    %575 = vmatpush1.msra.mxu0 0.0
    %576 = vmatprep.subr.mxu0 0.0
    %577 = vmatpush1.msra.mxu0 0.0
    %578 = vmatprep.subr.mxu0 0.0
    %579 = vmatpush1.msra.mxu0 0.0
    %580 = vmatprep.subr.mxu0 0.0
    %581 = vmatpush1.msra.mxu0 0.0
    %582 = vmatprep.subr.mxu0 0.0
    %583 = vmatpush1.msra.mxu0 0.0
    %584 = vmatprep.subr.mxu0 0.0
    %585 = vmatpush1.msra.mxu0 0.0
    %586 = vmatprep.subr.mxu0 0.0
    %587 = vmatpush1.msra.mxu0 0.0
    %588 = vmatprep.subr.mxu0 0.0
    %589 = vmatpush1.msra.mxu0 0.0
    %590 = vmatprep.subr.mxu0 0.0
    %591 = vmatpush1.msra.mxu0 0.0
    %592 = vmatprep.subr.mxu0 0.0
    %593 = vmatpush1.msra.mxu0 0.0
    %594 = vmatprep.subr.mxu0 0.0
    %595 = vmatpush1.msra.mxu0 0.0
    %596 = vmatprep.subr.mxu0 0.0
    %597 = vmatpush1.msra.mxu0 0.0
    %598 = vmatprep.subr.mxu0 0.0
    %599 = vmatpush1.msra.mxu0 0.0
    %600 = vmatprep.subr.mxu0 0.0
    %601 = vmatpush1.msra.mxu0 0.0
    %602 = vmatprep.subr.mxu0 0.0
    %603 = vmatpush1.msra.mxu0 0.0
    %604 = vmatprep.subr.mxu0 0.0
    %605 = vmatpush1.msra.mxu0 0.0
    %606 = vmatprep.subr.mxu0 0.0
    %607 = vmatpush1.msra.mxu0 0.0
    %608 = vmatprep.subr.mxu0 0.0
    %609 = vmatpush1.msra.mxu0 0.0
    %610 = vmatprep.subr.mxu0 0.0
    %611 = vmatpush1.msra.mxu0 0.0
    %612 = vmatprep.subr.mxu0 0.0
    %613 = vmatpush1.msra.mxu0 0.0
    %614 = vmatprep.mubr.f32.mxu0 0.0
    %615 = vmatmul.mubr.f32.gmra.mrb[0].mxu0 %v548
    %v616 = vpop.f32.mrb[0].mxu0
    %v617 = vadd.f32 0.0, %v616
    %v618 = vpop.f32.mrb[0].mxu0
    %619 = vdwg.mxu0
    %v620 = vadd.f32 %v444, %v617
    %v621 = vxor.u32 %v620, 2147483648
    %v622 = vmul.f32 %v621, 1.442695
    %v623 = vpow.pop %v622
    %v624 = vadd.f32 %v623, 1.0
    %v625 = vrcp.pop %v624
    %v626 = vmul.f32 1.0, %v625
    %v627 = vtanh.pop %v620
    %v628 = vmul.f32 %v626, %v430
    %630 = vrot.lane.b32.xlu0 %v627, 64
    %v631 = vpop.permute.xlu0 %630
    %v633 = vmul.f32 %v626, %v631
    %635 = vrot.lane.b32.xlu0 %v633, 32
    %v636 = vpop.permute.xlu0 %635
    %v638 = vadd.f32 %v628, %v636
    %v639 = vtanh.pop %v638
    %641 = vrot.lane.b32.xlu0 %v639, 64
    %v642 = vpop.permute.xlu0 %641
    %v644 = vmul.f32 %v626, %v642
    %s645 = smul.u32 2, 2
    %s646 = smul.addr %s645, 8
    %s647 = scalar_lea.vmem [#allocation2], %s646
    %v648 = vld [vmem:[%s647] sm:$0xff]
    %s649 = smul.u32 5, 2
    %s650 = smul.addr %s649, 8
    %s651 = scalar_lea.vmem [#allocation2], %s650
    %v652 = vld [vmem:[%s651 + $0x8] sm:$0xff]
    %654 = vrot.lane.b32.xlu0 %v544, 32
    %v655 = vpop.permute.xlu0 %654
    %v656 = vsel %vm243, %v655, 0
    %658 = vmatprep.subr.mxu0 0.0
    %659 = vmatpush1.msra.mxu0 %v227
    %660 = vmatprep.subr.mxu0 0.0
    %661 = vmatpush1.msra.mxu0 %v228
    %662 = vmatprep.subr.mxu0 0.0
    %663 = vmatpush1.msra.mxu0 %v229
    %664 = vmatprep.subr.mxu0 0.0
    %665 = vmatpush1.msra.mxu0 %v230
    %666 = vmatprep.subr.mxu0 0.0
    %667 = vmatpush1.msra.mxu0 0.0
    %668 = vmatprep.subr.mxu0 0.0
    %669 = vmatpush1.msra.mxu0 0.0
    %670 = vmatprep.subr.mxu0 0.0
    %671 = vmatpush1.msra.mxu0 0.0
    %672 = vmatprep.subr.mxu0 0.0
    %673 = vmatpush1.msra.mxu0 0.0
    %674 = vmatprep.subr.mxu0 0.0
    %675 = vmatpush1.msra.mxu0 0.0
    %676 = vmatprep.subr.mxu0 0.0
    %677 = vmatpush1.msra.mxu0 0.0
    %678 = vmatprep.subr.mxu0 0.0
    %679 = vmatpush1.msra.mxu0 0.0
    %680 = vmatprep.subr.mxu0 0.0
    %681 = vmatpush1.msra.mxu0 0.0
    %682 = vmatprep.subr.mxu0 0.0
    %683 = vmatpush1.msra.mxu0 0.0
    %684 = vmatprep.subr.mxu0 0.0
    %685 = vmatpush1.msra.mxu0 0.0
    %686 = vmatprep.subr.mxu0 0.0
    %687 = vmatpush1.msra.mxu0 0.0
    %688 = vmatprep.subr.mxu0 0.0
    %689 = vmatpush1.msra.mxu0 0.0
    %690 = vmatprep.subr.mxu0 0.0
    %691 = vmatpush1.msra.mxu0 0.0
    %692 = vmatprep.subr.mxu0 0.0
    %693 = vmatpush1.msra.mxu0 0.0
    %694 = vmatprep.subr.mxu0 0.0
    %695 = vmatpush1.msra.mxu0 0.0
    %696 = vmatprep.subr.mxu0 0.0
    %697 = vmatpush1.msra.mxu0 0.0
    %698 = vmatprep.subr.mxu0 0.0
    %699 = vmatpush1.msra.mxu0 0.0
    %700 = vmatprep.subr.mxu0 0.0
    %701 = vmatpush1.msra.mxu0 0.0
    %702 = vmatprep.subr.mxu0 0.0
    %703 = vmatpush1.msra.mxu0 0.0
    %704 = vmatprep.subr.mxu0 0.0
    %705 = vmatpush1.msra.mxu0 0.0
    %706 = vmatprep.subr.mxu0 0.0
    %707 = vmatpush1.msra.mxu0 0.0
    %708 = vmatprep.subr.mxu0 0.0
    %709 = vmatpush1.msra.mxu0 0.0
    %710 = vmatprep.subr.mxu0 0.0
    %711 = vmatpush1.msra.mxu0 0.0
    %712 = vmatprep.subr.mxu0 0.0
    %713 = vmatpush1.msra.mxu0 0.0
    %714 = vmatprep.subr.mxu0 0.0
    %715 = vmatpush1.msra.mxu0 0.0
    %716 = vmatprep.subr.mxu0 0.0
    %717 = vmatpush1.msra.mxu0 0.0
    %718 = vmatprep.subr.mxu0 0.0
    %719 = vmatpush1.msra.mxu0 0.0
    %720 = vmatprep.subr.mxu0 0.0
    %721 = vmatpush1.msra.mxu0 0.0
    %722 = vmatprep.mubr.f32.mxu0 0.0
    %723 = vmatmul.mubr.f32.gmra.mrb[0].mxu0 %v656
    %v724 = vpop.f32.mrb[0].mxu0
    %v725 = vadd.f32 0.0, %v724
    %v726 = vpop.f32.mrb[0].mxu0
    %727 = vdwg.mxu0
    %v728 = vadd.f32 %v648, %v725
    %v729 = vxor.u32 %v728, 2147483648
    %v730 = vmul.f32 %v729, 1.442695
    %v731 = vpow.pop %v730
    %v732 = vadd.f32 %v731, 1.0
    %v733 = vrcp.pop %v732
    %v734 = vmul.f32 1.0, %v733
    %v735 = vtanh.pop %v728
    %v736 = vmul.f32 %v734, %v538
    %738 = vrot.lane.b32.xlu0 %v735, 64
    %v739 = vpop.permute.xlu0 %738
    %v741 = vmul.f32 %v734, %v739
    %743 = vrot.lane.b32.xlu0 %v741, 32
    %v744 = vpop.permute.xlu0 %743
    %v746 = vadd.f32 %v736, %v744
    %v747 = vtanh.pop %v746
    %749 = vrot.lane.b32.xlu0 %v747, 64
    %v750 = vpop.permute.xlu0 %749
    %v752 = vmul.f32 %v734, %v750
    %754 = vrot.lane.b32.xlu0 %v644, 32
    %v755 = vpop.permute.xlu0 %754
    %v756 = vsel %vm243, %v755, 0
    %758 = vmatprep.subr.mxu0 0.0
    %759 = vmatpush1.msra.mxu0 %v231
    %760 = vmatprep.subr.mxu0 0.0
    %761 = vmatpush1.msra.mxu0 %v232
    %762 = vmatprep.subr.mxu0 0.0
    %763 = vmatpush1.msra.mxu0 %v233
    %764 = vmatprep.subr.mxu0 0.0
    %765 = vmatpush1.msra.mxu0 %v234
    %766 = vmatprep.subr.mxu0 0.0
    %767 = vmatpush1.msra.mxu0 0.0
    %768 = vmatprep.subr.mxu0 0.0
    %769 = vmatpush1.msra.mxu0 0.0
    %770 = vmatprep.subr.mxu0 0.0
    %771 = vmatpush1.msra.mxu0 0.0
    %772 = vmatprep.subr.mxu0 0.0
    %773 = vmatpush1.msra.mxu0 0.0
    %774 = vmatprep.subr.mxu0 0.0
    %775 = vmatpush1.msra.mxu0 0.0
    %776 = vmatprep.subr.mxu0 0.0
    %777 = vmatpush1.msra.mxu0 0.0
    %778 = vmatprep.subr.mxu0 0.0
    %779 = vmatpush1.msra.mxu0 0.0
    %780 = vmatprep.subr.mxu0 0.0
    %781 = vmatpush1.msra.mxu0 0.0
    %782 = vmatprep.subr.mxu0 0.0
    %783 = vmatpush1.msra.mxu0 0.0
    %784 = vmatprep.subr.mxu0 0.0
    %785 = vmatpush1.msra.mxu0 0.0
    %786 = vmatprep.subr.mxu0 0.0
    %787 = vmatpush1.msra.mxu0 0.0
    %788 = vmatprep.subr.mxu0 0.0
    %789 = vmatpush1.msra.mxu0 0.0
    %790 = vmatprep.subr.mxu0 0.0
    %791 = vmatpush1.msra.mxu0 0.0
    %792 = vmatprep.subr.mxu0 0.0
    %793 = vmatpush1.msra.mxu0 0.0
    %794 = vmatprep.subr.mxu0 0.0
    %795 = vmatpush1.msra.mxu0 0.0
    %796 = vmatprep.subr.mxu0 0.0
    %797 = vmatpush1.msra.mxu0 0.0
    %798 = vmatprep.subr.mxu0 0.0
    %799 = vmatpush1.msra.mxu0 0.0
    %800 = vmatprep.subr.mxu0 0.0
    %801 = vmatpush1.msra.mxu0 0.0
    %802 = vmatprep.subr.mxu0 0.0
    %803 = vmatpush1.msra.mxu0 0.0
    %804 = vmatprep.subr.mxu0 0.0
    %805 = vmatpush1.msra.mxu0 0.0
    %806 = vmatprep.subr.mxu0 0.0
    %807 = vmatpush1.msra.mxu0 0.0
    %808 = vmatprep.subr.mxu0 0.0
    %809 = vmatpush1.msra.mxu0 0.0
    %810 = vmatprep.subr.mxu0 0.0
    %811 = vmatpush1.msra.mxu0 0.0
    %812 = vmatprep.subr.mxu0 0.0
    %813 = vmatpush1.msra.mxu0 0.0
    %814 = vmatprep.subr.mxu0 0.0
    %815 = vmatpush1.msra.mxu0 0.0
    %816 = vmatprep.subr.mxu0 0.0
    %817 = vmatpush1.msra.mxu0 0.0
    %818 = vmatprep.subr.mxu0 0.0
    %819 = vmatpush1.msra.mxu0 0.0
    %820 = vmatprep.subr.mxu0 0.0
    %821 = vmatpush1.msra.mxu0 0.0
    %822 = vmatprep.mubr.f32.mxu0 0.0
    %823 = vmatmul.mubr.f32.gmra.mrb[0].mxu0 %v756
    %v824 = vpop.f32.mrb[0].mxu0
    %v825 = vadd.f32 0.0, %v824
    %v826 = vpop.f32.mrb[0].mxu0
    %827 = vdwg.mxu0
    %v828 = vadd.f32 %v652, %v825
    %v829 = vxor.u32 %v828, 2147483648
    %v830 = vmul.f32 %v829, 1.442695
    %v831 = vpow.pop %v830
    %v832 = vadd.f32 %v831, 1.0
    %v833 = vrcp.pop %v832
    %v834 = vmul.f32 1.0, %v833
    %v835 = vtanh.pop %v828
    %v836 = vmul.f32 %v834, %v638
    %838 = vrot.lane.b32.xlu0 %v835, 64
    %v839 = vpop.permute.xlu0 %838
    %v841 = vmul.f32 %v834, %v839
    %843 = vrot.lane.b32.xlu0 %v841, 32
    %v844 = vpop.permute.xlu0 %843
    %v846 = vadd.f32 %v836, %v844
    %v847 = vtanh.pop %v846
    %849 = vrot.lane.b32.xlu0 %v847, 64
    %v850 = vpop.permute.xlu0 %849
    %v852 = vmul.f32 %v834, %v850
    %s853 = smul.u32 3, 2
    %s854 = smul.addr %s853, 8
    %s855 = scalar_lea.vmem [#allocation2], %s854
    %v856 = vld [vmem:[%s855] sm:$0xff]
    %s857 = smul.u32 4, 2
    %s858 = smul.addr %s857, 8
    %s859 = scalar_lea.vmem [#allocation2], %s858
    %v860 = vld [vmem:[%s859 + $0x8] sm:$0xff]
    %862 = vrot.lane.b32.xlu0 %v752, 32
    %v863 = vpop.permute.xlu0 %862
    %v864 = vsel %vm243, %v863, 0
    %866 = vmatprep.subr.mxu0 0.0
    %867 = vmatpush1.msra.mxu0 %v227
    %868 = vmatprep.subr.mxu0 0.0
    %869 = vmatpush1.msra.mxu0 %v228
    %870 = vmatprep.subr.mxu0 0.0
    %871 = vmatpush1.msra.mxu0 %v229
    %872 = vmatprep.subr.mxu0 0.0
    %873 = vmatpush1.msra.mxu0 %v230
    %874 = vmatprep.subr.mxu0 0.0
    %875 = vmatpush1.msra.mxu0 0.0
    %876 = vmatprep.subr.mxu0 0.0
    %877 = vmatpush1.msra.mxu0 0.0
    %878 = vmatprep.subr.mxu0 0.0
    %879 = vmatpush1.msra.mxu0 0.0
    %880 = vmatprep.subr.mxu0 0.0
    %881 = vmatpush1.msra.mxu0 0.0
    %882 = vmatprep.subr.mxu0 0.0
    %883 = vmatpush1.msra.mxu0 0.0
    %884 = vmatprep.subr.mxu0 0.0
    %885 = vmatpush1.msra.mxu0 0.0
    %886 = vmatprep.subr.mxu0 0.0
    %887 = vmatpush1.msra.mxu0 0.0
    %888 = vmatprep.subr.mxu0 0.0
    %889 = vmatpush1.msra.mxu0 0.0
    %890 = vmatprep.subr.mxu0 0.0
    %891 = vmatpush1.msra.mxu0 0.0
    %892 = vmatprep.subr.mxu0 0.0
    %893 = vmatpush1.msra.mxu0 0.0
    %894 = vmatprep.subr.mxu0 0.0
    %895 = vmatpush1.msra.mxu0 0.0
    %896 = vmatprep.subr.mxu0 0.0
    %897 = vmatpush1.msra.mxu0 0.0
    %898 = vmatprep.subr.mxu0 0.0
    %899 = vmatpush1.msra.mxu0 0.0
    %900 = vmatprep.subr.mxu0 0.0
    %901 = vmatpush1.msra.mxu0 0.0
    %902 = vmatprep.subr.mxu0 0.0
    %903 = vmatpush1.msra.mxu0 0.0
    %904 = vmatprep.subr.mxu0 0.0
    %905 = vmatpush1.msra.mxu0 0.0
    %906 = vmatprep.subr.mxu0 0.0
    %907 = vmatpush1.msra.mxu0 0.0
    %908 = vmatprep.subr.mxu0 0.0
    %909 = vmatpush1.msra.mxu0 0.0
    %910 = vmatprep.subr.mxu0 0.0
    %911 = vmatpush1.msra.mxu0 0.0
    %912 = vmatprep.subr.mxu0 0.0
    %913 = vmatpush1.msra.mxu0 0.0
    %914 = vmatprep.subr.mxu0 0.0
    %915 = vmatpush1.msra.mxu0 0.0
    %916 = vmatprep.subr.mxu0 0.0
    %917 = vmatpush1.msra.mxu0 0.0
    %918 = vmatprep.subr.mxu0 0.0
    %919 = vmatpush1.msra.mxu0 0.0
    %920 = vmatprep.subr.mxu0 0.0
    %921 = vmatpush1.msra.mxu0 0.0
    %922 = vmatprep.subr.mxu0 0.0
    %923 = vmatpush1.msra.mxu0 0.0
    %924 = vmatprep.subr.mxu0 0.0
    %925 = vmatpush1.msra.mxu0 0.0
    %926 = vmatprep.subr.mxu0 0.0
    %927 = vmatpush1.msra.mxu0 0.0
    %928 = vmatprep.subr.mxu0 0.0
    %929 = vmatpush1.msra.mxu0 0.0
    %930 = vmatprep.mubr.f32.mxu0 0.0
    %931 = vmatmul.mubr.f32.gmra.mrb[0].mxu0 %v864
    %v932 = vpop.f32.mrb[0].mxu0
    %v933 = vadd.f32 0.0, %v932
    %v934 = vpop.f32.mrb[0].mxu0
    %935 = vdwg.mxu0
    %v936 = vadd.f32 %v856, %v933
    %v937 = vxor.u32 %v936, 2147483648
    %v938 = vmul.f32 %v937, 1.442695
    %v939 = vpow.pop %v938
    %v940 = vadd.f32 %v939, 1.0
    %v941 = vrcp.pop %v940
    %v942 = vmul.f32 1.0, %v941
    %v943 = vtanh.pop %v936
    %v944 = vmul.f32 %v942, %v746
    %946 = vrot.lane.b32.xlu0 %v943, 64
    %v947 = vpop.permute.xlu0 %946
    %v949 = vmul.f32 %v942, %v947
    %951 = vrot.lane.b32.xlu0 %v949, 32
    %v952 = vpop.permute.xlu0 %951
    %v954 = vadd.f32 %v944, %v952
    %v955 = vtanh.pop %v954
    %957 = vrot.lane.b32.xlu0 %v955, 64
    %v958 = vpop.permute.xlu0 %957
    %v960 = vmul.f32 %v942, %v958
    %962 = vrot.lane.b32.xlu0 %v852, 32
    %v963 = vpop.permute.xlu0 %962
    %v964 = vsel %vm243, %v963, 0
    %966 = vmatprep.subr.mxu0 0.0
    %967 = vmatpush1.msra.mxu0 %v231
    %968 = vmatprep.subr.mxu0 0.0
    %969 = vmatpush1.msra.mxu0 %v232
    %970 = vmatprep.subr.mxu0 0.0
    %971 = vmatpush1.msra.mxu0 %v233
    %972 = vmatprep.subr.mxu0 0.0
    %973 = vmatpush1.msra.mxu0 %v234
    %974 = vmatprep.subr.mxu0 0.0
    %975 = vmatpush1.msra.mxu0 0.0
    %976 = vmatprep.subr.mxu0 0.0
    %977 = vmatpush1.msra.mxu0 0.0
    %978 = vmatprep.subr.mxu0 0.0
    %979 = vmatpush1.msra.mxu0 0.0
    %980 = vmatprep.subr.mxu0 0.0
    %981 = vmatpush1.msra.mxu0 0.0
    %982 = vmatprep.subr.mxu0 0.0
    %983 = vmatpush1.msra.mxu0 0.0
    %984 = vmatprep.subr.mxu0 0.0
    %985 = vmatpush1.msra.mxu0 0.0
    %986 = vmatprep.subr.mxu0 0.0
    %987 = vmatpush1.msra.mxu0 0.0
    %988 = vmatprep.subr.mxu0 0.0
    %989 = vmatpush1.msra.mxu0 0.0
    %990 = vmatprep.subr.mxu0 0.0
    %991 = vmatpush1.msra.mxu0 0.0
    %992 = vmatprep.subr.mxu0 0.0
    %993 = vmatpush1.msra.mxu0 0.0
    %994 = vmatprep.subr.mxu0 0.0
    %995 = vmatpush1.msra.mxu0 0.0
    %996 = vmatprep.subr.mxu0 0.0
    %997 = vmatpush1.msra.mxu0 0.0
    %998 = vmatprep.subr.mxu0 0.0
    %999 = vmatpush1.msra.mxu0 0.0
    %1000 = vmatprep.subr.mxu0 0.0
    %1001 = vmatpush1.msra.mxu0 0.0
    %1002 = vmatprep.subr.mxu0 0.0
    %1003 = vmatpush1.msra.mxu0 0.0
    %1004 = vmatprep.subr.mxu0 0.0
    %1005 = vmatpush1.msra.mxu0 0.0
    %1006 = vmatprep.subr.mxu0 0.0
    %1007 = vmatpush1.msra.mxu0 0.0
    %1008 = vmatprep.subr.mxu0 0.0
    %1009 = vmatpush1.msra.mxu0 0.0
    %1010 = vmatprep.subr.mxu0 0.0
    %1011 = vmatpush1.msra.mxu0 0.0
    %1012 = vmatprep.subr.mxu0 0.0
    %1013 = vmatpush1.msra.mxu0 0.0
    %1014 = vmatprep.subr.mxu0 0.0
    %1015 = vmatpush1.msra.mxu0 0.0
    %1016 = vmatprep.subr.mxu0 0.0
    %1017 = vmatpush1.msra.mxu0 0.0
    %1018 = vmatprep.subr.mxu0 0.0
    %1019 = vmatpush1.msra.mxu0 0.0
    %1020 = vmatprep.subr.mxu0 0.0
    %1021 = vmatpush1.msra.mxu0 0.0
    %1022 = vmatprep.subr.mxu0 0.0
    %1023 = vmatpush1.msra.mxu0 0.0
    %1024 = vmatprep.subr.mxu0 0.0
    %1025 = vmatpush1.msra.mxu0 0.0
    %1026 = vmatprep.subr.mxu0 0.0
    %1027 = vmatpush1.msra.mxu0 0.0
    %1028 = vmatprep.subr.mxu0 0.0
    %1029 = vmatpush1.msra.mxu0 0.0
    %1030 = vmatprep.mubr.f32.mxu0 0.0
    %1031 = vmatmul.mubr.f32.gmra.mrb[0].mxu0 %v964
    %v1032 = vpop.f32.mrb[0].mxu0
    %v1033 = vadd.f32 0.0, %v1032
    %v1034 = vpop.f32.mrb[0].mxu0
    %1035 = vdwg.mxu0
    %v1036 = vadd.f32 %v860, %v1033
    %v1037 = vxor.u32 %v1036, 2147483648
    %v1038 = vmul.f32 %v1037, 1.442695
    %v1039 = vpow.pop %v1038
    %v1040 = vadd.f32 %v1039, 1.0
    %v1041 = vrcp.pop %v1040
    %v1042 = vmul.f32 1.0, %v1041
    %v1043 = vtanh.pop %v1036
    %v1044 = vmul.f32 %v1042, %v846
    %1046 = vrot.lane.b32.xlu0 %v1043, 64
    %v1047 = vpop.permute.xlu0 %1046
    %v1049 = vmul.f32 %v1042, %v1047
    %1051 = vrot.lane.b32.xlu0 %v1049, 32
    %v1052 = vpop.permute.xlu0 %1051
    %v1054 = vadd.f32 %v1044, %v1052
    %v1055 = vtanh.pop %v1054
    %1057 = vrot.lane.b32.xlu0 %v1055, 64
    %v1058 = vpop.permute.xlu0 %1057
    %v1060 = vmul.f32 %v1042, %v1058
    %v1061 = vld [vmem:[%s859] sm:$0xff]
    %v1062 = vld [vmem:[%s855 + $0x8] sm:$0xff]
    %1064 = vrot.lane.b32.xlu0 %v960, 32
    %v1065 = vpop.permute.xlu0 %1064
    %v1066 = vsel %vm243, %v1065, 0
    %1068 = vmatprep.subr.mxu0 0.0
    %1069 = vmatpush1.msra.mxu0 %v227
    %1070 = vmatprep.subr.mxu0 0.0
    %1071 = vmatpush1.msra.mxu0 %v228
    %1072 = vmatprep.subr.mxu0 0.0
    %1073 = vmatpush1.msra.mxu0 %v229
    %1074 = vmatprep.subr.mxu0 0.0
    %1075 = vmatpush1.msra.mxu0 %v230
    %1076 = vmatprep.subr.mxu0 0.0
    %1077 = vmatpush1.msra.mxu0 0.0
    %1078 = vmatprep.subr.mxu0 0.0
    %1079 = vmatpush1.msra.mxu0 0.0
    %1080 = vmatprep.subr.mxu0 0.0
    %1081 = vmatpush1.msra.mxu0 0.0
    %1082 = vmatprep.subr.mxu0 0.0
    %1083 = vmatpush1.msra.mxu0 0.0
    %1084 = vmatprep.subr.mxu0 0.0
    %1085 = vmatpush1.msra.mxu0 0.0
    %1086 = vmatprep.subr.mxu0 0.0
    %1087 = vmatpush1.msra.mxu0 0.0
    %1088 = vmatprep.subr.mxu0 0.0
    %1089 = vmatpush1.msra.mxu0 0.0
    %1090 = vmatprep.subr.mxu0 0.0
    %1091 = vmatpush1.msra.mxu0 0.0
    %1092 = vmatprep.subr.mxu0 0.0
    %1093 = vmatpush1.msra.mxu0 0.0
    %1094 = vmatprep.subr.mxu0 0.0
    %1095 = vmatpush1.msra.mxu0 0.0
    %1096 = vmatprep.subr.mxu0 0.0
    %1097 = vmatpush1.msra.mxu0 0.0
    %1098 = vmatprep.subr.mxu0 0.0
    %1099 = vmatpush1.msra.mxu0 0.0
    %1100 = vmatprep.subr.mxu0 0.0
    %1101 = vmatpush1.msra.mxu0 0.0
    %1102 = vmatprep.subr.mxu0 0.0
    %1103 = vmatpush1.msra.mxu0 0.0
    %1104 = vmatprep.subr.mxu0 0.0
    %1105 = vmatpush1.msra.mxu0 0.0
    %1106 = vmatprep.subr.mxu0 0.0
    %1107 = vmatpush1.msra.mxu0 0.0
    %1108 = vmatprep.subr.mxu0 0.0
    %1109 = vmatpush1.msra.mxu0 0.0
    %1110 = vmatprep.subr.mxu0 0.0
    %1111 = vmatpush1.msra.mxu0 0.0
    %1112 = vmatprep.subr.mxu0 0.0
    %1113 = vmatpush1.msra.mxu0 0.0
    %1114 = vmatprep.subr.mxu0 0.0
    %1115 = vmatpush1.msra.mxu0 0.0
    %1116 = vmatprep.subr.mxu0 0.0
    %1117 = vmatpush1.msra.mxu0 0.0
    %1118 = vmatprep.subr.mxu0 0.0
    %1119 = vmatpush1.msra.mxu0 0.0
    %1120 = vmatprep.subr.mxu0 0.0
    %1121 = vmatpush1.msra.mxu0 0.0
    %1122 = vmatprep.subr.mxu0 0.0
    %1123 = vmatpush1.msra.mxu0 0.0
    %1124 = vmatprep.subr.mxu0 0.0
    %1125 = vmatpush1.msra.mxu0 0.0
    %1126 = vmatprep.subr.mxu0 0.0
    %1127 = vmatpush1.msra.mxu0 0.0
    %1128 = vmatprep.subr.mxu0 0.0
    %1129 = vmatpush1.msra.mxu0 0.0
    %1130 = vmatprep.subr.mxu0 0.0
    %1131 = vmatpush1.msra.mxu0 0.0
    %1132 = vmatprep.mubr.f32.mxu0 0.0
    %1133 = vmatmul.mubr.f32.gmra.mrb[0].mxu0 %v1066
    %v1134 = vpop.f32.mrb[0].mxu0
    %v1135 = vadd.f32 0.0, %v1134
    %v1136 = vpop.f32.mrb[0].mxu0
    %1137 = vdwg.mxu0
    %v1138 = vadd.f32 %v1061, %v1135
    %v1139 = vxor.u32 %v1138, 2147483648
    %v1140 = vmul.f32 %v1139, 1.442695
    %v1141 = vpow.pop %v1140
    %v1142 = vadd.f32 %v1141, 1.0
    %v1143 = vrcp.pop %v1142
    %v1144 = vmul.f32 1.0, %v1143
    %v1145 = vtanh.pop %v1138
    %v1146 = vmul.f32 %v1144, %v954
    %1148 = vrot.lane.b32.xlu0 %v1145, 64
    %v1149 = vpop.permute.xlu0 %1148
    %v1151 = vmul.f32 %v1144, %v1149
    %1153 = vrot.lane.b32.xlu0 %v1151, 32
    %v1154 = vpop.permute.xlu0 %1153
    %v1156 = vadd.f32 %v1146, %v1154
    %v1157 = vtanh.pop %v1156
    %1159 = vrot.lane.b32.xlu0 %v1157, 64
    %v1160 = vpop.permute.xlu0 %1159
    %v1162 = vmul.f32 %v1144, %v1160
    %1164 = vrot.lane.b32.xlu0 %v1060, 32
    %v1165 = vpop.permute.xlu0 %1164
    %v1166 = vsel %vm243, %v1165, 0
    %1168 = vmatprep.subr.mxu0 0.0
    %1169 = vmatpush1.msra.mxu0 %v231
    %1170 = vmatprep.subr.mxu0 0.0
    %1171 = vmatpush1.msra.mxu0 %v232
    %1172 = vmatprep.subr.mxu0 0.0
    %1173 = vmatpush1.msra.mxu0 %v233
    %1174 = vmatprep.subr.mxu0 0.0
    %1175 = vmatpush1.msra.mxu0 %v234
    %1176 = vmatprep.subr.mxu0 0.0
    %1177 = vmatpush1.msra.mxu0 0.0
    %1178 = vmatprep.subr.mxu0 0.0
    %1179 = vmatpush1.msra.mxu0 0.0
    %1180 = vmatprep.subr.mxu0 0.0
    %1181 = vmatpush1.msra.mxu0 0.0
    %1182 = vmatprep.subr.mxu0 0.0
    %1183 = vmatpush1.msra.mxu0 0.0
    %1184 = vmatprep.subr.mxu0 0.0
    %1185 = vmatpush1.msra.mxu0 0.0
    %1186 = vmatprep.subr.mxu0 0.0
    %1187 = vmatpush1.msra.mxu0 0.0
    %1188 = vmatprep.subr.mxu0 0.0
    %1189 = vmatpush1.msra.mxu0 0.0
    %1190 = vmatprep.subr.mxu0 0.0
    %1191 = vmatpush1.msra.mxu0 0.0
    %1192 = vmatprep.subr.mxu0 0.0
    %1193 = vmatpush1.msra.mxu0 0.0
    %1194 = vmatprep.subr.mxu0 0.0
    %1195 = vmatpush1.msra.mxu0 0.0
    %1196 = vmatprep.subr.mxu0 0.0
    %1197 = vmatpush1.msra.mxu0 0.0
    %1198 = vmatprep.subr.mxu0 0.0
    %1199 = vmatpush1.msra.mxu0 0.0
    %1200 = vmatprep.subr.mxu0 0.0
    %1201 = vmatpush1.msra.mxu0 0.0
    %1202 = vmatprep.subr.mxu0 0.0
    %1203 = vmatpush1.msra.mxu0 0.0
    %1204 = vmatprep.subr.mxu0 0.0
    %1205 = vmatpush1.msra.mxu0 0.0
    %1206 = vmatprep.subr.mxu0 0.0
    %1207 = vmatpush1.msra.mxu0 0.0
    %1208 = vmatprep.subr.mxu0 0.0
    %1209 = vmatpush1.msra.mxu0 0.0
    %1210 = vmatprep.subr.mxu0 0.0
    %1211 = vmatpush1.msra.mxu0 0.0
    %1212 = vmatprep.subr.mxu0 0.0
    %1213 = vmatpush1.msra.mxu0 0.0
    %1214 = vmatprep.subr.mxu0 0.0
    %1215 = vmatpush1.msra.mxu0 0.0
    %1216 = vmatprep.subr.mxu0 0.0
    %1217 = vmatpush1.msra.mxu0 0.0
    %1218 = vmatprep.subr.mxu0 0.0
    %1219 = vmatpush1.msra.mxu0 0.0
    %1220 = vmatprep.subr.mxu0 0.0
    %1221 = vmatpush1.msra.mxu0 0.0
    %1222 = vmatprep.subr.mxu0 0.0
    %1223 = vmatpush1.msra.mxu0 0.0
    %1224 = vmatprep.subr.mxu0 0.0
    %1225 = vmatpush1.msra.mxu0 0.0
    %1226 = vmatprep.subr.mxu0 0.0
    %1227 = vmatpush1.msra.mxu0 0.0
    %1228 = vmatprep.subr.mxu0 0.0
    %1229 = vmatpush1.msra.mxu0 0.0
    %1230 = vmatprep.subr.mxu0 0.0
    %1231 = vmatpush1.msra.mxu0 0.0
    %1232 = vmatprep.mubr.f32.mxu0 0.0
    %1233 = vmatmul.mubr.f32.gmra.mrb[0].mxu0 %v1166
    %v1234 = vpop.f32.mrb[0].mxu0
    %v1235 = vadd.f32 0.0, %v1234
    %v1236 = vpop.f32.mrb[0].mxu0
    %1237 = vdwg.mxu0
    %v1238 = vadd.f32 %v1062, %v1235
    %v1239 = vxor.u32 %v1238, 2147483648
    %v1240 = vmul.f32 %v1239, 1.442695
    %v1241 = vpow.pop %v1240
    %v1242 = vadd.f32 %v1241, 1.0
    %v1243 = vrcp.pop %v1242
    %v1244 = vmul.f32 1.0, %v1243
    %v1245 = vtanh.pop %v1238
    %v1246 = vmul.f32 %v1244, %v1054
    %1248 = vrot.lane.b32.xlu0 %v1245, 64
    %v1249 = vpop.permute.xlu0 %1248
    %v1251 = vmul.f32 %v1244, %v1249
    %1253 = vrot.lane.b32.xlu0 %v1251, 32
    %v1254 = vpop.permute.xlu0 %1253
    %v1256 = vadd.f32 %v1246, %v1254
    %v1257 = vtanh.pop %v1256
    %1259 = vrot.lane.b32.xlu0 %v1257, 64
    %v1260 = vpop.permute.xlu0 %1259
    %v1262 = vmul.f32 %v1244, %v1260
    %v1263 = vld [vmem:[%s651] sm:$0xff]
    %v1264 = vld [vmem:[%s647 + $0x8] sm:$0xff]
    %1266 = vrot.lane.b32.xlu0 %v1162, 32
    %v1267 = vpop.permute.xlu0 %1266
    %v1268 = vsel %vm243, %v1267, 0
    %1270 = vmatprep.subr.mxu0 0.0
    %1271 = vmatpush1.msra.mxu0 %v227
    %1272 = vmatprep.subr.mxu0 0.0
    %1273 = vmatpush1.msra.mxu0 %v228
    %1274 = vmatprep.subr.mxu0 0.0
    %1275 = vmatpush1.msra.mxu0 %v229
    %1276 = vmatprep.subr.mxu0 0.0
    %1277 = vmatpush1.msra.mxu0 %v230
    %1278 = vmatprep.subr.mxu0 0.0
    %1279 = vmatpush1.msra.mxu0 0.0
    %1280 = vmatprep.subr.mxu0 0.0
    %1281 = vmatpush1.msra.mxu0 0.0
    %1282 = vmatprep.subr.mxu0 0.0
    %1283 = vmatpush1.msra.mxu0 0.0
    %1284 = vmatprep.subr.mxu0 0.0
    %1285 = vmatpush1.msra.mxu0 0.0
    %1286 = vmatprep.subr.mxu0 0.0
    %1287 = vmatpush1.msra.mxu0 0.0
    %1288 = vmatprep.subr.mxu0 0.0
    %1289 = vmatpush1.msra.mxu0 0.0
    %1290 = vmatprep.subr.mxu0 0.0
    %1291 = vmatpush1.msra.mxu0 0.0
    %1292 = vmatprep.subr.mxu0 0.0
    %1293 = vmatpush1.msra.mxu0 0.0
    %1294 = vmatprep.subr.mxu0 0.0
    %1295 = vmatpush1.msra.mxu0 0.0
    %1296 = vmatprep.subr.mxu0 0.0
    %1297 = vmatpush1.msra.mxu0 0.0
    %1298 = vmatprep.subr.mxu0 0.0
    %1299 = vmatpush1.msra.mxu0 0.0
    %1300 = vmatprep.subr.mxu0 0.0
    %1301 = vmatpush1.msra.mxu0 0.0
    %1302 = vmatprep.subr.mxu0 0.0
    %1303 = vmatpush1.msra.mxu0 0.0
    %1304 = vmatprep.subr.mxu0 0.0
    %1305 = vmatpush1.msra.mxu0 0.0
    %1306 = vmatprep.subr.mxu0 0.0
    %1307 = vmatpush1.msra.mxu0 0.0
    %1308 = vmatprep.subr.mxu0 0.0
    %1309 = vmatpush1.msra.mxu0 0.0
    %1310 = vmatprep.subr.mxu0 0.0
    %1311 = vmatpush1.msra.mxu0 0.0
    %1312 = vmatprep.subr.mxu0 0.0
    %1313 = vmatpush1.msra.mxu0 0.0
    %1314 = vmatprep.subr.mxu0 0.0
    %1315 = vmatpush1.msra.mxu0 0.0
    %1316 = vmatprep.subr.mxu0 0.0
    %1317 = vmatpush1.msra.mxu0 0.0
    %1318 = vmatprep.subr.mxu0 0.0
    %1319 = vmatpush1.msra.mxu0 0.0
    %1320 = vmatprep.subr.mxu0 0.0
    %1321 = vmatpush1.msra.mxu0 0.0
    %1322 = vmatprep.subr.mxu0 0.0
    %1323 = vmatpush1.msra.mxu0 0.0
    %1324 = vmatprep.subr.mxu0 0.0
    %1325 = vmatpush1.msra.mxu0 0.0
    %1326 = vmatprep.subr.mxu0 0.0
    %1327 = vmatpush1.msra.mxu0 0.0
    %1328 = vmatprep.subr.mxu0 0.0
    %1329 = vmatpush1.msra.mxu0 0.0
    %1330 = vmatprep.subr.mxu0 0.0
    %1331 = vmatpush1.msra.mxu0 0.0
    %1332 = vmatprep.subr.mxu0 0.0
    %1333 = vmatpush1.msra.mxu0 0.0
    %1334 = vmatprep.mubr.f32.mxu0 0.0
    %1335 = vmatmul.mubr.f32.gmra.mrb[0].mxu0 %v1268
    %v1336 = vpop.f32.mrb[0].mxu0
    %v1337 = vadd.f32 0.0, %v1336
    %v1338 = vpop.f32.mrb[0].mxu0
    %1339 = vdwg.mxu0
    %v1340 = vadd.f32 %v1263, %v1337
    %v1341 = vxor.u32 %v1340, 2147483648
    %v1342 = vmul.f32 %v1341, 1.442695
    %v1343 = vpow.pop %v1342
    %v1344 = vadd.f32 %v1343, 1.0
    %v1345 = vrcp.pop %v1344
    %v1346 = vmul.f32 1.0, %v1345
    %v1347 = vtanh.pop %v1340
    %v1348 = vmul.f32 %v1346, %v1156
    %1350 = vrot.lane.b32.xlu0 %v1347, 64
    %v1351 = vpop.permute.xlu0 %1350
    %v1353 = vmul.f32 %v1346, %v1351
    %1355 = vrot.lane.b32.xlu0 %v1353, 32
    %v1356 = vpop.permute.xlu0 %1355
    %v1358 = vadd.f32 %v1348, %v1356
    %v1359 = vtanh.pop %v1358
    %1361 = vrot.lane.b32.xlu0 %v1359, 64
    %v1362 = vpop.permute.xlu0 %1361
    %v1364 = vmul.f32 %v1346, %v1362
    %1366 = vrot.lane.b32.xlu0 %v1262, 32
    %v1367 = vpop.permute.xlu0 %1366
    %v1368 = vsel %vm243, %v1367, 0
    %1370 = vmatprep.subr.mxu0 0.0
    %1371 = vmatpush1.msra.mxu0 %v231
    %1372 = vmatprep.subr.mxu0 0.0
    %1373 = vmatpush1.msra.mxu0 %v232
    %1374 = vmatprep.subr.mxu0 0.0
    %1375 = vmatpush1.msra.mxu0 %v233
    %1376 = vmatprep.subr.mxu0 0.0
    %1377 = vmatpush1.msra.mxu0 %v234
    %1378 = vmatprep.subr.mxu0 0.0
    %1379 = vmatpush1.msra.mxu0 0.0
    %1380 = vmatprep.subr.mxu0 0.0
    %1381 = vmatpush1.msra.mxu0 0.0
    %1382 = vmatprep.subr.mxu0 0.0
    %1383 = vmatpush1.msra.mxu0 0.0
    %1384 = vmatprep.subr.mxu0 0.0
    %1385 = vmatpush1.msra.mxu0 0.0
    %1386 = vmatprep.subr.mxu0 0.0
    %1387 = vmatpush1.msra.mxu0 0.0
    %1388 = vmatprep.subr.mxu0 0.0
    %1389 = vmatpush1.msra.mxu0 0.0
    %1390 = vmatprep.subr.mxu0 0.0
    %1391 = vmatpush1.msra.mxu0 0.0
    %1392 = vmatprep.subr.mxu0 0.0
    %1393 = vmatpush1.msra.mxu0 0.0
    %1394 = vmatprep.subr.mxu0 0.0
    %1395 = vmatpush1.msra.mxu0 0.0
    %1396 = vmatprep.subr.mxu0 0.0
    %1397 = vmatpush1.msra.mxu0 0.0
    %1398 = vmatprep.subr.mxu0 0.0
    %1399 = vmatpush1.msra.mxu0 0.0
    %1400 = vmatprep.subr.mxu0 0.0
    %1401 = vmatpush1.msra.mxu0 0.0
    %1402 = vmatprep.subr.mxu0 0.0
    %1403 = vmatpush1.msra.mxu0 0.0
    %1404 = vmatprep.subr.mxu0 0.0
    %1405 = vmatpush1.msra.mxu0 0.0
    %1406 = vmatprep.subr.mxu0 0.0
    %1407 = vmatpush1.msra.mxu0 0.0
    %1408 = vmatprep.subr.mxu0 0.0
    %1409 = vmatpush1.msra.mxu0 0.0
    %1410 = vmatprep.subr.mxu0 0.0
    %1411 = vmatpush1.msra.mxu0 0.0
    %1412 = vmatprep.subr.mxu0 0.0
    %1413 = vmatpush1.msra.mxu0 0.0
    %1414 = vmatprep.subr.mxu0 0.0
    %1415 = vmatpush1.msra.mxu0 0.0
    %1416 = vmatprep.subr.mxu0 0.0
    %1417 = vmatpush1.msra.mxu0 0.0
    %1418 = vmatprep.subr.mxu0 0.0
    %1419 = vmatpush1.msra.mxu0 0.0
    %1420 = vmatprep.subr.mxu0 0.0
    %1421 = vmatpush1.msra.mxu0 0.0
    %1422 = vmatprep.subr.mxu0 0.0
    %1423 = vmatpush1.msra.mxu0 0.0
    %1424 = vmatprep.subr.mxu0 0.0
    %1425 = vmatpush1.msra.mxu0 0.0
    %1426 = vmatprep.subr.mxu0 0.0
    %1427 = vmatpush1.msra.mxu0 0.0
    %1428 = vmatprep.subr.mxu0 0.0
    %1429 = vmatpush1.msra.mxu0 0.0
    %1430 = vmatprep.subr.mxu0 0.0
    %1431 = vmatpush1.msra.mxu0 0.0
    %1432 = vmatprep.subr.mxu0 0.0
    %1433 = vmatpush1.msra.mxu0 0.0
    %1434 = vmatprep.mubr.f32.mxu0 0.0
    %1435 = vmatmul.mubr.f32.gmra.mrb[0].mxu0 %v1368
    %v1436 = vpop.f32.mrb[0].mxu0
    %v1437 = vadd.f32 0.0, %v1436
    %v1438 = vpop.f32.mrb[0].mxu0
    %1439 = vdwg.mxu0
    %v1440 = vadd.f32 %v1264, %v1437
    %v1441 = vxor.u32 %v1440, 2147483648
    %v1442 = vmul.f32 %v1441, 1.442695
    %v1443 = vpow.pop %v1442
    %v1444 = vadd.f32 %v1443, 1.0
    %v1445 = vrcp.pop %v1444
    %v1446 = vmul.f32 1.0, %v1445
    %v1447 = vtanh.pop %v1440
    %v1448 = vmul.f32 %v1446, %v1256
    %1450 = vrot.lane.b32.xlu0 %v1447, 64
    %v1451 = vpop.permute.xlu0 %1450
    %v1453 = vmul.f32 %v1446, %v1451
    %1455 = vrot.lane.b32.xlu0 %v1453, 32
    %v1456 = vpop.permute.xlu0 %1455
    %v1458 = vadd.f32 %v1448, %v1456
    %v1459 = vtanh.pop %v1458
    %1461 = vrot.lane.b32.xlu0 %v1459, 64
    %v1462 = vpop.permute.xlu0 %1461
    %v1464 = vmul.f32 %v1446, %v1462
    %v1465 = vld [vmem:[%s443] sm:$0xff]
    %v1466 = vld [vmem:[%s439 + $0x8] sm:$0xff]
    %1468 = vrot.lane.b32.xlu0 %v1364, 32
    %v1469 = vpop.permute.xlu0 %1468
    %v1470 = vsel %vm243, %v1469, 0
    %1472 = vmatprep.subr.mxu0 0.0
    %1473 = vmatpush1.msra.mxu0 %v227
    %1474 = vmatprep.subr.mxu0 0.0
    %1475 = vmatpush1.msra.mxu0 %v228
    %1476 = vmatprep.subr.mxu0 0.0
    %1477 = vmatpush1.msra.mxu0 %v229
    %1478 = vmatprep.subr.mxu0 0.0
    %1479 = vmatpush1.msra.mxu0 %v230
    %1480 = vmatprep.subr.mxu0 0.0
    %1481 = vmatpush1.msra.mxu0 0.0
    %1482 = vmatprep.subr.mxu0 0.0
    %1483 = vmatpush1.msra.mxu0 0.0
    %1484 = vmatprep.subr.mxu0 0.0
    %1485 = vmatpush1.msra.mxu0 0.0
    %1486 = vmatprep.subr.mxu0 0.0
    %1487 = vmatpush1.msra.mxu0 0.0
    %1488 = vmatprep.subr.mxu0 0.0
    %1489 = vmatpush1.msra.mxu0 0.0
    %1490 = vmatprep.subr.mxu0 0.0
    %1491 = vmatpush1.msra.mxu0 0.0
    %1492 = vmatprep.subr.mxu0 0.0
    %1493 = vmatpush1.msra.mxu0 0.0
    %1494 = vmatprep.subr.mxu0 0.0
    %1495 = vmatpush1.msra.mxu0 0.0
    %1496 = vmatprep.subr.mxu0 0.0
    %1497 = vmatpush1.msra.mxu0 0.0
    %1498 = vmatprep.subr.mxu0 0.0
    %1499 = vmatpush1.msra.mxu0 0.0
    %1500 = vmatprep.subr.mxu0 0.0
    %1501 = vmatpush1.msra.mxu0 0.0
    %1502 = vmatprep.subr.mxu0 0.0
    %1503 = vmatpush1.msra.mxu0 0.0
    %1504 = vmatprep.subr.mxu0 0.0
    %1505 = vmatpush1.msra.mxu0 0.0
    %1506 = vmatprep.subr.mxu0 0.0
    %1507 = vmatpush1.msra.mxu0 0.0
    %1508 = vmatprep.subr.mxu0 0.0
    %1509 = vmatpush1.msra.mxu0 0.0
    %1510 = vmatprep.subr.mxu0 0.0
    %1511 = vmatpush1.msra.mxu0 0.0
    %1512 = vmatprep.subr.mxu0 0.0
    %1513 = vmatpush1.msra.mxu0 0.0
    %1514 = vmatprep.subr.mxu0 0.0
    %1515 = vmatpush1.msra.mxu0 0.0
    %1516 = vmatprep.subr.mxu0 0.0
    %1517 = vmatpush1.msra.mxu0 0.0
    %1518 = vmatprep.subr.mxu0 0.0
    %1519 = vmatpush1.msra.mxu0 0.0
    %1520 = vmatprep.subr.mxu0 0.0
    %1521 = vmatpush1.msra.mxu0 0.0
    %1522 = vmatprep.subr.mxu0 0.0
    %1523 = vmatpush1.msra.mxu0 0.0
    %1524 = vmatprep.subr.mxu0 0.0
    %1525 = vmatpush1.msra.mxu0 0.0
    %1526 = vmatprep.subr.mxu0 0.0
    %1527 = vmatpush1.msra.mxu0 0.0
    %1528 = vmatprep.subr.mxu0 0.0
    %1529 = vmatpush1.msra.mxu0 0.0
    %1530 = vmatprep.subr.mxu0 0.0
    %1531 = vmatpush1.msra.mxu0 0.0
    %1532 = vmatprep.subr.mxu0 0.0
    %1533 = vmatpush1.msra.mxu0 0.0
    %1534 = vmatprep.subr.mxu0 0.0
    %1535 = vmatpush1.msra.mxu0 0.0
    %1536 = vmatprep.mubr.f32.mxu0 0.0
    %1537 = vmatmul.mubr.f32.gmra.mrb[0].mxu0 %v1470
    %v1538 = vpop.f32.mrb[0].mxu0
    %v1539 = vadd.f32 0.0, %v1538
    %v1540 = vpop.f32.mrb[0].mxu0
    %1541 = vdwg.mxu0
    %v1542 = vadd.f32 %v1465, %v1539
    %v1543 = vxor.u32 %v1542, 2147483648
    %v1544 = vmul.f32 %v1543, 1.442695
    %v1545 = vpow.pop %v1544
    %v1546 = vadd.f32 %v1545, 1.0
    %v1547 = vrcp.pop %v1546
    %v1548 = vmul.f32 1.0, %v1547
    %v1549 = vtanh.pop %v1542
    %v1550 = vmul.f32 %v1548, %v1358
    %1552 = vrot.lane.b32.xlu0 %v1549, 64
    %v1553 = vpop.permute.xlu0 %1552
    %v1555 = vmul.f32 %v1548, %v1553
    %1557 = vrot.lane.b32.xlu0 %v1555, 32
    %v1558 = vpop.permute.xlu0 %1557
    %v1560 = vadd.f32 %v1550, %v1558
    %v1561 = vtanh.pop %v1560
    %1563 = vrot.lane.b32.xlu0 %v1561, 64
    %v1564 = vpop.permute.xlu0 %1563
    %v1566 = vmul.f32 %v1548, %v1564
    %1568 = vrot.lane.b32.xlu0 %v1464, 32
    %v1569 = vpop.permute.xlu0 %1568
    %v1570 = vsel %vm243, %v1569, 0
    %1572 = vmatprep.subr.mxu0 0.0
    %1573 = vmatpush1.msra.mxu0 %v231
    %1574 = vmatprep.subr.mxu0 0.0
    %1575 = vmatpush1.msra.mxu0 %v232
    %1576 = vmatprep.subr.mxu0 0.0
    %1577 = vmatpush1.msra.mxu0 %v233
    %1578 = vmatprep.subr.mxu0 0.0
    %1579 = vmatpush1.msra.mxu0 %v234
    %1580 = vmatprep.subr.mxu0 0.0
    %1581 = vmatpush1.msra.mxu0 0.0
    %1582 = vmatprep.subr.mxu0 0.0
    %1583 = vmatpush1.msra.mxu0 0.0
    %1584 = vmatprep.subr.mxu0 0.0
    %1585 = vmatpush1.msra.mxu0 0.0
    %1586 = vmatprep.subr.mxu0 0.0
    %1587 = vmatpush1.msra.mxu0 0.0
    %1588 = vmatprep.subr.mxu0 0.0
    %1589 = vmatpush1.msra.mxu0 0.0
    %1590 = vmatprep.subr.mxu0 0.0
    %1591 = vmatpush1.msra.mxu0 0.0
    %1592 = vmatprep.subr.mxu0 0.0
    %1593 = vmatpush1.msra.mxu0 0.0
    %1594 = vmatprep.subr.mxu0 0.0
    %1595 = vmatpush1.msra.mxu0 0.0
    %1596 = vmatprep.subr.mxu0 0.0
    %1597 = vmatpush1.msra.mxu0 0.0
    %1598 = vmatprep.subr.mxu0 0.0
    %1599 = vmatpush1.msra.mxu0 0.0
    %1600 = vmatprep.subr.mxu0 0.0
    %1601 = vmatpush1.msra.mxu0 0.0
    %1602 = vmatprep.subr.mxu0 0.0
    %1603 = vmatpush1.msra.mxu0 0.0
    %1604 = vmatprep.subr.mxu0 0.0
    %1605 = vmatpush1.msra.mxu0 0.0
    %1606 = vmatprep.subr.mxu0 0.0
    %1607 = vmatpush1.msra.mxu0 0.0
    %1608 = vmatprep.subr.mxu0 0.0
    %1609 = vmatpush1.msra.mxu0 0.0
    %1610 = vmatprep.subr.mxu0 0.0
    %1611 = vmatpush1.msra.mxu0 0.0
    %1612 = vmatprep.subr.mxu0 0.0
    %1613 = vmatpush1.msra.mxu0 0.0
    %1614 = vmatprep.subr.mxu0 0.0
    %1615 = vmatpush1.msra.mxu0 0.0
    %1616 = vmatprep.subr.mxu0 0.0
    %1617 = vmatpush1.msra.mxu0 0.0
    %1618 = vmatprep.subr.mxu0 0.0
    %1619 = vmatpush1.msra.mxu0 0.0
    %1620 = vmatprep.subr.mxu0 0.0
    %1621 = vmatpush1.msra.mxu0 0.0
    %1622 = vmatprep.subr.mxu0 0.0
    %1623 = vmatpush1.msra.mxu0 0.0
    %1624 = vmatprep.subr.mxu0 0.0
    %1625 = vmatpush1.msra.mxu0 0.0
    %1626 = vmatprep.subr.mxu0 0.0
    %1627 = vmatpush1.msra.mxu0 0.0
    %1628 = vmatprep.subr.mxu0 0.0
    %1629 = vmatpush1.msra.mxu0 0.0
    %1630 = vmatprep.subr.mxu0 0.0
    %1631 = vmatpush1.msra.mxu0 0.0
    %1632 = vmatprep.subr.mxu0 0.0
    %1633 = vmatpush1.msra.mxu0 0.0
    %1634 = vmatprep.subr.mxu0 0.0
    %1635 = vmatpush1.msra.mxu0 0.0
    %1636 = vmatprep.mubr.f32.mxu0 0.0
    %1637 = vmatmul.mubr.f32.gmra.mrb[0].mxu0 %v1570
    %v1638 = vpop.f32.mrb[0].mxu0
    %v1639 = vadd.f32 0.0, %v1638
    %v1640 = vpop.f32.mrb[0].mxu0
    %1641 = vdwg.mxu0
    %v1642 = vadd.f32 %v1466, %v1639
    %v1643 = vxor.u32 %v1642, 2147483648
    %v1644 = vmul.f32 %v1643, 1.442695
    %v1645 = vpow.pop %v1644
    %v1646 = vadd.f32 %v1645, 1.0
    %v1647 = vrcp.pop %v1646
    %v1648 = vmul.f32 1.0, %v1647
    %v1649 = vtanh.pop %v1642
    %v1650 = vmul.f32 %v1648, %v1458
    %1652 = vrot.lane.b32.xlu0 %v1649, 64
    %v1653 = vpop.permute.xlu0 %1652
    %v1655 = vmul.f32 %v1648, %v1653
    %1657 = vrot.lane.b32.xlu0 %v1655, 32
    %v1658 = vpop.permute.xlu0 %1657
    %v1660 = vadd.f32 %v1650, %v1658
    %v1661 = vtanh.pop %v1660
    %1663 = vrot.lane.b32.xlu0 %v1661, 64
    %v1664 = vpop.permute.xlu0 %1663
    %v1666 = vmul.f32 %v1648, %v1664
    %v1667 = vld [vmem:[%s241] sm:$0xff]
    %v1668 = vld [vmem:[%s237 + $0x8] sm:$0xff]
    %1670 = vrot.lane.b32.xlu0 %v1566, 32
    %v1671 = vpop.permute.xlu0 %1670
    %v1672 = vsel %vm243, %v1671, 0
    %1674 = vmatprep.subr.mxu0 0.0
    %1675 = vmatpush1.msra.mxu0 %v227
    %1676 = vmatprep.subr.mxu0 0.0
    %1677 = vmatpush1.msra.mxu0 %v228
    %1678 = vmatprep.subr.mxu0 0.0
    %1679 = vmatpush1.msra.mxu0 %v229
    %1680 = vmatprep.subr.mxu0 0.0
    %1681 = vmatpush1.msra.mxu0 %v230
    %1682 = vmatprep.subr.mxu0 0.0
    %1683 = vmatpush1.msra.mxu0 0.0
    %1684 = vmatprep.subr.mxu0 0.0
    %1685 = vmatpush1.msra.mxu0 0.0
    %1686 = vmatprep.subr.mxu0 0.0
    %1687 = vmatpush1.msra.mxu0 0.0
    %1688 = vmatprep.subr.mxu0 0.0
    %1689 = vmatpush1.msra.mxu0 0.0
    %1690 = vmatprep.subr.mxu0 0.0
    %1691 = vmatpush1.msra.mxu0 0.0
    %1692 = vmatprep.subr.mxu0 0.0
    %1693 = vmatpush1.msra.mxu0 0.0
    %1694 = vmatprep.subr.mxu0 0.0
    %1695 = vmatpush1.msra.mxu0 0.0
    %1696 = vmatprep.subr.mxu0 0.0
    %1697 = vmatpush1.msra.mxu0 0.0
    %1698 = vmatprep.subr.mxu0 0.0
    %1699 = vmatpush1.msra.mxu0 0.0
    %1700 = vmatprep.subr.mxu0 0.0
    %1701 = vmatpush1.msra.mxu0 0.0
    %1702 = vmatprep.subr.mxu0 0.0
    %1703 = vmatpush1.msra.mxu0 0.0
    %1704 = vmatprep.subr.mxu0 0.0
    %1705 = vmatpush1.msra.mxu0 0.0
    %1706 = vmatprep.subr.mxu0 0.0
    %1707 = vmatpush1.msra.mxu0 0.0
    %1708 = vmatprep.subr.mxu0 0.0
    %1709 = vmatpush1.msra.mxu0 0.0
    %1710 = vmatprep.subr.mxu0 0.0
    %1711 = vmatpush1.msra.mxu0 0.0
    %1712 = vmatprep.subr.mxu0 0.0
    %1713 = vmatpush1.msra.mxu0 0.0
    %1714 = vmatprep.subr.mxu0 0.0
    %1715 = vmatpush1.msra.mxu0 0.0
    %1716 = vmatprep.subr.mxu0 0.0
    %1717 = vmatpush1.msra.mxu0 0.0
    %1718 = vmatprep.subr.mxu0 0.0
    %1719 = vmatpush1.msra.mxu0 0.0
    %1720 = vmatprep.subr.mxu0 0.0
    %1721 = vmatpush1.msra.mxu0 0.0
    %1722 = vmatprep.subr.mxu0 0.0
    %1723 = vmatpush1.msra.mxu0 0.0
    %1724 = vmatprep.subr.mxu0 0.0
    %1725 = vmatpush1.msra.mxu0 0.0
    %1726 = vmatprep.subr.mxu0 0.0
    %1727 = vmatpush1.msra.mxu0 0.0
    %1728 = vmatprep.subr.mxu0 0.0
    %1729 = vmatpush1.msra.mxu0 0.0
    %1730 = vmatprep.subr.mxu0 0.0
    %1731 = vmatpush1.msra.mxu0 0.0
    %1732 = vmatprep.subr.mxu0 0.0
    %1733 = vmatpush1.msra.mxu0 0.0
    %1734 = vmatprep.subr.mxu0 0.0
    %1735 = vmatpush1.msra.mxu0 0.0
    %1736 = vmatprep.subr.mxu0 0.0
    %1737 = vmatpush1.msra.mxu0 0.0
    %1738 = vmatprep.mubr.f32.mxu0 0.0
    %1739 = vmatmul.mubr.f32.gmra.mrb[0].mxu0 %v1672
    %v1740 = vpop.f32.mrb[0].mxu0
    %v1741 = vadd.f32 0.0, %v1740
    %v1742 = vpop.f32.mrb[0].mxu0
    %1743 = vdwg.mxu0
    %v1744 = vadd.f32 %v1667, %v1741
    %v1745 = vxor.u32 %v1744, 2147483648
    %v1746 = vmul.f32 %v1745, 1.442695
    %v1747 = vpow.pop %v1746
    %v1748 = vadd.f32 %v1747, 1.0
    %v1749 = vrcp.pop %v1748
    %v1750 = vmul.f32 1.0, %v1749
    %v1751 = vtanh.pop %v1744
    %v1752 = vmul.f32 %v1750, %v1560
    %1754 = vrot.lane.b32.xlu0 %v1751, 64
    %v1755 = vpop.permute.xlu0 %1754
    %v1757 = vmul.f32 %v1750, %v1755
    %1759 = vrot.lane.b32.xlu0 %v1757, 32
    %v1760 = vpop.permute.xlu0 %1759
    %v1762 = vadd.f32 %v1752, %v1760
    %v1763 = vtanh.pop %v1762
    %1765 = vrot.lane.b32.xlu0 %v1763, 64
    %v1766 = vpop.permute.xlu0 %1765
    %v1768 = vmul.f32 %v1750, %v1766
    %1770 = vrot.lane.b32.xlu0 %v1666, 32
    %v1771 = vpop.permute.xlu0 %1770
    %v1772 = vsel %vm243, %v1771, 0
    %1774 = vmatprep.subr.mxu0 0.0
    %1775 = vmatpush1.msra.mxu0 %v231
    %1776 = vmatprep.subr.mxu0 0.0
    %1777 = vmatpush1.msra.mxu0 %v232
    %1778 = vmatprep.subr.mxu0 0.0
    %1779 = vmatpush1.msra.mxu0 %v233
    %1780 = vmatprep.subr.mxu0 0.0
    %1781 = vmatpush1.msra.mxu0 %v234
    %1782 = vmatprep.subr.mxu0 0.0
    %1783 = vmatpush1.msra.mxu0 0.0
    %1784 = vmatprep.subr.mxu0 0.0
    %1785 = vmatpush1.msra.mxu0 0.0
    %1786 = vmatprep.subr.mxu0 0.0
    %1787 = vmatpush1.msra.mxu0 0.0
    %1788 = vmatprep.subr.mxu0 0.0
    %1789 = vmatpush1.msra.mxu0 0.0
    %1790 = vmatprep.subr.mxu0 0.0
    %1791 = vmatpush1.msra.mxu0 0.0
    %1792 = vmatprep.subr.mxu0 0.0
    %1793 = vmatpush1.msra.mxu0 0.0
    %1794 = vmatprep.subr.mxu0 0.0
    %1795 = vmatpush1.msra.mxu0 0.0
    %1796 = vmatprep.subr.mxu0 0.0
    %1797 = vmatpush1.msra.mxu0 0.0
    %1798 = vmatprep.subr.mxu0 0.0
    %1799 = vmatpush1.msra.mxu0 0.0
    %1800 = vmatprep.subr.mxu0 0.0
    %1801 = vmatpush1.msra.mxu0 0.0
    %1802 = vmatprep.subr.mxu0 0.0
    %1803 = vmatpush1.msra.mxu0 0.0
    %1804 = vmatprep.subr.mxu0 0.0
    %1805 = vmatpush1.msra.mxu0 0.0
    %1806 = vmatprep.subr.mxu0 0.0
    %1807 = vmatpush1.msra.mxu0 0.0
    %1808 = vmatprep.subr.mxu0 0.0
    %1809 = vmatpush1.msra.mxu0 0.0
    %1810 = vmatprep.subr.mxu0 0.0
    %1811 = vmatpush1.msra.mxu0 0.0
    %1812 = vmatprep.subr.mxu0 0.0
    %1813 = vmatpush1.msra.mxu0 0.0
    %1814 = vmatprep.subr.mxu0 0.0
    %1815 = vmatpush1.msra.mxu0 0.0
    %1816 = vmatprep.subr.mxu0 0.0
    %1817 = vmatpush1.msra.mxu0 0.0
    %1818 = vmatprep.subr.mxu0 0.0
    %1819 = vmatpush1.msra.mxu0 0.0
    %1820 = vmatprep.subr.mxu0 0.0
    %1821 = vmatpush1.msra.mxu0 0.0
    %1822 = vmatprep.subr.mxu0 0.0
    %1823 = vmatpush1.msra.mxu0 0.0
    %1824 = vmatprep.subr.mxu0 0.0
    %1825 = vmatpush1.msra.mxu0 0.0
    %1826 = vmatprep.subr.mxu0 0.0
    %1827 = vmatpush1.msra.mxu0 0.0
    %1828 = vmatprep.subr.mxu0 0.0
    %1829 = vmatpush1.msra.mxu0 0.0
    %1830 = vmatprep.subr.mxu0 0.0
    %1831 = vmatpush1.msra.mxu0 0.0
    %1832 = vmatprep.subr.mxu0 0.0
    %1833 = vmatpush1.msra.mxu0 0.0
    %1834 = vmatprep.subr.mxu0 0.0
    %1835 = vmatpush1.msra.mxu0 0.0
    %1836 = vmatprep.subr.mxu0 0.0
    %1837 = vmatpush1.msra.mxu0 0.0
    %1838 = vmatprep.mubr.f32.mxu0 0.0
    %1839 = vmatmul.mubr.f32.gmra.mrb[0].mxu0 %v1772
    %v1840 = vpop.f32.mrb[0].mxu0
    %v1841 = vadd.f32 0.0, %v1840
    %v1842 = vpop.f32.mrb[0].mxu0
    %1843 = vdwg.mxu0
    %v1844 = vadd.f32 %v1668, %v1841
    %v1845 = vxor.u32 %v1844, 2147483648
    %v1846 = vmul.f32 %v1845, 1.442695
    %v1847 = vpow.pop %v1846
    %v1848 = vadd.f32 %v1847, 1.0
    %v1849 = vrcp.pop %v1848
    %v1850 = vmul.f32 1.0, %v1849
    %v1851 = vtanh.pop %v1844
    %v1852 = vmul.f32 %v1850, %v1660
    %1854 = vrot.lane.b32.xlu0 %v1851, 64
    %v1855 = vpop.permute.xlu0 %1854
    %v1857 = vmul.f32 %v1850, %v1855
    %1859 = vrot.lane.b32.xlu0 %v1857, 32
    %v1860 = vpop.permute.xlu0 %1859
    %v1862 = vadd.f32 %v1852, %v1860
    %v1863 = vtanh.pop %v1862
    %1865 = vrot.lane.b32.xlu0 %v1863, 64
    %v1866 = vpop.permute.xlu0 %1865
    %v1868 = vmul.f32 %v1850, %v1866
    %v1869 = vld [vmem:[%s4] sm:$0xff]
    %v1870 = vld [vmem:[%s4 + $0x8] sm:$0xff]
    %v1871 = vld [vmem:[%s4 + $0x10] sm:$0xff]
    %v1872 = vld [vmem:[%s4 + $0x18] sm:$0xff]
    %v1873 = vld [vmem:[%s4 + $0x20] sm:$0xff]
    %v1874 = vld [vmem:[%s4 + $0x28] sm:$0xff]
    %v1875 = vld [vmem:[%s4 + $0x30] sm:$0xff]
    %v1876 = vld [vmem:[%s4 + $0x38] sm:$0xff]
    %1878 = vrot.lane.b32.xlu0 %v1868, 32
    %v1879 = vpop.permute.xlu0 %1878
    %v1880 = vsel %vm243, %v1879, 0
    %1882 = vmatprep.subr.mxu0 0.0
    %1883 = vmatpush1.msra.mxu0 %v1873
    %1884 = vmatprep.subr.mxu0 0.0
    %1885 = vmatpush1.msra.mxu0 %v1874
    %1886 = vmatprep.subr.mxu0 0.0
    %1887 = vmatpush1.msra.mxu0 %v1875
    %1888 = vmatprep.subr.mxu0 0.0
    %1889 = vmatpush1.msra.mxu0 %v1876
    %1890 = vmatprep.subr.mxu0 0.0
    %1891 = vmatpush1.msra.mxu0 0.0
    %1892 = vmatprep.subr.mxu0 0.0
    %1893 = vmatpush1.msra.mxu0 0.0
    %1894 = vmatprep.subr.mxu0 0.0
    %1895 = vmatpush1.msra.mxu0 0.0
    %1896 = vmatprep.subr.mxu0 0.0
    %1897 = vmatpush1.msra.mxu0 0.0
    %1898 = vmatprep.subr.mxu0 0.0
    %1899 = vmatpush1.msra.mxu0 0.0
    %1900 = vmatprep.subr.mxu0 0.0
    %1901 = vmatpush1.msra.mxu0 0.0
    %1902 = vmatprep.subr.mxu0 0.0
    %1903 = vmatpush1.msra.mxu0 0.0
    %1904 = vmatprep.subr.mxu0 0.0
    %1905 = vmatpush1.msra.mxu0 0.0
    %1906 = vmatprep.subr.mxu0 0.0
    %1907 = vmatpush1.msra.mxu0 0.0
    %1908 = vmatprep.subr.mxu0 0.0
    %1909 = vmatpush1.msra.mxu0 0.0
    %1910 = vmatprep.subr.mxu0 0.0
    %1911 = vmatpush1.msra.mxu0 0.0
    %1912 = vmatprep.subr.mxu0 0.0
    %1913 = vmatpush1.msra.mxu0 0.0
    %1914 = vmatprep.subr.mxu0 0.0
    %1915 = vmatpush1.msra.mxu0 0.0
    %1916 = vmatprep.subr.mxu0 0.0
    %1917 = vmatpush1.msra.mxu0 0.0
    %1918 = vmatprep.subr.mxu0 0.0
    %1919 = vmatpush1.msra.mxu0 0.0
    %1920 = vmatprep.subr.mxu0 0.0
    %1921 = vmatpush1.msra.mxu0 0.0
    %1922 = vmatprep.subr.mxu0 0.0
    %1923 = vmatpush1.msra.mxu0 0.0
    %1924 = vmatprep.subr.mxu0 0.0
    %1925 = vmatpush1.msra.mxu0 0.0
    %1926 = vmatprep.subr.mxu0 0.0
    %1927 = vmatpush1.msra.mxu0 0.0
    %1928 = vmatprep.subr.mxu0 0.0
    %1929 = vmatpush1.msra.mxu0 0.0
    %1930 = vmatprep.subr.mxu0 0.0
    %1931 = vmatpush1.msra.mxu0 0.0
    %1932 = vmatprep.subr.mxu0 0.0
    %1933 = vmatpush1.msra.mxu0 0.0
    %1934 = vmatprep.subr.mxu0 0.0
    %1935 = vmatpush1.msra.mxu0 0.0
    %1936 = vmatprep.subr.mxu0 0.0
    %1937 = vmatpush1.msra.mxu0 0.0
    %1938 = vmatprep.subr.mxu0 0.0
    %1939 = vmatpush1.msra.mxu0 0.0
    %1940 = vmatprep.subr.mxu0 0.0
    %1941 = vmatpush1.msra.mxu0 0.0
    %1942 = vmatprep.subr.mxu0 0.0
    %1943 = vmatpush1.msra.mxu0 0.0
    %1944 = vmatprep.subr.mxu0 0.0
    %1945 = vmatpush1.msra.mxu0 0.0
    %1946 = vmatprep.mubr.f32.mxu0 0.0
    %1947 = vmatmul.mubr.f32.gmra.mrb[0].mxu0 %v1880
    %v1948 = vpop.f32.mrb[0].mxu0
    %v1949 = vadd.f32 0.0, %v1948
    %v1950 = vpop.f32.mrb[0].mxu0
    %1951 = vdwg.mxu0
    %1953 = vrot.lane.b32.xlu0 %v1768, 32
    %v1954 = vpop.permute.xlu0 %1953
    %v1955 = vsel %vm243, %v1954, 0
    %1957 = vmatprep.subr.mxu0 0.0
    %1958 = vmatpush1.msra.mxu0 %v1869
    %1959 = vmatprep.subr.mxu0 0.0
    %1960 = vmatpush1.msra.mxu0 %v1870
    %1961 = vmatprep.subr.mxu0 0.0
    %1962 = vmatpush1.msra.mxu0 %v1871
    %1963 = vmatprep.subr.mxu0 0.0
    %1964 = vmatpush1.msra.mxu0 %v1872
    %1965 = vmatprep.subr.mxu0 0.0
    %1966 = vmatpush1.msra.mxu0 0.0
    %1967 = vmatprep.subr.mxu0 0.0
    %1968 = vmatpush1.msra.mxu0 0.0
    %1969 = vmatprep.subr.mxu0 0.0
    %1970 = vmatpush1.msra.mxu0 0.0
    %1971 = vmatprep.subr.mxu0 0.0
    %1972 = vmatpush1.msra.mxu0 0.0
    %1973 = vmatprep.subr.mxu0 0.0
    %1974 = vmatpush1.msra.mxu0 0.0
    %1975 = vmatprep.subr.mxu0 0.0
    %1976 = vmatpush1.msra.mxu0 0.0
    %1977 = vmatprep.subr.mxu0 0.0
    %1978 = vmatpush1.msra.mxu0 0.0
    %1979 = vmatprep.subr.mxu0 0.0
    %1980 = vmatpush1.msra.mxu0 0.0
    %1981 = vmatprep.subr.mxu0 0.0
    %1982 = vmatpush1.msra.mxu0 0.0
    %1983 = vmatprep.subr.mxu0 0.0
    %1984 = vmatpush1.msra.mxu0 0.0
    %1985 = vmatprep.subr.mxu0 0.0
    %1986 = vmatpush1.msra.mxu0 0.0
    %1987 = vmatprep.subr.mxu0 0.0
    %1988 = vmatpush1.msra.mxu0 0.0
    %1989 = vmatprep.subr.mxu0 0.0
    %1990 = vmatpush1.msra.mxu0 0.0
    %1991 = vmatprep.subr.mxu0 0.0
    %1992 = vmatpush1.msra.mxu0 0.0
    %1993 = vmatprep.subr.mxu0 0.0
    %1994 = vmatpush1.msra.mxu0 0.0
    %1995 = vmatprep.subr.mxu0 0.0
    %1996 = vmatpush1.msra.mxu0 0.0
    %1997 = vmatprep.subr.mxu0 0.0
    %1998 = vmatpush1.msra.mxu0 0.0
    %1999 = vmatprep.subr.mxu0 0.0
    %2000 = vmatpush1.msra.mxu0 0.0
    %2001 = vmatprep.subr.mxu0 0.0
    %2002 = vmatpush1.msra.mxu0 0.0
    %2003 = vmatprep.subr.mxu0 0.0
    %2004 = vmatpush1.msra.mxu0 0.0
    %2005 = vmatprep.subr.mxu0 0.0
    %2006 = vmatpush1.msra.mxu0 0.0
    %2007 = vmatprep.subr.mxu0 0.0
    %2008 = vmatpush1.msra.mxu0 0.0
    %2009 = vmatprep.subr.mxu0 0.0
    %2010 = vmatpush1.msra.mxu0 0.0
    %2011 = vmatprep.subr.mxu0 0.0
    %2012 = vmatpush1.msra.mxu0 0.0
    %2013 = vmatprep.subr.mxu0 0.0
    %2014 = vmatpush1.msra.mxu0 0.0
    %2015 = vmatprep.subr.mxu0 0.0
    %2016 = vmatpush1.msra.mxu0 0.0
    %2017 = vmatprep.subr.mxu0 0.0
    %2018 = vmatpush1.msra.mxu0 0.0
    %2019 = vmatprep.subr.mxu0 0.0
    %2020 = vmatpush1.msra.mxu0 0.0
    %2021 = vmatprep.mubr.f32.mxu0 0.0
    %2022 = vmatmul.mubr.f32.gmra.mrb[0].mxu0 %v1955
    %v2023 = vpop.f32.mrb[0].mxu0
    %v2024 = vadd.f32 %v1949, %v2023
    %v2025 = vpop.f32.mrb[0].mxu0
    %2026 = vdwg.mxu0
    %v2027 = vld [vmem:[%s5] sm:$0x1]
    %v2029 = vlaneseq
    %v2030 = vshrl.u32 %v2029, 7
    %v2031 = vsub.s32 0, %v2030
    %v2032 = vrot.slane %v2027, %v2031
    %v2034 = vadd.f32 %v2024, %v2032
    %2035 = vst [vmem:[#allocation8] sm:$0xff] %v2034
    // Predicated region
    $region34: #{tpu_custom_call.1} parent=1 // pred_check
      _
    $region35: #{tpu_custom_call.1} parent=1 // pred_check_branch
      %2037 = sbr.rel (0) target = $region37
    $region36: #{tpu_custom_call.1} parent=1 // pred_region
      %s2039 = ssub.s32 128, 128
      %2040 = vsyncadd [#allocation5], %s2039
      %s2042 = sshll.u32 [#allocation8], 4
      %s2043 = int_to_ptr.vmem [resolvable:$true] %s2042
      %2045 = dma.vmem_to_hbm [thread:$0]  %s2043, 128, %s6, [#allocation5]
    $region37: #{tpu_custom_call.1} parent=1 // pred_fallthru
      _
    // Predicated region
    $region38: #{tpu_custom_call.1} parent=1 // pred_check
      _
    $region39: #{tpu_custom_call.1} parent=1 // pred_check_branch
      %2047 = sbr.rel (0) target = $region41
    $region40: #{tpu_custom_call.1} parent=1 // pred_region
      %2048 = dma.done [#allocation5], 128
    $region41: #{tpu_custom_call.1} parent=1 // pred_fallthru
      _
    %2049 = vsyncpa [#allocation4], 1
    %2050 = vsyncpa [#allocation7], 1
    %2051 = vsyncpa [#allocation5], 1

</llo_original>
